<compile_context>
chip_gen: v6e
topology: v6e:2x2x1
jax: 0.10.0
libtpu: 0.0.40
codegen_flags: <defaults>
</compile_context>

<pallas_src>
import functools

import jax
import jax.numpy as jnp
from jax.experimental import pallas as pl
from jax.experimental.pallas import tpu as pltpu


MAX_TILE = 2048                  # max tile along K and N (multiple of 128)
MIN_TILE = 512                   # min tile considered when choosing padding
VMEM_LIMIT = 40 * 1024 * 1024    # safe on v5e/v6e (128 MiB) and v7x (64 MiB)


# ------------------------------ tiling helpers ----------------------------- #

def _round_up(x, m):
    return (x + m - 1) // m * m


def _padded_dim(dim, max_tile=MAX_TILE, min_tile=MIN_TILE):
    """Pad `dim` so it has a multiple-of-128 divisor in [min_tile, max_tile].

    Choose the padding that wastes the least HBM traffic (weights are stored
    pre-padded, so padding is real bytes read).  If the 128-rounded dim already
    fits in one tile, use it directly.
    """
    dimp = _round_up(dim, 128)
    if dimp <= max_tile:
        return dimp
    best = None
    t = min_tile
    while t <= max_tile:
        cand = _round_up(dimp, t)
        if best is None or cand < best:
            best = cand
        t += 128
    return best


def _tile_of(dim_padded, max_tile=MAX_TILE):
    """Largest multiple-of-128 divisor of a pre-padded dim that is <= max_tile.

    By construction of _padded_dim there is always a divisor >= MIN_TILE (or
    the whole dim when it is small)."""
    best = 128
    t = 128
    while t <= min(dim_padded, max_tile):
        if dim_padded % t == 0:
            best = t
        t += 128
    return best


# ----------------------------- Pallas kernels ------------------------------ #

def _linear_kernel(x_ref, w_ref, b_ref, o_ref, acc_ref, *, apply_relu, nk):
    """One (Mp, tn) output tile; f32 accumulator resident across the K axis."""
    k = pl.program_id(1)

    @pl.when(k == 0)
    def _():
        acc_ref[...] = jnp.zeros_like(acc_ref)

    acc_ref[...] += jnp.dot(
        x_ref[...], w_ref[...], preferred_element_type=jnp.float32
    )

    @pl.when(k == nk - 1)
    def _():
        out = acc_ref[...] + b_ref[...]
        if apply_relu:
            out = jnp.maximum(out, 0.0)
        o_ref[...] = out.astype(o_ref.dtype)


def linear_pallas(x, w, b, *, apply_relu, out_dtype=jnp.bfloat16):
    """y = x @ w + b (optionally ReLU).

    x: (Mp, Kp) bf16 (already padded), w: (Kp, Np) bf16 (pre-padded at init),
    b: (1, Np) f32.  Returns (Mp, Np) in `out_dtype` (bf16 for intermediate
    activations, f32 for module outputs).
    """
    Mp, Kp = x.shape
    Kw, Np = w.shape
    assert Kp == Kw, (Kp, Kw)

    tk = _tile_of(Kp)
    tn = _tile_of(Np)
    nk = Kp // tk
    nn = Np // tn

    kernel = functools.partial(_linear_kernel, apply_relu=apply_relu, nk=nk)
    out_itemsize = jnp.dtype(out_dtype).itemsize
    cost = pl.CostEstimate(
        flops=2 * Mp * Kp * Np,
        transcendentals=0,
        bytes_accessed=(
            Mp * Kp * x.dtype.itemsize
            + Kp * Np * w.dtype.itemsize
            + Np * 4
            + Mp * Np * out_itemsize
        ),
    )

    return pl.pallas_call(
        kernel,
        out_shape=jax.ShapeDtypeStruct((Mp, Np), out_dtype),
        grid_spec=pltpu.PrefetchScalarGridSpec(
            num_scalar_prefetch=0,
            grid=(nn, nk),                         # K (reduction) axis is last
            in_specs=[
                pl.BlockSpec((Mp, tk), lambda j, k: (0, k)),   # activations
                pl.BlockSpec((tk, tn), lambda j, k: (k, j)),   # weights
                pl.BlockSpec((1, tn), lambda j, k: (0, j)),    # bias (const in k)
            ],
            out_specs=pl.BlockSpec((Mp, tn), lambda j, k: (0, j)),
            scratch_shapes=[pltpu.VMEM((Mp, tn), jnp.float32)],
        ),
        compiler_params=pltpu.CompilerParams(
            dimension_semantics=("parallel", "arbitrary"),
            vmem_limit_bytes=VMEM_LIMIT,
        ),
        cost_estimate=cost,
    )(x, w, b)


def _head_reparam_kernel(x_ref, w_ref, b_ref, eps_ref, mu_ref, lv_ref, z_ref):
    """Fused mu/log_var heads + clamp + reparameterize.

    h = x @ [w_mu | w_lv] + [b_mu | b_lv]; mu = h[:, :L]; lv = clip(h[:, L:]);
    z = mu + eps * exp(0.5 * lv).
    """
    h = jnp.dot(x_ref[...], w_ref[...], preferred_element_type=jnp.float32)
    h = h + b_ref[...]
    lp = mu_ref.shape[-1]
    mu = h[:, :lp]
    lv = jnp.clip(h[:, lp:], -5.0, 5.0)
    mu_ref[...] = mu
    lv_ref[...] = lv
    z_ref[...] = (mu + eps_ref[...] * jnp.exp(0.5 * lv)).astype(z_ref.dtype)


def head_reparam_pallas(x, w_head, b_head, eps):
    """x: (Mp, Lp) bf16, w_head: (Lp, 2Lp) bf16, b_head: (1, 2Lp) f32,
    eps: (Mp, Lp) f32 -> (mu f32, clamped log_var f32, z bf16), all (Mp, Lp).
    Whole arrays fit in VMEM (latent_dim <= 256), so no grid is needed."""
    Mp, Lp = eps.shape
    return pl.pallas_call(
        _head_reparam_kernel,
        out_shape=(
            jax.ShapeDtypeStruct((Mp, Lp), jnp.float32),   # mu
            jax.ShapeDtypeStruct((Mp, Lp), jnp.float32),   # clamped log_var
            jax.ShapeDtypeStruct((Mp, Lp), jnp.bfloat16),  # z
        ),
        compiler_params=pltpu.CompilerParams(
            vmem_limit_bytes=VMEM_LIMIT,
        ),
    )(x, w_head, b_head, eps)


# ------------------------------ params & prep ------------------------------ #

def init_linear(key, in_dim, out_dim, dtype=jnp.float32):
    """PyTorch-style uniform(+-1/sqrt(in_dim)) init; weight is (in, out)."""
    kw, kb = jax.random.split(key)
    bound = 1.0 / jnp.sqrt(jnp.asarray(in_dim, dtype))
    w = jax.random.uniform(kw, (in_dim, out_dim), dtype, -bound, bound)
    b = jax.random.uniform(kb, (out_dim,), dtype, -bound, bound)
    return w, b


def init_params(key, input_size, hidden_sizes, latent_dim, num_classes):
    h1, h2, h3 = hidden_sizes
    enc_dims = [(input_size, h1), (h1, h2), (h2, h3), (h3, latent_dim)]
    dec_dims = [(latent_dim, h3), (h3, h2), (h2, h1), (h1, input_size)]
    cls_dims = [(latent_dim, 128), (128, num_classes)]

    n_layers = len(enc_dims) + len(dec_dims) + len(cls_dims) + 2
    keys = jax.random.split(key, n_layers)
    ki = iter(range(n_layers))

    return {
        "encoder": [init_linear(keys[next(ki)], i, o) for i, o in enc_dims],
        "mu": init_linear(keys[next(ki)], latent_dim, latent_dim),
        "log_var": init_linear(keys[next(ki)], latent_dim, latent_dim),
        "decoder": [init_linear(keys[next(ki)], i, o) for i, o in dec_dims],
        "classifier": [init_linear(keys[next(ki)], i, o) for i, o in cls_dims],
    }


def _prepare_linear(w, b):
    """Cast to bf16 and zero-pad (K, N) to tile multiples, once."""
    K, N = w.shape
    Kp, Np = _padded_dim(K), _padded_dim(N)
    wp = jnp.pad(w.astype(jnp.bfloat16), ((0, Kp - K), (0, Np - N)))
    bp = jnp.pad(b.astype(jnp.float32).reshape(1, N), ((0, 0), (0, Np - N)))
    return wp, bp


def prepare_params(params):
    """One-time conversion of PyTorch-style f32 params into padded bf16
    weights + fused mu/log_var head.  Run OUTSIDE the forward pass."""
    prepared = {
        "encoder": [_prepare_linear(w, b) for w, b in params["encoder"]],
        "decoder": [_prepare_linear(w, b) for w, b in params["decoder"]],
        "classifier": [_prepare_linear(w, b) for w, b in params["classifier"]],
    }

    w_mu, b_mu = params["mu"]
    w_lv, b_lv = params["log_var"]
    latent = w_mu.shape[0]
    lp = _padded_dim(latent)

    def pad_head(w, b):
        wp = jnp.pad(w.astype(jnp.bfloat16),
                     ((0, lp - latent), (0, lp - latent)))
        bp = jnp.pad(b.astype(jnp.float32).reshape(1, latent),
                     ((0, 0), (0, lp - latent)))
        return wp, bp

    wmu_p, bmu_p = pad_head(w_mu, b_mu)
    wlv_p, blv_p = pad_head(w_lv, b_lv)
    prepared["head"] = (
        jnp.concatenate([wmu_p, wlv_p], axis=1),   # (Lp, 2*Lp)
        jnp.concatenate([bmu_p, blv_p], axis=1),   # (1, 2*Lp)
    )
    return prepared


# ------------------------------ forward pass -------------------------------- #

def vae_with_classifier_forward(prepared, x, eps, *, input_size, latent_dim,
                                num_classes):
    """Mirrors VAEWithClassifier.forward.

    Returns (encoded, decoded, mu, log_var_clamped, logits_classification).
    eps is passed in explicitly (torch uses randn_like inside forward).
    """
    M = x.shape[0]
    Mp = max(16, _round_up(M, 16))          # full bf16 sublane packing
    in_p = prepared["encoder"][0][0].shape[0]
    lp = prepared["head"][0].shape[0]

    # Pad & cast the (small) input activations once.
    h = jnp.pad(x.astype(jnp.bfloat16),
                ((0, Mp - M), (0, in_p - input_size)))

    # encoder: Linear + ReLU x4 (last layer emits f32: `encoded` is an output)
    enc = prepared["encoder"]
    for i, (w, b) in enumerate(enc):
        last = i == len(enc) - 1
        h = linear_pallas(h, w, b, apply_relu=True,
                          out_dtype=jnp.float32 if last else jnp.bfloat16)
    encoded_p = h                                        # (Mp, lp) f32
    encoded = encoded_p[:M, :latent_dim]
    encoded_bf = encoded_p.astype(jnp.bfloat16)          # tiny cast for reuse

    # fused mu/log_var heads + clamp + reparameterize
    eps_p = jnp.pad(eps.astype(jnp.float32),
                    ((0, Mp - M), (0, lp - latent_dim)))
    w_head, b_head = prepared["head"]
    mu_p, lv_p, z_p = head_reparam_pallas(encoded_bf, w_head, b_head, eps_p)
    mu = mu_p[:M, :latent_dim]
    log_var = lv_p[:M, :latent_dim]

    # decoder: Linear + ReLU x3, final Linear without activation (f32 output)
    h = z_p
    dec = prepared["decoder"]
    for i, (w, b) in enumerate(dec):
        last = i == len(dec) - 1
        h = linear_pallas(h, w, b, apply_relu=not last,
                          out_dtype=jnp.float32 if last else jnp.bfloat16)
    decoded = h[:M, :input_size]

    # classifier on `encoded`: Linear + ReLU, Linear (f32 logits)
    h = encoded_bf
    cls = prepared["classifier"]
    for i, (w, b) in enumerate(cls):
        last = i == len(cls) - 1
        h = linear_pallas(h, w, b, apply_relu=not last,
                          out_dtype=jnp.float32 if last else jnp.bfloat16)
    logits = h[:M, :num_classes]

    return encoded, decoded, mu, log_var, logits


# Pure-JAX reference with the same numerics (bf16 matmul inputs, f32 accum,
# f32 bias/ReLU epilogue) for correctness checking.
def _reference_forward(params, x, eps):
    def lin(h, w, b, relu):
        y = jnp.dot(h.astype(jnp.bfloat16), w.astype(jnp.bfloat16),
                    preferred_element_type=jnp.float32) + b.astype(jnp.float32)
        return jnp.maximum(y, 0.0) if relu else y

    h = x
    for w, b in params["encoder"]:
        h = lin(h, w, b, True)
    encoded = h
    mu = lin(encoded, *params["mu"], False)
    log_var = jnp.clip(lin(encoded, *params["log_var"], False), -5.0, 5.0)
    z = mu + eps * jnp.exp(0.5 * log_var)
    h = z
    dec = params["decoder"]
    for i, (w, b) in enumerate(dec):
        h = lin(h, w, b, i < len(dec) - 1)
    decoded = h
    h = encoded
    cls = params["classifier"]
    for i, (w, b) in enumerate(cls):
        h = lin(h, w, b, i < len(cls) - 1)
    return encoded, decoded, mu, log_var, h


if __name__ == "__main__":
    # Small synthetic shapes (hidden sizes scaled down from 21600/10800/4096).
    batch = 2
    input_size = 256
    hidden_sizes = (512, 384, 256)
    latent_dim = 128
    num_classes = 10

    key = jax.random.PRNGKey(0)
    k_params, k_x, k_eps = jax.random.split(key, 3)

    params = init_params(k_params, input_size, hidden_sizes, latent_dim,
                         num_classes)
    prepared = prepare_params(params)     # one-time bf16 cast / pad / head fuse

    x = jax.random.normal(k_x, (batch, input_size), dtype=jnp.float32)
    eps = jax.random.normal(k_eps, (batch, latent_dim), dtype=jnp.float32)

    fwd = jax.jit(functools.partial(
        vae_with_classifier_forward,
        input_size=input_size, latent_dim=latent_dim, num_classes=num_classes))
    outs = jax.block_until_ready(fwd(prepared, x, eps))

    refs = _reference_forward(params, x, eps)
    names = ["encoded", "decoded", "mu", "log_var", "logits"]
    for name, o, r in zip(names, outs, refs):
        assert o.shape == r.shape, (name, o.shape, r.shape)
        assert jnp.allclose(o, r, atol=2e-3, rtol=2e-3), name

    print("KERNEL_OK")
</pallas_src>

<mosaic_0001>
module attributes {stable_mosaic.version = 11 : i64} {
  func.func @_linear_kernel(%arg0: i32, %arg1: i32, %arg2: memref<16x256xbf16, #tpu.memory_space<vmem>>, %arg3: memref<256x512xbf16, #tpu.memory_space<vmem>>, %arg4: memref<1x512xf32, #tpu.memory_space<vmem>>, %arg5: memref<16x512xbf16, #tpu.memory_space<vmem>>, %arg6: memref<16x512xf32, #tpu.memory_space<vmem>>) attributes {dimension_semantics = [#tpu.dimension_semantics<parallel>, #tpu.dimension_semantics<arbitrary>], iteration_bounds = array<i64: 1, 1>, scalar_prefetch = 0 : i64, scratch_operands = 1 : i64, tpu.core_type = #tpu.core_type<tc>, window_params = [{transform_indices = @transform_0, window_bounds = array<i64: 16, 256>}, {transform_indices = @transform_1, window_bounds = array<i64: 256, 512>}, {transform_indices = @transform_2, window_bounds = array<i64: 1, 512>}, {transform_indices = @transform_3, window_bounds = array<i64: 16, 512>}]} {
    %c0_i32 = arith.constant 0 : i32
    %0 = arith.cmpi eq, %arg1, %c0_i32 : i32
    %1 = arith.extui %0 : i1 to i32
    %c0_i32_0 = arith.constant 0 : i32
    %2 = arith.cmpi ne, %1, %c0_i32_0 : i32
    scf.if %2 {
      %cst_10 = arith.constant 0.000000e+00 : f32
      %12 = vector.broadcast %cst_10 : f32 to vector<16x512xf32>
      %c0_11 = arith.constant 0 : index
      %c0_12 = arith.constant 0 : index
      %13 = vector.load %arg6[%c0_11, %c0_12] : memref<16x512xf32, #tpu.memory_space<vmem>>, vector<16x512xf32>
      tpu.vector_store %arg6[%c0_11, %c0_12], %12 {strides = array<i32>} : memref<16x512xf32, #tpu.memory_space<vmem>>, vector<16x512xf32>,
    } else {
    }
    %c0 = arith.constant 0 : index
    %c0_1 = arith.constant 0 : index
    %3 = vector.load %arg6[%c0, %c0_1] : memref<16x512xf32, #tpu.memory_space<vmem>>, vector<16x512xf32>
    %c0_2 = arith.constant 0 : index
    %c0_3 = arith.constant 0 : index
    %4 = vector.load %arg2[%c0_2, %c0_3] : memref<16x256xbf16, #tpu.memory_space<vmem>>, vector<16x256xbf16>
    %c0_4 = arith.constant 0 : index
    %c0_5 = arith.constant 0 : index
    %5 = vector.load %arg3[%c0_4, %c0_5] : memref<256x512xbf16, #tpu.memory_space<vmem>>, vector<256x512xbf16>
    %cst = arith.constant dense<0.000000e+00> : vector<16x512xf32>
    %6 = tpu.matmul %4, %5, %cst {dimension_numbers = #tpu.dot_dimension_numbers<[1], [0], [0], [1], [0, 0, 1, 1], [], []>} : vector<16x256xbf16>, vector<256x512xbf16>, vector<16x512xf32> -> vector<16x512xf32>
    %7 = arith.addf %3, %6 : vector<16x512xf32>
    %c0_6 = arith.constant 0 : index
    %c0_7 = arith.constant 0 : index
    %8 = vector.load %arg6[%c0_6, %c0_7] : memref<16x512xf32, #tpu.memory_space<vmem>>, vector<16x512xf32>
    tpu.vector_store %arg6[%c0_6, %c0_7], %7 {strides = array<i32>} : memref<16x512xf32, #tpu.memory_space<vmem>>, vector<16x512xf32>,
    %c0_i32_8 = arith.constant 0 : i32
    %9 = arith.cmpi eq, %arg1, %c0_i32_8 : i32
    %10 = arith.extui %9 : i1 to i32
    %c0_i32_9 = arith.constant 0 : i32
    %11 = arith.cmpi ne, %10, %c0_i32_9 : i32
    scf.if %11 {
      %c0_10 = arith.constant 0 : index
      %c0_11 = arith.constant 0 : index
      %12 = vector.load %arg6[%c0_10, %c0_11] : memref<16x512xf32, #tpu.memory_space<vmem>>, vector<16x512xf32>
      %c0_12 = arith.constant 0 : index
      %c0_13 = arith.constant 0 : index
      %13 = vector.load %arg4[%c0_12, %c0_13] : memref<1x512xf32, #tpu.memory_space<vmem>>, vector<1x512xf32>
      %14 = vector.broadcast %13 : vector<1x512xf32> to vector<16x512xf32>
      %15 = arith.addf %12, %14 : vector<16x512xf32>
      %cst_14 = arith.constant 0.000000e+00 : f32
      %16 = vector.broadcast %cst_14 : f32 to vector<16x512xf32>
      %17 = arith.maximumf %15, %16 : vector<16x512xf32>
      %18 = arith.truncf %17 : vector<16x512xf32> to vector<16x512xbf16>
      %c0_15 = arith.constant 0 : index
      %c0_16 = arith.constant 0 : index
      %19 = vector.load %arg5[%c0_15, %c0_16] : memref<16x512xbf16, #tpu.memory_space<vmem>>, vector<16x512xbf16>
      tpu.vector_store %arg5[%c0_15, %c0_16], %18 {strides = array<i32>} : memref<16x512xbf16, #tpu.memory_space<vmem>>, vector<16x512xbf16>,
    } else {
    }
    return
  }
  func.func @transform_0(%arg0: i32, %arg1: i32) -> (i32, i32) {
    %c0_i32 = arith.constant 0 : i32
    %c0_i32_0 = arith.constant 0 : i32
    return %c0_i32, %arg1 : i32, i32
  }
  func.func @transform_1(%arg0: i32, %arg1: i32) -> (i32, i32) {
    %c0_i32 = arith.constant 0 : i32
    return %arg1, %arg0 : i32, i32
  }
  func.func @transform_2(%arg0: i32, %arg1: i32) -> (i32, i32) {
    %c0_i32 = arith.constant 0 : i32
    %c0_i32_0 = arith.constant 0 : i32
    return %c0_i32, %arg0 : i32, i32
  }
  func.func @transform_3(%arg0: i32, %arg1: i32) -> (i32, i32) {
    %c0_i32 = arith.constant 0 : i32
    %c0_i32_0 = arith.constant 0 : i32
    return %c0_i32, %arg0 : i32, i32
  }
}

module attributes {stable_mosaic.version = 11 : i64} {
  func.func @_linear_kernel(%arg0: i32, %arg1: i32, %arg2: memref<16x512xbf16, #tpu.memory_space<vmem>>, %arg3: memref<512x384xbf16, #tpu.memory_space<vmem>>, %arg4: memref<1x384xf32, #tpu.memory_space<vmem>>, %arg5: memref<16x384xbf16, #tpu.memory_space<vmem>>, %arg6: memref<16x384xf32, #tpu.memory_space<vmem>>) attributes {dimension_semantics = [#tpu.dimension_semantics<parallel>, #tpu.dimension_semantics<arbitrary>], iteration_bounds = array<i64: 1, 1>, scalar_prefetch = 0 : i64, scratch_operands = 1 : i64, tpu.core_type = #tpu.core_type<tc>, window_params = [{transform_indices = @transform_0, window_bounds = array<i64: 16, 512>}, {transform_indices = @transform_1, window_bounds = array<i64: 512, 384>}, {transform_indices = @transform_2, window_bounds = array<i64: 1, 384>}, {transform_indices = @transform_3, window_bounds = array<i64: 16, 384>}]} {
    %c0_i32 = arith.constant 0 : i32
    %0 = arith.cmpi eq, %arg1, %c0_i32 : i32
    %1 = arith.extui %0 : i1 to i32
    %c0_i32_0 = arith.constant 0 : i32
    %2 = arith.cmpi ne, %1, %c0_i32_0 : i32
    scf.if %2 {
      %cst_10 = arith.constant 0.000000e+00 : f32
      %12 = vector.broadcast %cst_10 : f32 to vector<16x384xf32>
      %c0_11 = arith.constant 0 : index
      %c0_12 = arith.constant 0 : index
      %13 = vector.load %arg6[%c0_11, %c0_12] : memref<16x384xf32, #tpu.memory_space<vmem>>, vector<16x384xf32>
      tpu.vector_store %arg6[%c0_11, %c0_12], %12 {strides = array<i32>} : memref<16x384xf32, #tpu.memory_space<vmem>>, vector<16x384xf32>,
    } else {
    }
    %c0 = arith.constant 0 : index
    %c0_1 = arith.constant 0 : index
    %3 = vector.load %arg6[%c0, %c0_1] : memref<16x384xf32, #tpu.memory_space<vmem>>, vector<16x384xf32>
    %c0_2 = arith.constant 0 : index
    %c0_3 = arith.constant 0 : index
    %4 = vector.load %arg2[%c0_2, %c0_3] : memref<16x512xbf16, #tpu.memory_space<vmem>>, vector<16x512xbf16>
    %c0_4 = arith.constant 0 : index
    %c0_5 = arith.constant 0 : index
    %5 = vector.load %arg3[%c0_4, %c0_5] : memref<512x384xbf16, #tpu.memory_space<vmem>>, vector<512x384xbf16>
    %cst = arith.constant dense<0.000000e+00> : vector<16x384xf32>
    %6 = tpu.matmul %4, %5, %cst {dimension_numbers = #tpu.dot_dimension_numbers<[1], [0], [0], [1], [0, 0, 1, 1], [], []>} : vector<16x512xbf16>, vector<512x384xbf16>, vector<16x384xf32> -> vector<16x384xf32>
    %7 = arith.addf %3, %6 : vector<16x384xf32>
    %c0_6 = arith.constant 0 : index
    %c0_7 = arith.constant 0 : index
    %8 = vector.load %arg6[%c0_6, %c0_7] : memref<16x384xf32, #tpu.memory_space<vmem>>, vector<16x384xf32>
    tpu.vector_store %arg6[%c0_6, %c0_7], %7 {strides = array<i32>} : memref<16x384xf32, #tpu.memory_space<vmem>>, vector<16x384xf32>,
    %c0_i32_8 = arith.constant 0 : i32
    %9 = arith.cmpi eq, %arg1, %c0_i32_8 : i32
    %10 = arith.extui %9 : i1 to i32
    %c0_i32_9 = arith.constant 0 : i32
    %11 = arith.cmpi ne, %10, %c0_i32_9 : i32
    scf.if %11 {
      %c0_10 = arith.constant 0 : index
      %c0_11 = arith.constant 0 : index
      %12 = vector.load %arg6[%c0_10, %c0_11] : memref<16x384xf32, #tpu.memory_space<vmem>>, vector<16x384xf32>
      %c0_12 = arith.constant 0 : index
      %c0_13 = arith.constant 0 : index
      %13 = vector.load %arg4[%c0_12, %c0_13] : memref<1x384xf32, #tpu.memory_space<vmem>>, vector<1x384xf32>
      %14 = vector.broadcast %13 : vector<1x384xf32> to vector<16x384xf32>
      %15 = arith.addf %12, %14 : vector<16x384xf32>
      %cst_14 = arith.constant 0.000000e+00 : f32
      %16 = vector.broadcast %cst_14 : f32 to vector<16x384xf32>
      %17 = arith.maximumf %15, %16 : vector<16x384xf32>
      %18 = arith.truncf %17 : vector<16x384xf32> to vector<16x384xbf16>
      %c0_15 = arith.constant 0 : index
      %c0_16 = arith.constant 0 : index
      %19 = vector.load %arg5[%c0_15, %c0_16] : memref<16x384xbf16, #tpu.memory_space<vmem>>, vector<16x384xbf16>
      tpu.vector_store %arg5[%c0_15, %c0_16], %18 {strides = array<i32>} : memref<16x384xbf16, #tpu.memory_space<vmem>>, vector<16x384xbf16>,
    } else {
    }
    return
  }
  func.func @transform_0(%arg0: i32, %arg1: i32) -> (i32, i32) {
    %c0_i32 = arith.constant 0 : i32
    %c0_i32_0 = arith.constant 0 : i32
    return %c0_i32, %arg1 : i32, i32
  }
  func.func @transform_1(%arg0: i32, %arg1: i32) -> (i32, i32) {
    %c0_i32 = arith.constant 0 : i32
    return %arg1, %arg0 : i32, i32
  }
  func.func @transform_2(%arg0: i32, %arg1: i32) -> (i32, i32) {
    %c0_i32 = arith.constant 0 : i32
    %c0_i32_0 = arith.constant 0 : i32
    return %c0_i32, %arg0 : i32, i32
  }
  func.func @transform_3(%arg0: i32, %arg1: i32) -> (i32, i32) {
    %c0_i32 = arith.constant 0 : i32
    %c0_i32_0 = arith.constant 0 : i32
    return %c0_i32, %arg0 : i32, i32
  }
}

module attributes {stable_mosaic.version = 11 : i64} {
  func.func @_linear_kernel(%arg0: i32, %arg1: i32, %arg2: memref<16x384xbf16, #tpu.memory_space<vmem>>, %arg3: memref<384x256xbf16, #tpu.memory_space<vmem>>, %arg4: memref<1x256xf32, #tpu.memory_space<vmem>>, %arg5: memref<16x256xbf16, #tpu.memory_space<vmem>>, %arg6: memref<16x256xf32, #tpu.memory_space<vmem>>) attributes {dimension_semantics = [#tpu.dimension_semantics<parallel>, #tpu.dimension_semantics<arbitrary>], iteration_bounds = array<i64: 1, 1>, scalar_prefetch = 0 : i64, scratch_operands = 1 : i64, tpu.core_type = #tpu.core_type<tc>, window_params = [{transform_indices = @transform_0, window_bounds = array<i64: 16, 384>}, {transform_indices = @transform_1, window_bounds = array<i64: 384, 256>}, {transform_indices = @transform_2, window_bounds = array<i64: 1, 256>}, {transform_indices = @transform_3, window_bounds = array<i64: 16, 256>}]} {
    %c0_i32 = arith.constant 0 : i32
    %0 = arith.cmpi eq, %arg1, %c0_i32 : i32
    %1 = arith.extui %0 : i1 to i32
    %c0_i32_0 = arith.constant 0 : i32
    %2 = arith.cmpi ne, %1, %c0_i32_0 : i32
    scf.if %2 {
      %cst_10 = arith.constant 0.000000e+00 : f32
      %12 = vector.broadcast %cst_10 : f32 to vector<16x256xf32>
      %c0_11 = arith.constant 0 : index
      %c0_12 = arith.constant 0 : index
      %13 = vector.load %arg6[%c0_11, %c0_12] : memref<16x256xf32, #tpu.memory_space<vmem>>, vector<16x256xf32>
      tpu.vector_store %arg6[%c0_11, %c0_12], %12 {strides = array<i32>} : memref<16x256xf32, #tpu.memory_space<vmem>>, vector<16x256xf32>,
    } else {
    }
    %c0 = arith.constant 0 : index
    %c0_1 = arith.constant 0 : index
    %3 = vector.load %arg6[%c0, %c0_1] : memref<16x256xf32, #tpu.memory_space<vmem>>, vector<16x256xf32>
    %c0_2 = arith.constant 0 : index
    %c0_3 = arith.constant 0 : index
    %4 = vector.load %arg2[%c0_2, %c0_3] : memref<16x384xbf16, #tpu.memory_space<vmem>>, vector<16x384xbf16>
    %c0_4 = arith.constant 0 : index
    %c0_5 = arith.constant 0 : index
    %5 = vector.load %arg3[%c0_4, %c0_5] : memref<384x256xbf16, #tpu.memory_space<vmem>>, vector<384x256xbf16>
    %cst = arith.constant dense<0.000000e+00> : vector<16x256xf32>
    %6 = tpu.matmul %4, %5, %cst {dimension_numbers = #tpu.dot_dimension_numbers<[1], [0], [0], [1], [0, 0, 1, 1], [], []>} : vector<16x384xbf16>, vector<384x256xbf16>, vector<16x256xf32> -> vector<16x256xf32>
    %7 = arith.addf %3, %6 : vector<16x256xf32>
    %c0_6 = arith.constant 0 : index
    %c0_7 = arith.constant 0 : index
    %8 = vector.load %arg6[%c0_6, %c0_7] : memref<16x256xf32, #tpu.memory_space<vmem>>, vector<16x256xf32>
    tpu.vector_store %arg6[%c0_6, %c0_7], %7 {strides = array<i32>} : memref<16x256xf32, #tpu.memory_space<vmem>>, vector<16x256xf32>,
    %c0_i32_8 = arith.constant 0 : i32
    %9 = arith.cmpi eq, %arg1, %c0_i32_8 : i32
    %10 = arith.extui %9 : i1 to i32
    %c0_i32_9 = arith.constant 0 : i32
    %11 = arith.cmpi ne, %10, %c0_i32_9 : i32
    scf.if %11 {
      %c0_10 = arith.constant 0 : index
      %c0_11 = arith.constant 0 : index
      %12 = vector.load %arg6[%c0_10, %c0_11] : memref<16x256xf32, #tpu.memory_space<vmem>>, vector<16x256xf32>
      %c0_12 = arith.constant 0 : index
      %c0_13 = arith.constant 0 : index
      %13 = vector.load %arg4[%c0_12, %c0_13] : memref<1x256xf32, #tpu.memory_space<vmem>>, vector<1x256xf32>
      %14 = vector.broadcast %13 : vector<1x256xf32> to vector<16x256xf32>
      %15 = arith.addf %12, %14 : vector<16x256xf32>
      %cst_14 = arith.constant 0.000000e+00 : f32
      %16 = vector.broadcast %cst_14 : f32 to vector<16x256xf32>
      %17 = arith.maximumf %15, %16 : vector<16x256xf32>
      %18 = arith.truncf %17 : vector<16x256xf32> to vector<16x256xbf16>
      %c0_15 = arith.constant 0 : index
      %c0_16 = arith.constant 0 : index
      %19 = vector.load %arg5[%c0_15, %c0_16] : memref<16x256xbf16, #tpu.memory_space<vmem>>, vector<16x256xbf16>
      tpu.vector_store %arg5[%c0_15, %c0_16], %18 {strides = array<i32>} : memref<16x256xbf16, #tpu.memory_space<vmem>>, vector<16x256xbf16>,
    } else {
    }
    return
  }
  func.func @transform_0(%arg0: i32, %arg1: i32) -> (i32, i32) {
    %c0_i32 = arith.constant 0 : i32
    %c0_i32_0 = arith.constant 0 : i32
    return %c0_i32, %arg1 : i32, i32
  }
  func.func @transform_1(%arg0: i32, %arg1: i32) -> (i32, i32) {
    %c0_i32 = arith.constant 0 : i32
    return %arg1, %arg0 : i32, i32
  }
  func.func @transform_2(%arg0: i32, %arg1: i32) -> (i32, i32) {
    %c0_i32 = arith.constant 0 : i32
    %c0_i32_0 = arith.constant 0 : i32
    return %c0_i32, %arg0 : i32, i32
  }
  func.func @transform_3(%arg0: i32, %arg1: i32) -> (i32, i32) {
    %c0_i32 = arith.constant 0 : i32
    %c0_i32_0 = arith.constant 0 : i32
    return %c0_i32, %arg0 : i32, i32
  }
}

module attributes {stable_mosaic.version = 11 : i64} {
  func.func @_linear_kernel(%arg0: i32, %arg1: i32, %arg2: memref<16x256xbf16, #tpu.memory_space<vmem>>, %arg3: memref<256x128xbf16, #tpu.memory_space<vmem>>, %arg4: memref<1x128xf32, #tpu.memory_space<vmem>>, %arg5: memref<16x128xf32, #tpu.memory_space<vmem>>, %arg6: memref<16x128xf32, #tpu.memory_space<vmem>>) attributes {dimension_semantics = [#tpu.dimension_semantics<parallel>, #tpu.dimension_semantics<arbitrary>], iteration_bounds = array<i64: 1, 1>, scalar_prefetch = 0 : i64, scratch_operands = 1 : i64, tpu.core_type = #tpu.core_type<tc>, window_params = [{transform_indices = @transform_0, window_bounds = array<i64: 16, 256>}, {transform_indices = @transform_1, window_bounds = array<i64: 256, 128>}, {transform_indices = @transform_2, window_bounds = array<i64: 1, 128>}, {transform_indices = @transform_3, window_bounds = array<i64: 16, 128>}]} {
    %c0_i32 = arith.constant 0 : i32
    %0 = arith.cmpi eq, %arg1, %c0_i32 : i32
    %1 = arith.extui %0 : i1 to i32
    %c0_i32_0 = arith.constant 0 : i32
    %2 = arith.cmpi ne, %1, %c0_i32_0 : i32
    scf.if %2 {
      %cst_10 = arith.constant 0.000000e+00 : f32
      %12 = vector.broadcast %cst_10 : f32 to vector<16x128xf32>
      %c0_11 = arith.constant 0 : index
      %c0_12 = arith.constant 0 : index
      %13 = vector.load %arg6[%c0_11, %c0_12] : memref<16x128xf32, #tpu.memory_space<vmem>>, vector<16x128xf32>
      tpu.vector_store %arg6[%c0_11, %c0_12], %12 {strides = array<i32>} : memref<16x128xf32, #tpu.memory_space<vmem>>, vector<16x128xf32>,
    } else {
    }
    %c0 = arith.constant 0 : index
    %c0_1 = arith.constant 0 : index
    %3 = vector.load %arg6[%c0, %c0_1] : memref<16x128xf32, #tpu.memory_space<vmem>>, vector<16x128xf32>
    %c0_2 = arith.constant 0 : index
    %c0_3 = arith.constant 0 : index
    %4 = vector.load %arg2[%c0_2, %c0_3] : memref<16x256xbf16, #tpu.memory_space<vmem>>, vector<16x256xbf16>
    %c0_4 = arith.constant 0 : index
    %c0_5 = arith.constant 0 : index
    %5 = vector.load %arg3[%c0_4, %c0_5] : memref<256x128xbf16, #tpu.memory_space<vmem>>, vector<256x128xbf16>
    %cst = arith.constant dense<0.000000e+00> : vector<16x128xf32>
    %6 = tpu.matmul %4, %5, %cst {dimension_numbers = #tpu.dot_dimension_numbers<[1], [0], [0], [1], [0, 0, 1, 1], [], []>} : vector<16x256xbf16>, vector<256x128xbf16>, vector<16x128xf32> -> vector<16x128xf32>
    %7 = arith.addf %3, %6 : vector<16x128xf32>
    %c0_6 = arith.constant 0 : index
    %c0_7 = arith.constant 0 : index
    %8 = vector.load %arg6[%c0_6, %c0_7] : memref<16x128xf32, #tpu.memory_space<vmem>>, vector<16x128xf32>
    tpu.vector_store %arg6[%c0_6, %c0_7], %7 {strides = array<i32>} : memref<16x128xf32, #tpu.memory_space<vmem>>, vector<16x128xf32>,
    %c0_i32_8 = arith.constant 0 : i32
    %9 = arith.cmpi eq, %arg1, %c0_i32_8 : i32
    %10 = arith.extui %9 : i1 to i32
    %c0_i32_9 = arith.constant 0 : i32
    %11 = arith.cmpi ne, %10, %c0_i32_9 : i32
    scf.if %11 {
      %c0_10 = arith.constant 0 : index
      %c0_11 = arith.constant 0 : index
      %12 = vector.load %arg6[%c0_10, %c0_11] : memref<16x128xf32, #tpu.memory_space<vmem>>, vector<16x128xf32>
      %c0_12 = arith.constant 0 : index
      %c0_13 = arith.constant 0 : index
      %13 = vector.load %arg4[%c0_12, %c0_13] : memref<1x128xf32, #tpu.memory_space<vmem>>, vector<1x128xf32>
      %14 = vector.broadcast %13 : vector<1x128xf32> to vector<16x128xf32>
      %15 = arith.addf %12, %14 : vector<16x128xf32>
      %cst_14 = arith.constant 0.000000e+00 : f32
      %16 = vector.broadcast %cst_14 : f32 to vector<16x128xf32>
      %17 = arith.maximumf %15, %16 : vector<16x128xf32>
      %c0_15 = arith.constant 0 : index
      %c0_16 = arith.constant 0 : index
      %18 = vector.load %arg5[%c0_15, %c0_16] : memref<16x128xf32, #tpu.memory_space<vmem>>, vector<16x128xf32>
      tpu.vector_store %arg5[%c0_15, %c0_16], %17 {strides = array<i32>} : memref<16x128xf32, #tpu.memory_space<vmem>>, vector<16x128xf32>,
    } else {
    }
    return
  }
  func.func @transform_0(%arg0: i32, %arg1: i32) -> (i32, i32) {
    %c0_i32 = arith.constant 0 : i32
    %c0_i32_0 = arith.constant 0 : i32
    return %c0_i32, %arg1 : i32, i32
  }
  func.func @transform_1(%arg0: i32, %arg1: i32) -> (i32, i32) {
    %c0_i32 = arith.constant 0 : i32
    return %arg1, %arg0 : i32, i32
  }
  func.func @transform_2(%arg0: i32, %arg1: i32) -> (i32, i32) {
    %c0_i32 = arith.constant 0 : i32
    %c0_i32_0 = arith.constant 0 : i32
    return %c0_i32, %arg0 : i32, i32
  }
  func.func @transform_3(%arg0: i32, %arg1: i32) -> (i32, i32) {
    %c0_i32 = arith.constant 0 : i32
    %c0_i32_0 = arith.constant 0 : i32
    return %c0_i32, %arg0 : i32, i32
  }
}

module attributes {stable_mosaic.version = 11 : i64} {
  func.func @_linear_kernel(%arg0: i32, %arg1: i32, %arg2: memref<16x128xbf16, #tpu.memory_space<vmem>>, %arg3: memref<128x128xbf16, #tpu.memory_space<vmem>>, %arg4: memref<1x128xf32, #tpu.memory_space<vmem>>, %arg5: memref<16x128xbf16, #tpu.memory_space<vmem>>, %arg6: memref<16x128xf32, #tpu.memory_space<vmem>>) attributes {dimension_semantics = [#tpu.dimension_semantics<parallel>, #tpu.dimension_semantics<arbitrary>], iteration_bounds = array<i64: 1, 1>, scalar_prefetch = 0 : i64, scratch_operands = 1 : i64, tpu.core_type = #tpu.core_type<tc>, window_params = [{transform_indices = @transform_0, window_bounds = array<i64: 16, 128>}, {transform_indices = @transform_1, window_bounds = array<i64: 128, 128>}, {transform_indices = @transform_2, window_bounds = array<i64: 1, 128>}, {transform_indices = @transform_3, window_bounds = array<i64: 16, 128>}]} {
    %c0_i32 = arith.constant 0 : i32
    %0 = arith.cmpi eq, %arg1, %c0_i32 : i32
    %1 = arith.extui %0 : i1 to i32
    %c0_i32_0 = arith.constant 0 : i32
    %2 = arith.cmpi ne, %1, %c0_i32_0 : i32
    scf.if %2 {
      %cst_10 = arith.constant 0.000000e+00 : f32
      %12 = vector.broadcast %cst_10 : f32 to vector<16x128xf32>
      %c0_11 = arith.constant 0 : index
      %c0_12 = arith.constant 0 : index
      %13 = vector.load %arg6[%c0_11, %c0_12] : memref<16x128xf32, #tpu.memory_space<vmem>>, vector<16x128xf32>
      tpu.vector_store %arg6[%c0_11, %c0_12], %12 {strides = array<i32>} : memref<16x128xf32, #tpu.memory_space<vmem>>, vector<16x128xf32>,
    } else {
    }
    %c0 = arith.constant 0 : index
    %c0_1 = arith.constant 0 : index
    %3 = vector.load %arg6[%c0, %c0_1] : memref<16x128xf32, #tpu.memory_space<vmem>>, vector<16x128xf32>
    %c0_2 = arith.constant 0 : index
    %c0_3 = arith.constant 0 : index
    %4 = vector.load %arg2[%c0_2, %c0_3] : memref<16x128xbf16, #tpu.memory_space<vmem>>, vector<16x128xbf16>
    %c0_4 = arith.constant 0 : index
    %c0_5 = arith.constant 0 : index
    %5 = vector.load %arg3[%c0_4, %c0_5] : memref<128x128xbf16, #tpu.memory_space<vmem>>, vector<128x128xbf16>
    %cst = arith.constant dense<0.000000e+00> : vector<16x128xf32>
    %6 = tpu.matmul %4, %5, %cst {dimension_numbers = #tpu.dot_dimension_numbers<[1], [0], [0], [1], [0, 0, 1, 1], [], []>} : vector<16x128xbf16>, vector<128x128xbf16>, vector<16x128xf32> -> vector<16x128xf32>
    %7 = arith.addf %3, %6 : vector<16x128xf32>
    %c0_6 = arith.constant 0 : index
    %c0_7 = arith.constant 0 : index
    %8 = vector.load %arg6[%c0_6, %c0_7] : memref<16x128xf32, #tpu.memory_space<vmem>>, vector<16x128xf32>
    tpu.vector_store %arg6[%c0_6, %c0_7], %7 {strides = array<i32>} : memref<16x128xf32, #tpu.memory_space<vmem>>, vector<16x128xf32>,
    %c0_i32_8 = arith.constant 0 : i32
    %9 = arith.cmpi eq, %arg1, %c0_i32_8 : i32
    %10 = arith.extui %9 : i1 to i32
    %c0_i32_9 = arith.constant 0 : i32
    %11 = arith.cmpi ne, %10, %c0_i32_9 : i32
    scf.if %11 {
      %c0_10 = arith.constant 0 : index
      %c0_11 = arith.constant 0 : index
      %12 = vector.load %arg6[%c0_10, %c0_11] : memref<16x128xf32, #tpu.memory_space<vmem>>, vector<16x128xf32>
      %c0_12 = arith.constant 0 : index
      %c0_13 = arith.constant 0 : index
      %13 = vector.load %arg4[%c0_12, %c0_13] : memref<1x128xf32, #tpu.memory_space<vmem>>, vector<1x128xf32>
      %14 = vector.broadcast %13 : vector<1x128xf32> to vector<16x128xf32>
      %15 = arith.addf %12, %14 : vector<16x128xf32>
      %cst_14 = arith.constant 0.000000e+00 : f32
      %16 = vector.broadcast %cst_14 : f32 to vector<16x128xf32>
      %17 = arith.maximumf %15, %16 : vector<16x128xf32>
      %18 = arith.truncf %17 : vector<16x128xf32> to vector<16x128xbf16>
      %c0_15 = arith.constant 0 : index
      %c0_16 = arith.constant 0 : index
      %19 = vector.load %arg5[%c0_15, %c0_16] : memref<16x128xbf16, #tpu.memory_space<vmem>>, vector<16x128xbf16>
      tpu.vector_store %arg5[%c0_15, %c0_16], %18 {strides = array<i32>} : memref<16x128xbf16, #tpu.memory_space<vmem>>, vector<16x128xbf16>,
    } else {
    }
    return
  }
  func.func @transform_0(%arg0: i32, %arg1: i32) -> (i32, i32) {
    %c0_i32 = arith.constant 0 : i32
    %c0_i32_0 = arith.constant 0 : i32
    return %c0_i32, %arg1 : i32, i32
  }
  func.func @transform_1(%arg0: i32, %arg1: i32) -> (i32, i32) {
    %c0_i32 = arith.constant 0 : i32
    return %arg1, %arg0 : i32, i32
  }
  func.func @transform_2(%arg0: i32, %arg1: i32) -> (i32, i32) {
    %c0_i32 = arith.constant 0 : i32
    %c0_i32_0 = arith.constant 0 : i32
    return %c0_i32, %arg0 : i32, i32
  }
  func.func @transform_3(%arg0: i32, %arg1: i32) -> (i32, i32) {
    %c0_i32 = arith.constant 0 : i32
    %c0_i32_0 = arith.constant 0 : i32
    return %c0_i32, %arg0 : i32, i32
  }
}

module attributes {stable_mosaic.version = 11 : i64} {
  func.func @_linear_kernel(%arg0: i32, %arg1: i32, %arg2: memref<16x128xbf16, #tpu.memory_space<vmem>>, %arg3: memref<128x128xbf16, #tpu.memory_space<vmem>>, %arg4: memref<1x128xf32, #tpu.memory_space<vmem>>, %arg5: memref<16x128xf32, #tpu.memory_space<vmem>>, %arg6: memref<16x128xf32, #tpu.memory_space<vmem>>) attributes {dimension_semantics = [#tpu.dimension_semantics<parallel>, #tpu.dimension_semantics<arbitrary>], iteration_bounds = array<i64: 1, 1>, scalar_prefetch = 0 : i64, scratch_operands = 1 : i64, tpu.core_type = #tpu.core_type<tc>, window_params = [{transform_indices = @transform_0, window_bounds = array<i64: 16, 128>}, {transform_indices = @transform_1, window_bounds = array<i64: 128, 128>}, {transform_indices = @transform_2, window_bounds = array<i64: 1, 128>}, {transform_indices = @transform_3, window_bounds = array<i64: 16, 128>}]} {
    %c0_i32 = arith.constant 0 : i32
    %0 = arith.cmpi eq, %arg1, %c0_i32 : i32
    %1 = arith.extui %0 : i1 to i32
    %c0_i32_0 = arith.constant 0 : i32
    %2 = arith.cmpi ne, %1, %c0_i32_0 : i32
    scf.if %2 {
      %cst_10 = arith.constant 0.000000e+00 : f32
      %12 = vector.broadcast %cst_10 : f32 to vector<16x128xf32>
      %c0_11 = arith.constant 0 : index
      %c0_12 = arith.constant 0 : index
      %13 = vector.load %arg6[%c0_11, %c0_12] : memref<16x128xf32, #tpu.memory_space<vmem>>, vector<16x128xf32>
      tpu.vector_store %arg6[%c0_11, %c0_12], %12 {strides = array<i32>} : memref<16x128xf32, #tpu.memory_space<vmem>>, vector<16x128xf32>,
    } else {
    }
    %c0 = arith.constant 0 : index
    %c0_1 = arith.constant 0 : index
    %3 = vector.load %arg6[%c0, %c0_1] : memref<16x128xf32, #tpu.memory_space<vmem>>, vector<16x128xf32>
    %c0_2 = arith.constant 0 : index
    %c0_3 = arith.constant 0 : index
    %4 = vector.load %arg2[%c0_2, %c0_3] : memref<16x128xbf16, #tpu.memory_space<vmem>>, vector<16x128xbf16>
    %c0_4 = arith.constant 0 : index
    %c0_5 = arith.constant 0 : index
    %5 = vector.load %arg3[%c0_4, %c0_5] : memref<128x128xbf16, #tpu.memory_space<vmem>>, vector<128x128xbf16>
    %cst = arith.constant dense<0.000000e+00> : vector<16x128xf32>
    %6 = tpu.matmul %4, %5, %cst {dimension_numbers = #tpu.dot_dimension_numbers<[1], [0], [0], [1], [0, 0, 1, 1], [], []>} : vector<16x128xbf16>, vector<128x128xbf16>, vector<16x128xf32> -> vector<16x128xf32>
    %7 = arith.addf %3, %6 : vector<16x128xf32>
    %c0_6 = arith.constant 0 : index
    %c0_7 = arith.constant 0 : index
    %8 = vector.load %arg6[%c0_6, %c0_7] : memref<16x128xf32, #tpu.memory_space<vmem>>, vector<16x128xf32>
    tpu.vector_store %arg6[%c0_6, %c0_7], %7 {strides = array<i32>} : memref<16x128xf32, #tpu.memory_space<vmem>>, vector<16x128xf32>,
    %c0_i32_8 = arith.constant 0 : i32
    %9 = arith.cmpi eq, %arg1, %c0_i32_8 : i32
    %10 = arith.extui %9 : i1 to i32
    %c0_i32_9 = arith.constant 0 : i32
    %11 = arith.cmpi ne, %10, %c0_i32_9 : i32
    scf.if %11 {
      %c0_10 = arith.constant 0 : index
      %c0_11 = arith.constant 0 : index
      %12 = vector.load %arg6[%c0_10, %c0_11] : memref<16x128xf32, #tpu.memory_space<vmem>>, vector<16x128xf32>
      %c0_12 = arith.constant 0 : index
      %c0_13 = arith.constant 0 : index
      %13 = vector.load %arg4[%c0_12, %c0_13] : memref<1x128xf32, #tpu.memory_space<vmem>>, vector<1x128xf32>
      %14 = vector.broadcast %13 : vector<1x128xf32> to vector<16x128xf32>
      %15 = arith.addf %12, %14 : vector<16x128xf32>
      %c0_14 = arith.constant 0 : index
      %c0_15 = arith.constant 0 : index
      %16 = vector.load %arg5[%c0_14, %c0_15] : memref<16x128xf32, #tpu.memory_space<vmem>>, vector<16x128xf32>
      tpu.vector_store %arg5[%c0_14, %c0_15], %15 {strides = array<i32>} : memref<16x128xf32, #tpu.memory_space<vmem>>, vector<16x128xf32>,
    } else {
    }
    return
  }
  func.func @transform_0(%arg0: i32, %arg1: i32) -> (i32, i32) {
    %c0_i32 = arith.constant 0 : i32
    %c0_i32_0 = arith.constant 0 : i32
    return %c0_i32, %arg1 : i32, i32
  }
  func.func @transform_1(%arg0: i32, %arg1: i32) -> (i32, i32) {
    %c0_i32 = arith.constant 0 : i32
    return %arg1, %arg0 : i32, i32
  }
  func.func @transform_2(%arg0: i32, %arg1: i32) -> (i32, i32) {
    %c0_i32 = arith.constant 0 : i32
    %c0_i32_0 = arith.constant 0 : i32
    return %c0_i32, %arg0 : i32, i32
  }
  func.func @transform_3(%arg0: i32, %arg1: i32) -> (i32, i32) {
    %c0_i32 = arith.constant 0 : i32
    %c0_i32_0 = arith.constant 0 : i32
    return %c0_i32, %arg0 : i32, i32
  }
}

module attributes {stable_mosaic.version = 11 : i64} {
  func.func @_head_reparam_kernel(%arg0: memref<16x128xbf16, #tpu.memory_space<vmem>>, %arg1: memref<128x256xbf16, #tpu.memory_space<vmem>>, %arg2: memref<1x256xf32, #tpu.memory_space<vmem>>, %arg3: memref<16x128xf32, #tpu.memory_space<vmem>>, %arg4: memref<16x128xf32, #tpu.memory_space<vmem>>, %arg5: memref<16x128xf32, #tpu.memory_space<vmem>>, %arg6: memref<16x128xbf16, #tpu.memory_space<vmem>>) attributes {dimension_semantics = [], scalar_prefetch = 0 : i64, scratch_operands = 0 : i64, tpu.core_type = #tpu.core_type<tc>} {
    %c0 = arith.constant 0 : index
    %c0_0 = arith.constant 0 : index
    %0 = vector.load %arg0[%c0, %c0_0] : memref<16x128xbf16, #tpu.memory_space<vmem>>, vector<16x128xbf16>
    %c0_1 = arith.constant 0 : index
    %c0_2 = arith.constant 0 : index
    %1 = vector.load %arg1[%c0_1, %c0_2] : memref<128x256xbf16, #tpu.memory_space<vmem>>, vector<128x256xbf16>
    %cst = arith.constant dense<0.000000e+00> : vector<16x256xf32>
    %2 = tpu.matmul %0, %1, %cst {dimension_numbers = #tpu.dot_dimension_numbers<[1], [0], [0], [1], [0, 0, 1, 1], [], []>} : vector<16x128xbf16>, vector<128x256xbf16>, vector<16x256xf32> -> vector<16x256xf32>
    %c0_3 = arith.constant 0 : index
    %c0_4 = arith.constant 0 : index
    %3 = vector.load %arg2[%c0_3, %c0_4] : memref<1x256xf32, #tpu.memory_space<vmem>>, vector<1x256xf32>
    %4 = vector.broadcast %3 : vector<1x256xf32> to vector<16x256xf32>
    %5 = arith.addf %2, %4 : vector<16x256xf32>
    %6 = vector.extract_strided_slice %5 {offsets = [0, 0], sizes = [16, 128], strides = [1, 1]} : vector<16x256xf32> to vector<16x128xf32>
    %7 = vector.extract_strided_slice %5 {offsets = [0, 128], sizes = [16, 128], strides = [1, 1]} : vector<16x256xf32> to vector<16x128xf32>
    %cst_5 = arith.constant -5.000000e+00 : f32
    %cst_6 = arith.constant 5.000000e+00 : f32
    %8 = vector.broadcast %cst_5 : f32 to vector<16x128xf32>
    %9 = arith.maximumf %8, %7 : vector<16x128xf32>
    %10 = vector.broadcast %cst_6 : f32 to vector<16x128xf32>
    %11 = arith.minimumf %10, %9 : vector<16x128xf32>
    %c0_7 = arith.constant 0 : index
    %c0_8 = arith.constant 0 : index
    %12 = vector.load %arg4[%c0_7, %c0_8] : memref<16x128xf32, #tpu.memory_space<vmem>>, vector<16x128xf32>
    tpu.vector_store %arg4[%c0_7, %c0_8], %6 {strides = array<i32>} : memref<16x128xf32, #tpu.memory_space<vmem>>, vector<16x128xf32>,
    %c0_9 = arith.constant 0 : index
    %c0_10 = arith.constant 0 : index
    %13 = vector.load %arg5[%c0_9, %c0_10] : memref<16x128xf32, #tpu.memory_space<vmem>>, vector<16x128xf32>
    tpu.vector_store %arg5[%c0_9, %c0_10], %11 {strides = array<i32>} : memref<16x128xf32, #tpu.memory_space<vmem>>, vector<16x128xf32>,
    %c0_11 = arith.constant 0 : index
    %c0_12 = arith.constant 0 : index
    %14 = vector.load %arg3[%c0_11, %c0_12] : memref<16x128xf32, #tpu.memory_space<vmem>>, vector<16x128xf32>
    %cst_13 = arith.constant 5.000000e-01 : f32
    %15 = vector.broadcast %cst_13 : f32 to vector<16x128xf32>
    %16 = arith.mulf %15, %11 : vector<16x128xf32>
    %17 = math.exp %16 : vector<16x128xf32>
    %18 = arith.mulf %14, %17 : vector<16x128xf32>
    %19 = arith.addf %6, %18 : vector<16x128xf32>
    %20 = arith.truncf %19 : vector<16x128xf32> to vector<16x128xbf16>
    %c0_14 = arith.constant 0 : index
    %c0_15 = arith.constant 0 : index
    %21 = vector.load %arg6[%c0_14, %c0_15] : memref<16x128xbf16, #tpu.memory_space<vmem>>, vector<16x128xbf16>
    tpu.vector_store %arg6[%c0_14, %c0_15], %20 {strides = array<i32>} : memref<16x128xbf16, #tpu.memory_space<vmem>>, vector<16x128xbf16>,
    return
  }
}

module attributes {stable_mosaic.version = 11 : i64} {
  func.func @_linear_kernel(%arg0: i32, %arg1: i32, %arg2: memref<16x384xbf16, #tpu.memory_space<vmem>>, %arg3: memref<384x512xbf16, #tpu.memory_space<vmem>>, %arg4: memref<1x512xf32, #tpu.memory_space<vmem>>, %arg5: memref<16x512xbf16, #tpu.memory_space<vmem>>, %arg6: memref<16x512xf32, #tpu.memory_space<vmem>>) attributes {dimension_semantics = [#tpu.dimension_semantics<parallel>, #tpu.dimension_semantics<arbitrary>], iteration_bounds = array<i64: 1, 1>, scalar_prefetch = 0 : i64, scratch_operands = 1 : i64, tpu.core_type = #tpu.core_type<tc>, window_params = [{transform_indices = @transform_0, window_bounds = array<i64: 16, 384>}, {transform_indices = @transform_1, window_bounds = array<i64: 384, 512>}, {transform_indices = @transform_2, window_bounds = array<i64: 1, 512>}, {transform_indices = @transform_3, window_bounds = array<i64: 16, 512>}]} {
    %c0_i32 = arith.constant 0 : i32
    %0 = arith.cmpi eq, %arg1, %c0_i32 : i32
    %1 = arith.extui %0 : i1 to i32
    %c0_i32_0 = arith.constant 0 : i32
    %2 = arith.cmpi ne, %1, %c0_i32_0 : i32
    scf.if %2 {
      %cst_10 = arith.constant 0.000000e+00 : f32
      %12 = vector.broadcast %cst_10 : f32 to vector<16x512xf32>
      %c0_11 = arith.constant 0 : index
      %c0_12 = arith.constant 0 : index
      %13 = vector.load %arg6[%c0_11, %c0_12] : memref<16x512xf32, #tpu.memory_space<vmem>>, vector<16x512xf32>
      tpu.vector_store %arg6[%c0_11, %c0_12], %12 {strides = array<i32>} : memref<16x512xf32, #tpu.memory_space<vmem>>, vector<16x512xf32>,
    } else {
    }
    %c0 = arith.constant 0 : index
    %c0_1 = arith.constant 0 : index
    %3 = vector.load %arg6[%c0, %c0_1] : memref<16x512xf32, #tpu.memory_space<vmem>>, vector<16x512xf32>
    %c0_2 = arith.constant 0 : index
    %c0_3 = arith.constant 0 : index
    %4 = vector.load %arg2[%c0_2, %c0_3] : memref<16x384xbf16, #tpu.memory_space<vmem>>, vector<16x384xbf16>
    %c0_4 = arith.constant 0 : index
    %c0_5 = arith.constant 0 : index
    %5 = vector.load %arg3[%c0_4, %c0_5] : memref<384x512xbf16, #tpu.memory_space<vmem>>, vector<384x512xbf16>
    %cst = arith.constant dense<0.000000e+00> : vector<16x512xf32>
    %6 = tpu.matmul %4, %5, %cst {dimension_numbers = #tpu.dot_dimension_numbers<[1], [0], [0], [1], [0, 0, 1, 1], [], []>} : vector<16x384xbf16>, vector<384x512xbf16>, vector<16x512xf32> -> vector<16x512xf32>
    %7 = arith.addf %3, %6 : vector<16x512xf32>
    %c0_6 = arith.constant 0 : index
    %c0_7 = arith.constant 0 : index
    %8 = vector.load %arg6[%c0_6, %c0_7] : memref<16x512xf32, #tpu.memory_space<vmem>>, vector<16x512xf32>
    tpu.vector_store %arg6[%c0_6, %c0_7], %7 {strides = array<i32>} : memref<16x512xf32, #tpu.memory_space<vmem>>, vector<16x512xf32>,
    %c0_i32_8 = arith.constant 0 : i32
    %9 = arith.cmpi eq, %arg1, %c0_i32_8 : i32
    %10 = arith.extui %9 : i1 to i32
    %c0_i32_9 = arith.constant 0 : i32
    %11 = arith.cmpi ne, %10, %c0_i32_9 : i32
    scf.if %11 {
      %c0_10 = arith.constant 0 : index
      %c0_11 = arith.constant 0 : index
      %12 = vector.load %arg6[%c0_10, %c0_11] : memref<16x512xf32, #tpu.memory_space<vmem>>, vector<16x512xf32>
      %c0_12 = arith.constant 0 : index
      %c0_13 = arith.constant 0 : index
      %13 = vector.load %arg4[%c0_12, %c0_13] : memref<1x512xf32, #tpu.memory_space<vmem>>, vector<1x512xf32>
      %14 = vector.broadcast %13 : vector<1x512xf32> to vector<16x512xf32>
      %15 = arith.addf %12, %14 : vector<16x512xf32>
      %cst_14 = arith.constant 0.000000e+00 : f32
      %16 = vector.broadcast %cst_14 : f32 to vector<16x512xf32>
      %17 = arith.maximumf %15, %16 : vector<16x512xf32>
      %18 = arith.truncf %17 : vector<16x512xf32> to vector<16x512xbf16>
      %c0_15 = arith.constant 0 : index
      %c0_16 = arith.constant 0 : index
      %19 = vector.load %arg5[%c0_15, %c0_16] : memref<16x512xbf16, #tpu.memory_space<vmem>>, vector<16x512xbf16>
      tpu.vector_store %arg5[%c0_15, %c0_16], %18 {strides = array<i32>} : memref<16x512xbf16, #tpu.memory_space<vmem>>, vector<16x512xbf16>,
    } else {
    }
    return
  }
  func.func @transform_0(%arg0: i32, %arg1: i32) -> (i32, i32) {
    %c0_i32 = arith.constant 0 : i32
    %c0_i32_0 = arith.constant 0 : i32
    return %c0_i32, %arg1 : i32, i32
  }
  func.func @transform_1(%arg0: i32, %arg1: i32) -> (i32, i32) {
    %c0_i32 = arith.constant 0 : i32
    return %arg1, %arg0 : i32, i32
  }
  func.func @transform_2(%arg0: i32, %arg1: i32) -> (i32, i32) {
    %c0_i32 = arith.constant 0 : i32
    %c0_i32_0 = arith.constant 0 : i32
    return %c0_i32, %arg0 : i32, i32
  }
  func.func @transform_3(%arg0: i32, %arg1: i32) -> (i32, i32) {
    %c0_i32 = arith.constant 0 : i32
    %c0_i32_0 = arith.constant 0 : i32
    return %c0_i32, %arg0 : i32, i32
  }
}

module attributes {stable_mosaic.version = 11 : i64} {
  func.func @_linear_kernel(%arg0: i32, %arg1: i32, %arg2: memref<16x256xbf16, #tpu.memory_space<vmem>>, %arg3: memref<256x384xbf16, #tpu.memory_space<vmem>>, %arg4: memref<1x384xf32, #tpu.memory_space<vmem>>, %arg5: memref<16x384xbf16, #tpu.memory_space<vmem>>, %arg6: memref<16x384xf32, #tpu.memory_space<vmem>>) attributes {dimension_semantics = [#tpu.dimension_semantics<parallel>, #tpu.dimension_semantics<arbitrary>], iteration_bounds = array<i64: 1, 1>, scalar_prefetch = 0 : i64, scratch_operands = 1 : i64, tpu.core_type = #tpu.core_type<tc>, window_params = [{transform_indices = @transform_0, window_bounds = array<i64: 16, 256>}, {transform_indices = @transform_1, window_bounds = array<i64: 256, 384>}, {transform_indices = @transform_2, window_bounds = array<i64: 1, 384>}, {transform_indices = @transform_3, window_bounds = array<i64: 16, 384>}]} {
    %c0_i32 = arith.constant 0 : i32
    %0 = arith.cmpi eq, %arg1, %c0_i32 : i32
    %1 = arith.extui %0 : i1 to i32
    %c0_i32_0 = arith.constant 0 : i32
    %2 = arith.cmpi ne, %1, %c0_i32_0 : i32
    scf.if %2 {
      %cst_10 = arith.constant 0.000000e+00 : f32
      %12 = vector.broadcast %cst_10 : f32 to vector<16x384xf32>
      %c0_11 = arith.constant 0 : index
      %c0_12 = arith.constant 0 : index
      %13 = vector.load %arg6[%c0_11, %c0_12] : memref<16x384xf32, #tpu.memory_space<vmem>>, vector<16x384xf32>
      tpu.vector_store %arg6[%c0_11, %c0_12], %12 {strides = array<i32>} : memref<16x384xf32, #tpu.memory_space<vmem>>, vector<16x384xf32>,
    } else {
    }
    %c0 = arith.constant 0 : index
    %c0_1 = arith.constant 0 : index
    %3 = vector.load %arg6[%c0, %c0_1] : memref<16x384xf32, #tpu.memory_space<vmem>>, vector<16x384xf32>
    %c0_2 = arith.constant 0 : index
    %c0_3 = arith.constant 0 : index
    %4 = vector.load %arg2[%c0_2, %c0_3] : memref<16x256xbf16, #tpu.memory_space<vmem>>, vector<16x256xbf16>
    %c0_4 = arith.constant 0 : index
    %c0_5 = arith.constant 0 : index
    %5 = vector.load %arg3[%c0_4, %c0_5] : memref<256x384xbf16, #tpu.memory_space<vmem>>, vector<256x384xbf16>
    %cst = arith.constant dense<0.000000e+00> : vector<16x384xf32>
    %6 = tpu.matmul %4, %5, %cst {dimension_numbers = #tpu.dot_dimension_numbers<[1], [0], [0], [1], [0, 0, 1, 1], [], []>} : vector<16x256xbf16>, vector<256x384xbf16>, vector<16x384xf32> -> vector<16x384xf32>
    %7 = arith.addf %3, %6 : vector<16x384xf32>
    %c0_6 = arith.constant 0 : index
    %c0_7 = arith.constant 0 : index
    %8 = vector.load %arg6[%c0_6, %c0_7] : memref<16x384xf32, #tpu.memory_space<vmem>>, vector<16x384xf32>
    tpu.vector_store %arg6[%c0_6, %c0_7], %7 {strides = array<i32>} : memref<16x384xf32, #tpu.memory_space<vmem>>, vector<16x384xf32>,
    %c0_i32_8 = arith.constant 0 : i32
    %9 = arith.cmpi eq, %arg1, %c0_i32_8 : i32
    %10 = arith.extui %9 : i1 to i32
    %c0_i32_9 = arith.constant 0 : i32
    %11 = arith.cmpi ne, %10, %c0_i32_9 : i32
    scf.if %11 {
      %c0_10 = arith.constant 0 : index
      %c0_11 = arith.constant 0 : index
      %12 = vector.load %arg6[%c0_10, %c0_11] : memref<16x384xf32, #tpu.memory_space<vmem>>, vector<16x384xf32>
      %c0_12 = arith.constant 0 : index
      %c0_13 = arith.constant 0 : index
      %13 = vector.load %arg4[%c0_12, %c0_13] : memref<1x384xf32, #tpu.memory_space<vmem>>, vector<1x384xf32>
      %14 = vector.broadcast %13 : vector<1x384xf32> to vector<16x384xf32>
      %15 = arith.addf %12, %14 : vector<16x384xf32>
      %cst_14 = arith.constant 0.000000e+00 : f32
      %16 = vector.broadcast %cst_14 : f32 to vector<16x384xf32>
      %17 = arith.maximumf %15, %16 : vector<16x384xf32>
      %18 = arith.truncf %17 : vector<16x384xf32> to vector<16x384xbf16>
      %c0_15 = arith.constant 0 : index
      %c0_16 = arith.constant 0 : index
      %19 = vector.load %arg5[%c0_15, %c0_16] : memref<16x384xbf16, #tpu.memory_space<vmem>>, vector<16x384xbf16>
      tpu.vector_store %arg5[%c0_15, %c0_16], %18 {strides = array<i32>} : memref<16x384xbf16, #tpu.memory_space<vmem>>, vector<16x384xbf16>,
    } else {
    }
    return
  }
  func.func @transform_0(%arg0: i32, %arg1: i32) -> (i32, i32) {
    %c0_i32 = arith.constant 0 : i32
    %c0_i32_0 = arith.constant 0 : i32
    return %c0_i32, %arg1 : i32, i32
  }
  func.func @transform_1(%arg0: i32, %arg1: i32) -> (i32, i32) {
    %c0_i32 = arith.constant 0 : i32
    return %arg1, %arg0 : i32, i32
  }
  func.func @transform_2(%arg0: i32, %arg1: i32) -> (i32, i32) {
    %c0_i32 = arith.constant 0 : i32
    %c0_i32_0 = arith.constant 0 : i32
    return %c0_i32, %arg0 : i32, i32
  }
  func.func @transform_3(%arg0: i32, %arg1: i32) -> (i32, i32) {
    %c0_i32 = arith.constant 0 : i32
    %c0_i32_0 = arith.constant 0 : i32
    return %c0_i32, %arg0 : i32, i32
  }
}

module attributes {stable_mosaic.version = 11 : i64} {
  func.func @_linear_kernel(%arg0: i32, %arg1: i32, %arg2: memref<16x128xbf16, #tpu.memory_space<vmem>>, %arg3: memref<128x256xbf16, #tpu.memory_space<vmem>>, %arg4: memref<1x256xf32, #tpu.memory_space<vmem>>, %arg5: memref<16x256xbf16, #tpu.memory_space<vmem>>, %arg6: memref<16x256xf32, #tpu.memory_space<vmem>>) attributes {dimension_semantics = [#tpu.dimension_semantics<parallel>, #tpu.dimension_semantics<arbitrary>], iteration_bounds = array<i64: 1, 1>, scalar_prefetch = 0 : i64, scratch_operands = 1 : i64, tpu.core_type = #tpu.core_type<tc>, window_params = [{transform_indices = @transform_0, window_bounds = array<i64: 16, 128>}, {transform_indices = @transform_1, window_bounds = array<i64: 128, 256>}, {transform_indices = @transform_2, window_bounds = array<i64: 1, 256>}, {transform_indices = @transform_3, window_bounds = array<i64: 16, 256>}]} {
    %c0_i32 = arith.constant 0 : i32
    %0 = arith.cmpi eq, %arg1, %c0_i32 : i32
    %1 = arith.extui %0 : i1 to i32
    %c0_i32_0 = arith.constant 0 : i32
    %2 = arith.cmpi ne, %1, %c0_i32_0 : i32
    scf.if %2 {
      %cst_10 = arith.constant 0.000000e+00 : f32
      %12 = vector.broadcast %cst_10 : f32 to vector<16x256xf32>
      %c0_11 = arith.constant 0 : index
      %c0_12 = arith.constant 0 : index
      %13 = vector.load %arg6[%c0_11, %c0_12] : memref<16x256xf32, #tpu.memory_space<vmem>>, vector<16x256xf32>
      tpu.vector_store %arg6[%c0_11, %c0_12], %12 {strides = array<i32>} : memref<16x256xf32, #tpu.memory_space<vmem>>, vector<16x256xf32>,
    } else {
    }
    %c0 = arith.constant 0 : index
    %c0_1 = arith.constant 0 : index
    %3 = vector.load %arg6[%c0, %c0_1] : memref<16x256xf32, #tpu.memory_space<vmem>>, vector<16x256xf32>
    %c0_2 = arith.constant 0 : index
    %c0_3 = arith.constant 0 : index
    %4 = vector.load %arg2[%c0_2, %c0_3] : memref<16x128xbf16, #tpu.memory_space<vmem>>, vector<16x128xbf16>
    %c0_4 = arith.constant 0 : index
    %c0_5 = arith.constant 0 : index
    %5 = vector.load %arg3[%c0_4, %c0_5] : memref<128x256xbf16, #tpu.memory_space<vmem>>, vector<128x256xbf16>
    %cst = arith.constant dense<0.000000e+00> : vector<16x256xf32>
    %6 = tpu.matmul %4, %5, %cst {dimension_numbers = #tpu.dot_dimension_numbers<[1], [0], [0], [1], [0, 0, 1, 1], [], []>} : vector<16x128xbf16>, vector<128x256xbf16>, vector<16x256xf32> -> vector<16x256xf32>
    %7 = arith.addf %3, %6 : vector<16x256xf32>
    %c0_6 = arith.constant 0 : index
    %c0_7 = arith.constant 0 : index
    %8 = vector.load %arg6[%c0_6, %c0_7] : memref<16x256xf32, #tpu.memory_space<vmem>>, vector<16x256xf32>
    tpu.vector_store %arg6[%c0_6, %c0_7], %7 {strides = array<i32>} : memref<16x256xf32, #tpu.memory_space<vmem>>, vector<16x256xf32>,
    %c0_i32_8 = arith.constant 0 : i32
    %9 = arith.cmpi eq, %arg1, %c0_i32_8 : i32
    %10 = arith.extui %9 : i1 to i32
    %c0_i32_9 = arith.constant 0 : i32
    %11 = arith.cmpi ne, %10, %c0_i32_9 : i32
    scf.if %11 {
      %c0_10 = arith.constant 0 : index
      %c0_11 = arith.constant 0 : index
      %12 = vector.load %arg6[%c0_10, %c0_11] : memref<16x256xf32, #tpu.memory_space<vmem>>, vector<16x256xf32>
      %c0_12 = arith.constant 0 : index
      %c0_13 = arith.constant 0 : index
      %13 = vector.load %arg4[%c0_12, %c0_13] : memref<1x256xf32, #tpu.memory_space<vmem>>, vector<1x256xf32>
      %14 = vector.broadcast %13 : vector<1x256xf32> to vector<16x256xf32>
      %15 = arith.addf %12, %14 : vector<16x256xf32>
      %cst_14 = arith.constant 0.000000e+00 : f32
      %16 = vector.broadcast %cst_14 : f32 to vector<16x256xf32>
      %17 = arith.maximumf %15, %16 : vector<16x256xf32>
      %18 = arith.truncf %17 : vector<16x256xf32> to vector<16x256xbf16>
      %c0_15 = arith.constant 0 : index
      %c0_16 = arith.constant 0 : index
      %19 = vector.load %arg5[%c0_15, %c0_16] : memref<16x256xbf16, #tpu.memory_space<vmem>>, vector<16x256xbf16>
      tpu.vector_store %arg5[%c0_15, %c0_16], %18 {strides = array<i32>} : memref<16x256xbf16, #tpu.memory_space<vmem>>, vector<16x256xbf16>,
    } else {
    }
    return
  }
  func.func @transform_0(%arg0: i32, %arg1: i32) -> (i32, i32) {
    %c0_i32 = arith.constant 0 : i32
    %c0_i32_0 = arith.constant 0 : i32
    return %c0_i32, %arg1 : i32, i32
  }
  func.func @transform_1(%arg0: i32, %arg1: i32) -> (i32, i32) {
    %c0_i32 = arith.constant 0 : i32
    return %arg1, %arg0 : i32, i32
  }
  func.func @transform_2(%arg0: i32, %arg1: i32) -> (i32, i32) {
    %c0_i32 = arith.constant 0 : i32
    %c0_i32_0 = arith.constant 0 : i32
    return %c0_i32, %arg0 : i32, i32
  }
  func.func @transform_3(%arg0: i32, %arg1: i32) -> (i32, i32) {
    %c0_i32 = arith.constant 0 : i32
    %c0_i32_0 = arith.constant 0 : i32
    return %c0_i32, %arg0 : i32, i32
  }
}

module attributes {stable_mosaic.version = 11 : i64} {
  func.func @_linear_kernel(%arg0: i32, %arg1: i32, %arg2: memref<16x512xbf16, #tpu.memory_space<vmem>>, %arg3: memref<512x256xbf16, #tpu.memory_space<vmem>>, %arg4: memref<1x256xf32, #tpu.memory_space<vmem>>, %arg5: memref<16x256xf32, #tpu.memory_space<vmem>>, %arg6: memref<16x256xf32, #tpu.memory_space<vmem>>) attributes {dimension_semantics = [#tpu.dimension_semantics<parallel>, #tpu.dimension_semantics<arbitrary>], iteration_bounds = array<i64: 1, 1>, scalar_prefetch = 0 : i64, scratch_operands = 1 : i64, tpu.core_type = #tpu.core_type<tc>, window_params = [{transform_indices = @transform_0, window_bounds = array<i64: 16, 512>}, {transform_indices = @transform_1, window_bounds = array<i64: 512, 256>}, {transform_indices = @transform_2, window_bounds = array<i64: 1, 256>}, {transform_indices = @transform_3, window_bounds = array<i64: 16, 256>}]} {
    %c0_i32 = arith.constant 0 : i32
    %0 = arith.cmpi eq, %arg1, %c0_i32 : i32
    %1 = arith.extui %0 : i1 to i32
    %c0_i32_0 = arith.constant 0 : i32
    %2 = arith.cmpi ne, %1, %c0_i32_0 : i32
    scf.if %2 {
      %cst_10 = arith.constant 0.000000e+00 : f32
      %12 = vector.broadcast %cst_10 : f32 to vector<16x256xf32>
      %c0_11 = arith.constant 0 : index
      %c0_12 = arith.constant 0 : index
      %13 = vector.load %arg6[%c0_11, %c0_12] : memref<16x256xf32, #tpu.memory_space<vmem>>, vector<16x256xf32>
      tpu.vector_store %arg6[%c0_11, %c0_12], %12 {strides = array<i32>} : memref<16x256xf32, #tpu.memory_space<vmem>>, vector<16x256xf32>,
    } else {
    }
    %c0 = arith.constant 0 : index
    %c0_1 = arith.constant 0 : index
    %3 = vector.load %arg6[%c0, %c0_1] : memref<16x256xf32, #tpu.memory_space<vmem>>, vector<16x256xf32>
    %c0_2 = arith.constant 0 : index
    %c0_3 = arith.constant 0 : index
    %4 = vector.load %arg2[%c0_2, %c0_3] : memref<16x512xbf16, #tpu.memory_space<vmem>>, vector<16x512xbf16>
    %c0_4 = arith.constant 0 : index
    %c0_5 = arith.constant 0 : index
    %5 = vector.load %arg3[%c0_4, %c0_5] : memref<512x256xbf16, #tpu.memory_space<vmem>>, vector<512x256xbf16>
    %cst = arith.constant dense<0.000000e+00> : vector<16x256xf32>
    %6 = tpu.matmul %4, %5, %cst {dimension_numbers = #tpu.dot_dimension_numbers<[1], [0], [0], [1], [0, 0, 1, 1], [], []>} : vector<16x512xbf16>, vector<512x256xbf16>, vector<16x256xf32> -> vector<16x256xf32>
    %7 = arith.addf %3, %6 : vector<16x256xf32>
    %c0_6 = arith.constant 0 : index
    %c0_7 = arith.constant 0 : index
    %8 = vector.load %arg6[%c0_6, %c0_7] : memref<16x256xf32, #tpu.memory_space<vmem>>, vector<16x256xf32>
    tpu.vector_store %arg6[%c0_6, %c0_7], %7 {strides = array<i32>} : memref<16x256xf32, #tpu.memory_space<vmem>>, vector<16x256xf32>,
    %c0_i32_8 = arith.constant 0 : i32
    %9 = arith.cmpi eq, %arg1, %c0_i32_8 : i32
    %10 = arith.extui %9 : i1 to i32
    %c0_i32_9 = arith.constant 0 : i32
    %11 = arith.cmpi ne, %10, %c0_i32_9 : i32
    scf.if %11 {
      %c0_10 = arith.constant 0 : index
      %c0_11 = arith.constant 0 : index
      %12 = vector.load %arg6[%c0_10, %c0_11] : memref<16x256xf32, #tpu.memory_space<vmem>>, vector<16x256xf32>
      %c0_12 = arith.constant 0 : index
      %c0_13 = arith.constant 0 : index
      %13 = vector.load %arg4[%c0_12, %c0_13] : memref<1x256xf32, #tpu.memory_space<vmem>>, vector<1x256xf32>
      %14 = vector.broadcast %13 : vector<1x256xf32> to vector<16x256xf32>
      %15 = arith.addf %12, %14 : vector<16x256xf32>
      %c0_14 = arith.constant 0 : index
      %c0_15 = arith.constant 0 : index
      %16 = vector.load %arg5[%c0_14, %c0_15] : memref<16x256xf32, #tpu.memory_space<vmem>>, vector<16x256xf32>
      tpu.vector_store %arg5[%c0_14, %c0_15], %15 {strides = array<i32>} : memref<16x256xf32, #tpu.memory_space<vmem>>, vector<16x256xf32>,
    } else {
    }
    return
  }
  func.func @transform_0(%arg0: i32, %arg1: i32) -> (i32, i32) {
    %c0_i32 = arith.constant 0 : i32
    %c0_i32_0 = arith.constant 0 : i32
    return %c0_i32, %arg1 : i32, i32
  }
  func.func @transform_1(%arg0: i32, %arg1: i32) -> (i32, i32) {
    %c0_i32 = arith.constant 0 : i32
    return %arg1, %arg0 : i32, i32
  }
  func.func @transform_2(%arg0: i32, %arg1: i32) -> (i32, i32) {
    %c0_i32 = arith.constant 0 : i32
    %c0_i32_0 = arith.constant 0 : i32
    return %c0_i32, %arg0 : i32, i32
  }
  func.func @transform_3(%arg0: i32, %arg1: i32) -> (i32, i32) {
    %c0_i32 = arith.constant 0 : i32
    %c0_i32_0 = arith.constant 0 : i32
    return %c0_i32, %arg0 : i32, i32
  }
}

</mosaic_0001>

<llo_original>
// kernel: vae_with_classifier_forward.11
$region0: #{vae_with_classifier_forward.11}
  #allocation0 [shape = 'u32[]', space=smem, size = 0x4, offset = 0x4, fixed_abs, tag = 'smem constant byte address 0x4 - core index']
  #allocation1 [shape = 'u32[144,128]{1,0:T(1,128)}', space=vmem, size = 0x12000, scoped, tag = 'internal scratch']
  #allocation2 [shape = 'f32[16,512]{1,0:T(8,128)}', space=vmem, size = 0x8000, scoped, tag = 'scratch operand']
  %s0 = inlined_call_operand.vmem [shape: bf16[16,256], index: 0, kind: input, shape index: {}]
  %s1 = inlined_call_operand.hbm [shape: bf16[256,512], index: 1, kind: input, shape index: {}]
  %s2 = inlined_call_operand.vmem [shape: f32[1,512], index: 2, kind: input, shape index: {}]
  %s3 = inlined_call_operand.vmem [shape: bf16[16,512], index: 3, kind: output, shape index: {}]
  %s4 = sld [smem:[#allocation0]]
  $region34: #{vae_with_classifier_forward.11} parent=0
    _
  %s6 = ssub.s32 1, %s4
  %s7 = scalar_select 0, %s6, %s4
  $region1: #{vae_with_classifier_forward.11} parent=0
    #allocation3 [shape = 'u8[262144]{0}', space=vmem, size = 0x40000, scoped, tag = 'input window, operand 1, single buffered']
    #allocation4 [shape = 's32[1]{0}', space=sflag, size = 0x4, scoped, tag = 'scoped memory for vae_with_classifier_forward.11']
    %8 = vsyncpa [#allocation4], 0
    // Predicated region
    $region2: #{vae_with_classifier_forward.11} parent=1 // pred_check
      _
    $region3: #{vae_with_classifier_forward.11} parent=1 // pred_check_branch
      %10 = sbr.rel (0) target = $region5
    $region4: #{vae_with_classifier_forward.11} parent=1 // pred_region
      _
    $region5: #{vae_with_classifier_forward.11} parent=1 // pred_fallthru
      _
    // Predicated region
    $region6: #{vae_with_classifier_forward.11} parent=1 // pred_check
      _
    $region7: #{vae_with_classifier_forward.11} parent=1 // pred_check_branch
      %12 = sbr.rel (0) target = $region9
    $region8: #{vae_with_classifier_forward.11} parent=1 // pred_region
      %s14 = ssub.s32 8192, 8192
      %15 = vsyncadd [#allocation4], %s14
      %s16 = sshll.u32 [#allocation3], 4
      %s17 = int_to_ptr.vmem [resolvable:$true] %s16
      %22 = dma.hbm_to_vmem [thread:$0]  %s1, 8192, %s17, [#allocation4], 256, 256, 16
    $region9: #{vae_with_classifier_forward.11} parent=1 // pred_fallthru
      _
    // Predicated region
    $region10: #{vae_with_classifier_forward.11} parent=1 // pred_check
      _
    $region11: #{vae_with_classifier_forward.11} parent=1 // pred_check_branch
      %24 = sbr.rel (0) target = $region13
    $region12: #{vae_with_classifier_forward.11} parent=1 // pred_region
      _
    $region13: #{vae_with_classifier_forward.11} parent=1 // pred_fallthru
      _
    // Predicated region
    $region14: #{vae_with_classifier_forward.11} parent=1 // pred_check
      _
    $region15: #{vae_with_classifier_forward.11} parent=1 // pred_check_branch
      %26 = sbr.rel (0) target = $region17
    $region16: #{vae_with_classifier_forward.11} parent=1 // pred_region
      %27 = dma.done [#allocation4], 8192
    $region17: #{vae_with_classifier_forward.11} parent=1 // pred_fallthru
      _
    %p28 = scmp.eq.s32.totalorder 0, 0
    // Predicated region
    $region18: #{vae_with_classifier_forward.11} parent=1 // pred_check
      %p29 = pneg %p28
    $region19: #{vae_with_classifier_forward.11} parent=1 // pred_check_branch
      %31 = sbr.rel (%p29) target = $region21
    $region20: #{vae_with_classifier_forward.11} parent=1 // pred_region
      %32 = vst [vmem:[#allocation2] sm:$0xff] 0.0
      %33 = vst [vmem:[#allocation2 + $0x8] sm:$0xff] 0.0
      %34 = vst [vmem:[#allocation2 + $0x10] sm:$0xff] 0.0
      %35 = vst [vmem:[#allocation2 + $0x18] sm:$0xff] 0.0
      %36 = vst [vmem:[#allocation2 + $0x20] sm:$0xff] 0.0
      %37 = vst [vmem:[#allocation2 + $0x28] sm:$0xff] 0.0
      %38 = vst [vmem:[#allocation2 + $0x30] sm:$0xff] 0.0
      %39 = vst [vmem:[#allocation2 + $0x38] sm:$0xff] 0.0
    $region21: #{vae_with_classifier_forward.11} parent=1 // pred_fallthru
      _
    %v40 = vld [vmem:[#allocation2] sm:$0xff]
    %v41 = vld [vmem:[#allocation2 + $0x8] sm:$0xff]
    %v42 = vld [vmem:[#allocation2 + $0x10] sm:$0xff]
    %v43 = vld [vmem:[#allocation2 + $0x18] sm:$0xff]
    %v44 = vld [vmem:[#allocation2 + $0x20] sm:$0xff]
    %v45 = vld [vmem:[#allocation2 + $0x28] sm:$0xff]
    %v46 = vld [vmem:[#allocation2 + $0x30] sm:$0xff]
    %v47 = vld [vmem:[#allocation2 + $0x38] sm:$0xff]
    %v48 = vld [vmem:[%s0] sm:$0xff]
    %v49 = vld [vmem:[%s0 + $0x8] sm:$0xff]
    %v50 = vld [vmem:[#allocation3] sm:$0xff]
    %v51 = vld [vmem:[#allocation3 + $0x8] sm:$0xff]
    %v52 = vld [vmem:[#allocation3 + $0x10] sm:$0xff]
    %v53 = vld [vmem:[#allocation3 + $0x18] sm:$0xff]
    %v54 = vld [vmem:[#allocation3 + $0x20] sm:$0xff]
    %v55 = vld [vmem:[#allocation3 + $0x28] sm:$0xff]
    %v56 = vld [vmem:[#allocation3 + $0x30] sm:$0xff]
    %v57 = vld [vmem:[#allocation3 + $0x38] sm:$0xff]
    %v58 = vld [vmem:[#allocation3 + $0x40] sm:$0xff]
    %v59 = vld [vmem:[#allocation3 + $0x48] sm:$0xff]
    %v60 = vld [vmem:[#allocation3 + $0x50] sm:$0xff]
    %v61 = vld [vmem:[#allocation3 + $0x58] sm:$0xff]
    %v62 = vld [vmem:[#allocation3 + $0x60] sm:$0xff]
    %v63 = vld [vmem:[#allocation3 + $0x68] sm:$0xff]
    %v64 = vld [vmem:[#allocation3 + $0x70] sm:$0xff]
    %v65 = vld [vmem:[#allocation3 + $0x78] sm:$0xff]
    %v66 = vld [vmem:[#allocation3 + $0x80] sm:$0xff]
    %v67 = vld [vmem:[#allocation3 + $0x88] sm:$0xff]
    %v68 = vld [vmem:[#allocation3 + $0x90] sm:$0xff]
    %v69 = vld [vmem:[#allocation3 + $0x98] sm:$0xff]
    %v70 = vld [vmem:[#allocation3 + $0xa0] sm:$0xff]
    %v71 = vld [vmem:[#allocation3 + $0xa8] sm:$0xff]
    %v72 = vld [vmem:[#allocation3 + $0xb0] sm:$0xff]
    %v73 = vld [vmem:[#allocation3 + $0xb8] sm:$0xff]
    %v74 = vld [vmem:[#allocation3 + $0xc0] sm:$0xff]
    %v75 = vld [vmem:[#allocation3 + $0xc8] sm:$0xff]
    %v76 = vld [vmem:[#allocation3 + $0xd0] sm:$0xff]
    %v77 = vld [vmem:[#allocation3 + $0xd8] sm:$0xff]
    %v78 = vld [vmem:[#allocation3 + $0xe0] sm:$0xff]
    %v79 = vld [vmem:[#allocation3 + $0xe8] sm:$0xff]
    %v80 = vld [vmem:[#allocation3 + $0xf0] sm:$0xff]
    %v81 = vld [vmem:[#allocation3 + $0xf8] sm:$0xff]
    %v82 = vld [vmem:[#allocation3 + $0x100] sm:$0xff]
    %v83 = vld [vmem:[#allocation3 + $0x108] sm:$0xff]
    %v84 = vld [vmem:[#allocation3 + $0x110] sm:$0xff]
    %v85 = vld [vmem:[#allocation3 + $0x118] sm:$0xff]
    %v86 = vld [vmem:[#allocation3 + $0x120] sm:$0xff]
    %v87 = vld [vmem:[#allocation3 + $0x128] sm:$0xff]
    %v88 = vld [vmem:[#allocation3 + $0x130] sm:$0xff]
    %v89 = vld [vmem:[#allocation3 + $0x138] sm:$0xff]
    %v90 = vld [vmem:[#allocation3 + $0x140] sm:$0xff]
    %v91 = vld [vmem:[#allocation3 + $0x148] sm:$0xff]
    %v92 = vld [vmem:[#allocation3 + $0x150] sm:$0xff]
    %v93 = vld [vmem:[#allocation3 + $0x158] sm:$0xff]
    %v94 = vld [vmem:[#allocation3 + $0x160] sm:$0xff]
    %v95 = vld [vmem:[#allocation3 + $0x168] sm:$0xff]
    %v96 = vld [vmem:[#allocation3 + $0x170] sm:$0xff]
    %v97 = vld [vmem:[#allocation3 + $0x178] sm:$0xff]
    %v98 = vld [vmem:[#allocation3 + $0x180] sm:$0xff]
    %v99 = vld [vmem:[#allocation3 + $0x188] sm:$0xff]
    %v100 = vld [vmem:[#allocation3 + $0x190] sm:$0xff]
    %v101 = vld [vmem:[#allocation3 + $0x198] sm:$0xff]
    %v102 = vld [vmem:[#allocation3 + $0x1a0] sm:$0xff]
    %v103 = vld [vmem:[#allocation3 + $0x1a8] sm:$0xff]
    %v104 = vld [vmem:[#allocation3 + $0x1b0] sm:$0xff]
    %v105 = vld [vmem:[#allocation3 + $0x1b8] sm:$0xff]
    %v106 = vld [vmem:[#allocation3 + $0x1c0] sm:$0xff]
    %v107 = vld [vmem:[#allocation3 + $0x1c8] sm:$0xff]
    %v108 = vld [vmem:[#allocation3 + $0x1d0] sm:$0xff]
    %v109 = vld [vmem:[#allocation3 + $0x1d8] sm:$0xff]
    %v110 = vld [vmem:[#allocation3 + $0x1e0] sm:$0xff]
    %v111 = vld [vmem:[#allocation3 + $0x1e8] sm:$0xff]
    %v112 = vld [vmem:[#allocation3 + $0x1f0] sm:$0xff]
    %v113 = vld [vmem:[#allocation3 + $0x1f8] sm:$0xff]
    %v116 = vunpack.c.l.b16 %v48
    %v117 = vunpack.c.h.b16 %v48
    %v118 = vunpack.c.l.b16 %v49
    %v119 = vunpack.c.h.b16 %v49
    %v120 = vpack.c.b16 %v118, %v116
    %v121 = vpack.c.b16 %v119, %v117
    %v188 = vunpack.c.l.b16 %v50
    %v189 = vunpack.c.h.b16 %v50
    %v190 = vunpack.c.l.b16 %v51
    %v191 = vunpack.c.h.b16 %v51
    %v192 = vunpack.c.l.b16 %v52
    %v193 = vunpack.c.h.b16 %v52
    %v194 = vunpack.c.l.b16 %v53
    %v195 = vunpack.c.h.b16 %v53
    %v196 = vunpack.c.l.b16 %v54
    %v197 = vunpack.c.h.b16 %v54
    %v198 = vunpack.c.l.b16 %v55
    %v199 = vunpack.c.h.b16 %v55
    %v200 = vunpack.c.l.b16 %v56
    %v201 = vunpack.c.h.b16 %v56
    %v202 = vunpack.c.l.b16 %v57
    %v203 = vunpack.c.h.b16 %v57
    %v204 = vunpack.c.l.b16 %v58
    %v205 = vunpack.c.h.b16 %v58
    %v206 = vunpack.c.l.b16 %v59
    %v207 = vunpack.c.h.b16 %v59
    %v208 = vunpack.c.l.b16 %v60
    %v209 = vunpack.c.h.b16 %v60
    %v210 = vunpack.c.l.b16 %v61
    %v211 = vunpack.c.h.b16 %v61
    %v212 = vunpack.c.l.b16 %v62
    %v213 = vunpack.c.h.b16 %v62
    %v214 = vunpack.c.l.b16 %v63
    %v215 = vunpack.c.h.b16 %v63
    %v216 = vunpack.c.l.b16 %v64
    %v217 = vunpack.c.h.b16 %v64
    %v218 = vunpack.c.l.b16 %v65
    %v219 = vunpack.c.h.b16 %v65
    %v220 = vunpack.c.l.b16 %v66
    %v221 = vunpack.c.h.b16 %v66
    %v222 = vunpack.c.l.b16 %v67
    %v223 = vunpack.c.h.b16 %v67
    %v224 = vunpack.c.l.b16 %v68
    %v225 = vunpack.c.h.b16 %v68
    %v226 = vunpack.c.l.b16 %v69
    %v227 = vunpack.c.h.b16 %v69
    %v228 = vunpack.c.l.b16 %v70
    %v229 = vunpack.c.h.b16 %v70
    %v230 = vunpack.c.l.b16 %v71
    %v231 = vunpack.c.h.b16 %v71
    %v232 = vunpack.c.l.b16 %v72
    %v233 = vunpack.c.h.b16 %v72
    %v234 = vunpack.c.l.b16 %v73
    %v235 = vunpack.c.h.b16 %v73
    %v236 = vunpack.c.l.b16 %v74
    %v237 = vunpack.c.h.b16 %v74
    %v238 = vunpack.c.l.b16 %v75
    %v239 = vunpack.c.h.b16 %v75
    %v240 = vunpack.c.l.b16 %v76
    %v241 = vunpack.c.h.b16 %v76
    %v242 = vunpack.c.l.b16 %v77
    %v243 = vunpack.c.h.b16 %v77
    %v244 = vunpack.c.l.b16 %v78
    %v245 = vunpack.c.h.b16 %v78
    %v246 = vunpack.c.l.b16 %v79
    %v247 = vunpack.c.h.b16 %v79
    %v248 = vunpack.c.l.b16 %v80
    %v249 = vunpack.c.h.b16 %v80
    %v250 = vunpack.c.l.b16 %v81
    %v251 = vunpack.c.h.b16 %v81
    %v252 = vunpack.c.l.b16 %v82
    %v253 = vunpack.c.h.b16 %v82
    %v254 = vunpack.c.l.b16 %v83
    %v255 = vunpack.c.h.b16 %v83
    %v256 = vunpack.c.l.b16 %v84
    %v257 = vunpack.c.h.b16 %v84
    %v258 = vunpack.c.l.b16 %v85
    %v259 = vunpack.c.h.b16 %v85
    %v260 = vunpack.c.l.b16 %v86
    %v261 = vunpack.c.h.b16 %v86
    %v262 = vunpack.c.l.b16 %v87
    %v263 = vunpack.c.h.b16 %v87
    %v264 = vunpack.c.l.b16 %v88
    %v265 = vunpack.c.h.b16 %v88
    %v266 = vunpack.c.l.b16 %v89
    %v267 = vunpack.c.h.b16 %v89
    %v268 = vunpack.c.l.b16 %v90
    %v269 = vunpack.c.h.b16 %v90
    %v270 = vunpack.c.l.b16 %v91
    %v271 = vunpack.c.h.b16 %v91
    %v272 = vunpack.c.l.b16 %v92
    %v273 = vunpack.c.h.b16 %v92
    %v274 = vunpack.c.l.b16 %v93
    %v275 = vunpack.c.h.b16 %v93
    %v276 = vunpack.c.l.b16 %v94
    %v277 = vunpack.c.h.b16 %v94
    %v278 = vunpack.c.l.b16 %v95
    %v279 = vunpack.c.h.b16 %v95
    %v280 = vunpack.c.l.b16 %v96
    %v281 = vunpack.c.h.b16 %v96
    %v282 = vunpack.c.l.b16 %v97
    %v283 = vunpack.c.h.b16 %v97
    %v284 = vunpack.c.l.b16 %v98
    %v285 = vunpack.c.h.b16 %v98
    %v286 = vunpack.c.l.b16 %v99
    %v287 = vunpack.c.h.b16 %v99
    %v288 = vunpack.c.l.b16 %v100
    %v289 = vunpack.c.h.b16 %v100
    %v290 = vunpack.c.l.b16 %v101
    %v291 = vunpack.c.h.b16 %v101
    %v292 = vunpack.c.l.b16 %v102
    %v293 = vunpack.c.h.b16 %v102
    %v294 = vunpack.c.l.b16 %v103
    %v295 = vunpack.c.h.b16 %v103
    %v296 = vunpack.c.l.b16 %v104
    %v297 = vunpack.c.h.b16 %v104
    %v298 = vunpack.c.l.b16 %v105
    %v299 = vunpack.c.h.b16 %v105
    %v300 = vunpack.c.l.b16 %v106
    %v301 = vunpack.c.h.b16 %v106
    %v302 = vunpack.c.l.b16 %v107
    %v303 = vunpack.c.h.b16 %v107
    %v304 = vunpack.c.l.b16 %v108
    %v305 = vunpack.c.h.b16 %v108
    %v306 = vunpack.c.l.b16 %v109
    %v307 = vunpack.c.h.b16 %v109
    %v308 = vunpack.c.l.b16 %v110
    %v309 = vunpack.c.h.b16 %v110
    %v310 = vunpack.c.l.b16 %v111
    %v311 = vunpack.c.h.b16 %v111
    %v312 = vunpack.c.l.b16 %v112
    %v313 = vunpack.c.h.b16 %v112
    %v314 = vunpack.c.l.b16 %v113
    %v315 = vunpack.c.h.b16 %v113
    %v316 = vpack.c.b16 %v192, %v188
    %v317 = vpack.c.b16 %v193, %v189
    %v318 = vpack.c.b16 %v194, %v190
    %v319 = vpack.c.b16 %v195, %v191
    %v320 = vpack.c.b16 %v200, %v196
    %v321 = vpack.c.b16 %v201, %v197
    %v322 = vpack.c.b16 %v202, %v198
    %v323 = vpack.c.b16 %v203, %v199
    %v324 = vpack.c.b16 %v208, %v204
    %v325 = vpack.c.b16 %v209, %v205
    %v326 = vpack.c.b16 %v210, %v206
    %v327 = vpack.c.b16 %v211, %v207
    %v328 = vpack.c.b16 %v216, %v212
    %v329 = vpack.c.b16 %v217, %v213
    %v330 = vpack.c.b16 %v218, %v214
    %v331 = vpack.c.b16 %v219, %v215
    %v332 = vpack.c.b16 %v224, %v220
    %v333 = vpack.c.b16 %v225, %v221
    %v334 = vpack.c.b16 %v226, %v222
    %v335 = vpack.c.b16 %v227, %v223
    %v336 = vpack.c.b16 %v232, %v228
    %v337 = vpack.c.b16 %v233, %v229
    %v338 = vpack.c.b16 %v234, %v230
    %v339 = vpack.c.b16 %v235, %v231
    %v340 = vpack.c.b16 %v240, %v236
    %v341 = vpack.c.b16 %v241, %v237
    %v342 = vpack.c.b16 %v242, %v238
    %v343 = vpack.c.b16 %v243, %v239
    %v344 = vpack.c.b16 %v248, %v244
    %v345 = vpack.c.b16 %v249, %v245
    %v346 = vpack.c.b16 %v250, %v246
    %v347 = vpack.c.b16 %v251, %v247
    %v348 = vpack.c.b16 %v256, %v252
    %v349 = vpack.c.b16 %v257, %v253
    %v350 = vpack.c.b16 %v258, %v254
    %v351 = vpack.c.b16 %v259, %v255
    %v352 = vpack.c.b16 %v264, %v260
    %v353 = vpack.c.b16 %v265, %v261
    %v354 = vpack.c.b16 %v266, %v262
    %v355 = vpack.c.b16 %v267, %v263
    %v356 = vpack.c.b16 %v272, %v268
    %v357 = vpack.c.b16 %v273, %v269
    %v358 = vpack.c.b16 %v274, %v270
    %v359 = vpack.c.b16 %v275, %v271
    %v360 = vpack.c.b16 %v280, %v276
    %v361 = vpack.c.b16 %v281, %v277
    %v362 = vpack.c.b16 %v282, %v278
    %v363 = vpack.c.b16 %v283, %v279
    %v364 = vpack.c.b16 %v288, %v284
    %v365 = vpack.c.b16 %v289, %v285
    %v366 = vpack.c.b16 %v290, %v286
    %v367 = vpack.c.b16 %v291, %v287
    %v368 = vpack.c.b16 %v296, %v292
    %v369 = vpack.c.b16 %v297, %v293
    %v370 = vpack.c.b16 %v298, %v294
    %v371 = vpack.c.b16 %v299, %v295
    %v372 = vpack.c.b16 %v304, %v300
    %v373 = vpack.c.b16 %v305, %v301
    %v374 = vpack.c.b16 %v306, %v302
    %v375 = vpack.c.b16 %v307, %v303
    %v376 = vpack.c.b16 %v312, %v308
    %v377 = vpack.c.b16 %v313, %v309
    %v378 = vpack.c.b16 %v314, %v310
    %v379 = vpack.c.b16 %v315, %v311
    %444 = vmatprep.subr.bf16.mxu0 %v345
    %445 = vmatpush1.bf16.msra.mxu0 %v344
    %446 = vmatprep.subr.bf16.mxu0 %v341
    %447 = vmatpush1.bf16.msra.mxu0 %v340
    %448 = vmatprep.subr.bf16.mxu0 %v337
    %449 = vmatpush1.bf16.msra.mxu0 %v336
    %450 = vmatprep.subr.bf16.mxu0 %v333
    %451 = vmatpush1.bf16.msra.mxu0 %v332
    %452 = vmatprep.subr.bf16.mxu0 %v329
    %453 = vmatpush1.bf16.msra.mxu0 %v328
    %454 = vmatprep.subr.bf16.mxu0 %v325
    %455 = vmatpush1.bf16.msra.mxu0 %v324
    %456 = vmatprep.subr.bf16.mxu0 %v321
    %457 = vmatpush1.bf16.msra.mxu0 %v320
    %458 = vmatprep.subr.bf16.mxu0 %v317
    %459 = vmatpush1.bf16.msra.mxu0 %v316
    %460 = vmatprep.subr.bf16.mxu0 %v377
    %461 = vmatpush2.bf16.msra.mxu0 %v376
    %462 = vmatprep.subr.bf16.mxu0 %v373
    %463 = vmatpush2.bf16.msra.mxu0 %v372
    %464 = vmatprep.subr.bf16.mxu0 %v369
    %465 = vmatpush2.bf16.msra.mxu0 %v368
    %466 = vmatprep.subr.bf16.mxu0 %v365
    %467 = vmatpush2.bf16.msra.mxu0 %v364
    %468 = vmatprep.subr.bf16.mxu0 %v361
    %469 = vmatpush2.bf16.msra.mxu0 %v360
    %470 = vmatprep.subr.bf16.mxu0 %v357
    %471 = vmatpush2.bf16.msra.mxu0 %v356
    %472 = vmatprep.subr.bf16.mxu0 %v353
    %473 = vmatpush2.bf16.msra.mxu0 %v352
    %474 = vmatprep.subr.bf16.mxu0 %v349
    %475 = vmatpush2.bf16.msra.mxu0 %v348
    %476 = vmatprep.mubr.bf16.mxu0 %v121
    %477 = vmatmul.mubr.bf16.gmra.mxu0 %v120
    %v478 = vpop.f32.mrf.mxu0
    %v479 = vadd.f32 0.0, %v478
    %v480 = vpop.f32.mrf.mxu0
    %v481 = vadd.f32 0.0, %v480
    %v482 = vpop.f32.mrf.mxu0
    %v483 = vadd.f32 0.0, %v482
    %v484 = vpop.f32.mrf.mxu0
    %v485 = vadd.f32 0.0, %v484
    %486 = vdwg.mxu0
    %487 = vmatprep.subr.bf16.mxu0 %v347
    %488 = vmatpush1.bf16.msra.mxu0 %v346
    %489 = vmatprep.subr.bf16.mxu0 %v343
    %490 = vmatpush1.bf16.msra.mxu0 %v342
    %491 = vmatprep.subr.bf16.mxu0 %v339
    %492 = vmatpush1.bf16.msra.mxu0 %v338
    %493 = vmatprep.subr.bf16.mxu0 %v335
    %494 = vmatpush1.bf16.msra.mxu0 %v334
    %495 = vmatprep.subr.bf16.mxu0 %v331
    %496 = vmatpush1.bf16.msra.mxu0 %v330
    %497 = vmatprep.subr.bf16.mxu0 %v327
    %498 = vmatpush1.bf16.msra.mxu0 %v326
    %499 = vmatprep.subr.bf16.mxu0 %v323
    %500 = vmatpush1.bf16.msra.mxu0 %v322
    %501 = vmatprep.subr.bf16.mxu0 %v319
    %502 = vmatpush1.bf16.msra.mxu0 %v318
    %503 = vmatprep.subr.bf16.mxu0 %v379
    %504 = vmatpush2.bf16.msra.mxu0 %v378
    %505 = vmatprep.subr.bf16.mxu0 %v375
    %506 = vmatpush2.bf16.msra.mxu0 %v374
    %507 = vmatprep.subr.bf16.mxu0 %v371
    %508 = vmatpush2.bf16.msra.mxu0 %v370
    %509 = vmatprep.subr.bf16.mxu0 %v367
    %510 = vmatpush2.bf16.msra.mxu0 %v366
    %511 = vmatprep.subr.bf16.mxu0 %v363
    %512 = vmatpush2.bf16.msra.mxu0 %v362
    %513 = vmatprep.subr.bf16.mxu0 %v359
    %514 = vmatpush2.bf16.msra.mxu0 %v358
    %515 = vmatprep.subr.bf16.mxu0 %v355
    %516 = vmatpush2.bf16.msra.mxu0 %v354
    %517 = vmatprep.subr.bf16.mxu0 %v351
    %518 = vmatpush2.bf16.msra.mxu0 %v350
    %519 = vmatprep.mubr.bf16.mxu0 %v121
    %520 = vmatmul.mubr.bf16.gmra.mxu0 %v120
    %v521 = vpop.f32.mrf.mxu0
    %v522 = vadd.f32 0.0, %v521
    %v523 = vpop.f32.mrf.mxu0
    %v524 = vadd.f32 0.0, %v523
    %v525 = vpop.f32.mrf.mxu0
    %v526 = vadd.f32 0.0, %v525
    %v527 = vpop.f32.mrf.mxu0
    %v528 = vadd.f32 0.0, %v527
    %529 = vdwg.mxu0
    %v530 = vadd.f32 %v40, %v479
    %v531 = vadd.f32 %v41, %v481
    %v532 = vadd.f32 %v42, %v522
    %v533 = vadd.f32 %v43, %v524
    %v534 = vadd.f32 %v44, %v483
    %v535 = vadd.f32 %v45, %v485
    %v536 = vadd.f32 %v46, %v526
    %v537 = vadd.f32 %v47, %v528
    %538 = vst [vmem:[#allocation2] sm:$0xff] %v530
    %539 = vst [vmem:[#allocation2 + $0x8] sm:$0xff] %v531
    %540 = vst [vmem:[#allocation2 + $0x10] sm:$0xff] %v532
    %541 = vst [vmem:[#allocation2 + $0x18] sm:$0xff] %v533
    %542 = vst [vmem:[#allocation2 + $0x20] sm:$0xff] %v534
    %543 = vst [vmem:[#allocation2 + $0x28] sm:$0xff] %v535
    %544 = vst [vmem:[#allocation2 + $0x30] sm:$0xff] %v536
    %545 = vst [vmem:[#allocation2 + $0x38] sm:$0xff] %v537
    // Predicated region
    $region22: #{vae_with_classifier_forward.11} parent=1 // pred_check
      %p546 = pneg %p28
    $region23: #{vae_with_classifier_forward.11} parent=1 // pred_check_branch
      %548 = sbr.rel (%p546) target = $region25
    $region24: #{vae_with_classifier_forward.11} parent=1 // pred_region
      %v549 = vld [vmem:[#allocation2] sm:$0xff]
      %v550 = vld [vmem:[#allocation2 + $0x8] sm:$0xff]
      %v551 = vld [vmem:[#allocation2 + $0x10] sm:$0xff]
      %v552 = vld [vmem:[#allocation2 + $0x18] sm:$0xff]
      %v553 = vld [vmem:[#allocation2 + $0x20] sm:$0xff]
      %v554 = vld [vmem:[#allocation2 + $0x28] sm:$0xff]
      %v555 = vld [vmem:[#allocation2 + $0x30] sm:$0xff]
      %v556 = vld [vmem:[#allocation2 + $0x38] sm:$0xff]
      %v557 = vld [vmem:[%s2] sm:$0xf]
      %v559 = vlaneseq
      %v560 = vshrl.u32 %v559, 7
      %v561 = vsub.s32 0, %v560
      %v562 = vrot.slane %v557, %v561
      %v563 = vlaneseq
      %v564 = vshrl.u32 %v563, 7
      %v565 = vsub.s32 1, %v564
      %v566 = vrot.slane %v557, %v565
      %v567 = vlaneseq
      %v568 = vshrl.u32 %v567, 7
      %v569 = vsub.s32 2, %v568
      %v570 = vrot.slane %v557, %v569
      %v571 = vlaneseq
      %v572 = vshrl.u32 %v571, 7
      %v573 = vsub.s32 3, %v572
      %v574 = vrot.slane %v557, %v573
      %v579 = vadd.f32 %v549, %v562
      %v580 = vadd.f32 %v550, %v566
      %v581 = vadd.f32 %v551, %v570
      %v582 = vadd.f32 %v552, %v574
      %v583 = vadd.f32 %v553, %v562
      %v584 = vadd.f32 %v554, %v566
      %v585 = vadd.f32 %v555, %v570
      %v586 = vadd.f32 %v556, %v574
      %v587 = vmax.f32 %v579, 0.0
      %v588 = vmax.f32 %v580, 0.0
      %v589 = vmax.f32 %v581, 0.0
      %v590 = vmax.f32 %v582, 0.0
      %v591 = vmax.f32 %v583, 0.0
      %v592 = vmax.f32 %v584, 0.0
      %v593 = vmax.f32 %v585, 0.0
      %v594 = vmax.f32 %v586, 0.0
      %v595 = vpack.c.bf16 %v591, %v587
      %v596 = vpack.c.bf16 %v592, %v588
      %v597 = vpack.c.bf16 %v593, %v589
      %v598 = vpack.c.bf16 %v594, %v590
      %v603 = vunpack.c.l.b16 %v595
      %v604 = vunpack.c.l.b16 %v596
      %v605 = vunpack.c.l.b16 %v597
      %v606 = vunpack.c.l.b16 %v598
      %v607 = vunpack.c.h.b16 %v595
      %v608 = vunpack.c.h.b16 %v596
      %v609 = vunpack.c.h.b16 %v597
      %v610 = vunpack.c.h.b16 %v598
      %v611 = vpack.c.b16 %v604, %v603
      %v612 = vpack.c.b16 %v606, %v605
      %v613 = vpack.c.b16 %v608, %v607
      %v614 = vpack.c.b16 %v610, %v609
      %619 = vst [vmem:[%s3] sm:$0xff] %v611
      %620 = vst [vmem:[%s3 + $0x8] sm:$0xff] %v612
      %621 = vst [vmem:[%s3 + $0x10] sm:$0xff] %v613
      %622 = vst [vmem:[%s3 + $0x18] sm:$0xff] %v614
    $region25: #{vae_with_classifier_forward.11} parent=1 // pred_fallthru
      _
    // Predicated region
    $region26: #{vae_with_classifier_forward.11} parent=1 // pred_check
      _
    $region27: #{vae_with_classifier_forward.11} parent=1 // pred_check_branch
      %624 = sbr.rel (0) target = $region29
    $region28: #{vae_with_classifier_forward.11} parent=1 // pred_region
      _
    $region29: #{vae_with_classifier_forward.11} parent=1 // pred_fallthru
      _
    // Predicated region
    $region30: #{vae_with_classifier_forward.11} parent=1 // pred_check
      _
    $region31: #{vae_with_classifier_forward.11} parent=1 // pred_check_branch
      %626 = sbr.rel (0) target = $region33
    $region32: #{vae_with_classifier_forward.11} parent=1 // pred_region
      _
    $region33: #{vae_with_classifier_forward.11} parent=1 // pred_fallthru
      _
    %627 = vsyncpa [#allocation4], 1

// kernel: vae_with_classifier_forward.13
$region0: #{vae_with_classifier_forward.13}
  #allocation0 [shape = 'u32[]', space=smem, size = 0x4, offset = 0x4, fixed_abs, tag = 'smem constant byte address 0x4 - core index']
  #allocation1 [shape = 'u32[144,128]{1,0:T(1,128)}', space=vmem, size = 0x12000, scoped, tag = 'internal scratch']
  #allocation2 [shape = 'f32[16,256]{1,0:T(8,128)}', space=vmem, size = 0x4000, scoped, tag = 'scratch operand']
  %s0 = inlined_call_operand.vmem [shape: bf16[16,384], index: 0, kind: input, shape index: {}]
  %s1 = inlined_call_operand.vmem [shape: bf16[384,256], index: 1, kind: input, shape index: {}]
  %s2 = inlined_call_operand.vmem [shape: f32[1,256], index: 2, kind: input, shape index: {}]
  %s3 = inlined_call_operand.vmem [shape: bf16[16,256], index: 3, kind: output, shape index: {}]
  %s4 = sld [smem:[#allocation0]]
  $region30: #{vae_with_classifier_forward.13} parent=0
    _
  %s6 = ssub.s32 1, %s4
  %s7 = scalar_select 0, %s6, %s4
  // Predicated region
  $region2: #{vae_with_classifier_forward.13} parent=0 // pred_check
    _
  $region3: #{vae_with_classifier_forward.13} parent=0 // pred_check_branch
    %9 = sbr.rel (0) target = $region5
  $region4: #{vae_with_classifier_forward.13} parent=0 // pred_region
    _
  $region5: #{vae_with_classifier_forward.13} parent=0 // pred_fallthru
    _
  // Predicated region
  $region6: #{vae_with_classifier_forward.13} parent=0 // pred_check
    _
  $region7: #{vae_with_classifier_forward.13} parent=0 // pred_check_branch
    %11 = sbr.rel (0) target = $region9
  $region8: #{vae_with_classifier_forward.13} parent=0 // pred_region
    _
  $region9: #{vae_with_classifier_forward.13} parent=0 // pred_fallthru
    _
  // Predicated region
  $region10: #{vae_with_classifier_forward.13} parent=0 // pred_check
    _
  $region11: #{vae_with_classifier_forward.13} parent=0 // pred_check_branch
    %13 = sbr.rel (0) target = $region13
  $region12: #{vae_with_classifier_forward.13} parent=0 // pred_region
    _
  $region13: #{vae_with_classifier_forward.13} parent=0 // pred_fallthru
    _
  %p15 = scmp.eq.s32.totalorder 0, 0
  // Predicated region
  $region14: #{vae_with_classifier_forward.13} parent=0 // pred_check
    %p16 = pneg %p15
  $region15: #{vae_with_classifier_forward.13} parent=0 // pred_check_branch
    %18 = sbr.rel (%p16) target = $region17
  $region16: #{vae_with_classifier_forward.13} parent=0 // pred_region
    %19 = vst [vmem:[#allocation2] sm:$0xff] 0.0
    %20 = vst [vmem:[#allocation2 + $0x8] sm:$0xff] 0.0
    %21 = vst [vmem:[#allocation2 + $0x10] sm:$0xff] 0.0
    %22 = vst [vmem:[#allocation2 + $0x18] sm:$0xff] 0.0
  $region17: #{vae_with_classifier_forward.13} parent=0 // pred_fallthru
    _
  %v23 = vld [vmem:[#allocation2] sm:$0xff]
  %v24 = vld [vmem:[#allocation2 + $0x8] sm:$0xff]
  %v25 = vld [vmem:[#allocation2 + $0x10] sm:$0xff]
  %v26 = vld [vmem:[#allocation2 + $0x18] sm:$0xff]
  %v27 = vld [vmem:[%s0] sm:$0xff]
  %v28 = vld [vmem:[%s0 + $0x8] sm:$0xf]
  %v29 = vld [vmem:[%s0 + $0xc] sm:$0xff]
  %v30 = vld [vmem:[%s0 + $0x14] sm:$0xf]
  %v31 = vld [vmem:[%s1] sm:$0xff]
  %v32 = vld [vmem:[%s1 + $0x8] sm:$0xff]
  %v33 = vld [vmem:[%s1 + $0x10] sm:$0xff]
  %v34 = vld [vmem:[%s1 + $0x18] sm:$0xff]
  %v35 = vld [vmem:[%s1 + $0x20] sm:$0xff]
  %v36 = vld [vmem:[%s1 + $0x28] sm:$0xff]
  %v37 = vld [vmem:[%s1 + $0x30] sm:$0xff]
  %v38 = vld [vmem:[%s1 + $0x38] sm:$0xff]
  %v39 = vld [vmem:[%s1 + $0x40] sm:$0xff]
  %v40 = vld [vmem:[%s1 + $0x48] sm:$0xff]
  %v41 = vld [vmem:[%s1 + $0x50] sm:$0xff]
  %v42 = vld [vmem:[%s1 + $0x58] sm:$0xff]
  %v43 = vld [vmem:[%s1 + $0x60] sm:$0xff]
  %v44 = vld [vmem:[%s1 + $0x68] sm:$0xff]
  %v45 = vld [vmem:[%s1 + $0x70] sm:$0xff]
  %v46 = vld [vmem:[%s1 + $0x78] sm:$0xff]
  %v47 = vld [vmem:[%s1 + $0x80] sm:$0xff]
  %v48 = vld [vmem:[%s1 + $0x88] sm:$0xff]
  %v49 = vld [vmem:[%s1 + $0x90] sm:$0xff]
  %v50 = vld [vmem:[%s1 + $0x98] sm:$0xff]
  %v51 = vld [vmem:[%s1 + $0xa0] sm:$0xff]
  %v52 = vld [vmem:[%s1 + $0xa8] sm:$0xff]
  %v53 = vld [vmem:[%s1 + $0xb0] sm:$0xff]
  %v54 = vld [vmem:[%s1 + $0xb8] sm:$0xff]
  %v55 = vld [vmem:[%s1 + $0xc0] sm:$0xff]
  %v56 = vld [vmem:[%s1 + $0xc8] sm:$0xff]
  %v57 = vld [vmem:[%s1 + $0xd0] sm:$0xff]
  %v58 = vld [vmem:[%s1 + $0xd8] sm:$0xff]
  %v59 = vld [vmem:[%s1 + $0xe0] sm:$0xff]
  %v60 = vld [vmem:[%s1 + $0xe8] sm:$0xff]
  %v61 = vld [vmem:[%s1 + $0xf0] sm:$0xff]
  %v62 = vld [vmem:[%s1 + $0xf8] sm:$0xff]
  %v63 = vld [vmem:[%s1 + $0x100] sm:$0xff]
  %v64 = vld [vmem:[%s1 + $0x108] sm:$0xff]
  %v65 = vld [vmem:[%s1 + $0x110] sm:$0xff]
  %v66 = vld [vmem:[%s1 + $0x118] sm:$0xff]
  %v67 = vld [vmem:[%s1 + $0x120] sm:$0xff]
  %v68 = vld [vmem:[%s1 + $0x128] sm:$0xff]
  %v69 = vld [vmem:[%s1 + $0x130] sm:$0xff]
  %v70 = vld [vmem:[%s1 + $0x138] sm:$0xff]
  %v71 = vld [vmem:[%s1 + $0x140] sm:$0xff]
  %v72 = vld [vmem:[%s1 + $0x148] sm:$0xff]
  %v73 = vld [vmem:[%s1 + $0x150] sm:$0xff]
  %v74 = vld [vmem:[%s1 + $0x158] sm:$0xff]
  %v75 = vld [vmem:[%s1 + $0x160] sm:$0xff]
  %v76 = vld [vmem:[%s1 + $0x168] sm:$0xff]
  %v77 = vld [vmem:[%s1 + $0x170] sm:$0xff]
  %v78 = vld [vmem:[%s1 + $0x178] sm:$0xff]
  %v83 = vunpack.c.l.b16 %v27
  %v84 = vunpack.c.h.b16 %v27
  %v85 = vunpack.c.l.b16 %v28
  %v86 = vunpack.c.l.b16 %v29
  %v87 = vunpack.c.h.b16 %v29
  %v88 = vunpack.c.l.b16 %v30
  %v89 = vpack.c.b16 %v86, %v83
  %v90 = vpack.c.b16 %v87, %v84
  %v91 = vpack.c.b16 %v88, %v85
  %v143 = vunpack.c.l.b16 %v31
  %v144 = vunpack.c.h.b16 %v31
  %v145 = vunpack.c.l.b16 %v32
  %v146 = vunpack.c.h.b16 %v32
  %v147 = vunpack.c.l.b16 %v33
  %v148 = vunpack.c.h.b16 %v33
  %v149 = vunpack.c.l.b16 %v34
  %v150 = vunpack.c.h.b16 %v34
  %v151 = vunpack.c.l.b16 %v35
  %v152 = vunpack.c.h.b16 %v35
  %v153 = vunpack.c.l.b16 %v36
  %v154 = vunpack.c.h.b16 %v36
  %v155 = vunpack.c.l.b16 %v37
  %v156 = vunpack.c.h.b16 %v37
  %v157 = vunpack.c.l.b16 %v38
  %v158 = vunpack.c.h.b16 %v38
  %v159 = vunpack.c.l.b16 %v39
  %v160 = vunpack.c.h.b16 %v39
  %v161 = vunpack.c.l.b16 %v40
  %v162 = vunpack.c.h.b16 %v40
  %v163 = vunpack.c.l.b16 %v41
  %v164 = vunpack.c.h.b16 %v41
  %v165 = vunpack.c.l.b16 %v42
  %v166 = vunpack.c.h.b16 %v42
  %v167 = vunpack.c.l.b16 %v43
  %v168 = vunpack.c.h.b16 %v43
  %v169 = vunpack.c.l.b16 %v44
  %v170 = vunpack.c.h.b16 %v44
  %v171 = vunpack.c.l.b16 %v45
  %v172 = vunpack.c.h.b16 %v45
  %v173 = vunpack.c.l.b16 %v46
  %v174 = vunpack.c.h.b16 %v46
  %v175 = vunpack.c.l.b16 %v47
  %v176 = vunpack.c.h.b16 %v47
  %v177 = vunpack.c.l.b16 %v48
  %v178 = vunpack.c.h.b16 %v48
  %v179 = vunpack.c.l.b16 %v49
  %v180 = vunpack.c.h.b16 %v49
  %v181 = vunpack.c.l.b16 %v50
  %v182 = vunpack.c.h.b16 %v50
  %v183 = vunpack.c.l.b16 %v51
  %v184 = vunpack.c.h.b16 %v51
  %v185 = vunpack.c.l.b16 %v52
  %v186 = vunpack.c.h.b16 %v52
  %v187 = vunpack.c.l.b16 %v53
  %v188 = vunpack.c.h.b16 %v53
  %v189 = vunpack.c.l.b16 %v54
  %v190 = vunpack.c.h.b16 %v54
  %v191 = vunpack.c.l.b16 %v55
  %v192 = vunpack.c.h.b16 %v55
  %v193 = vunpack.c.l.b16 %v56
  %v194 = vunpack.c.h.b16 %v56
  %v195 = vunpack.c.l.b16 %v57
  %v196 = vunpack.c.h.b16 %v57
  %v197 = vunpack.c.l.b16 %v58
  %v198 = vunpack.c.h.b16 %v58
  %v199 = vunpack.c.l.b16 %v59
  %v200 = vunpack.c.h.b16 %v59
  %v201 = vunpack.c.l.b16 %v60
  %v202 = vunpack.c.h.b16 %v60
  %v203 = vunpack.c.l.b16 %v61
  %v204 = vunpack.c.h.b16 %v61
  %v205 = vunpack.c.l.b16 %v62
  %v206 = vunpack.c.h.b16 %v62
  %v207 = vunpack.c.l.b16 %v63
  %v208 = vunpack.c.h.b16 %v63
  %v209 = vunpack.c.l.b16 %v64
  %v210 = vunpack.c.h.b16 %v64
  %v211 = vunpack.c.l.b16 %v65
  %v212 = vunpack.c.h.b16 %v65
  %v213 = vunpack.c.l.b16 %v66
  %v214 = vunpack.c.h.b16 %v66
  %v215 = vunpack.c.l.b16 %v67
  %v216 = vunpack.c.h.b16 %v67
  %v217 = vunpack.c.l.b16 %v68
  %v218 = vunpack.c.h.b16 %v68
  %v219 = vunpack.c.l.b16 %v69
  %v220 = vunpack.c.h.b16 %v69
  %v221 = vunpack.c.l.b16 %v70
  %v222 = vunpack.c.h.b16 %v70
  %v223 = vunpack.c.l.b16 %v71
  %v224 = vunpack.c.h.b16 %v71
  %v225 = vunpack.c.l.b16 %v72
  %v226 = vunpack.c.h.b16 %v72
  %v227 = vunpack.c.l.b16 %v73
  %v228 = vunpack.c.h.b16 %v73
  %v229 = vunpack.c.l.b16 %v74
  %v230 = vunpack.c.h.b16 %v74
  %v231 = vunpack.c.l.b16 %v75
  %v232 = vunpack.c.h.b16 %v75
  %v233 = vunpack.c.l.b16 %v76
  %v234 = vunpack.c.h.b16 %v76
  %v235 = vunpack.c.l.b16 %v77
  %v236 = vunpack.c.h.b16 %v77
  %v237 = vunpack.c.l.b16 %v78
  %v238 = vunpack.c.h.b16 %v78
  %v239 = vpack.c.b16 %v145, %v143
  %v240 = vpack.c.b16 %v146, %v144
  %v241 = vpack.c.b16 %v149, %v147
  %v242 = vpack.c.b16 %v150, %v148
  %v243 = vpack.c.b16 %v153, %v151
  %v244 = vpack.c.b16 %v154, %v152
  %v245 = vpack.c.b16 %v157, %v155
  %v246 = vpack.c.b16 %v158, %v156
  %v247 = vpack.c.b16 %v161, %v159
  %v248 = vpack.c.b16 %v162, %v160
  %v249 = vpack.c.b16 %v165, %v163
  %v250 = vpack.c.b16 %v166, %v164
  %v251 = vpack.c.b16 %v169, %v167
  %v252 = vpack.c.b16 %v170, %v168
  %v253 = vpack.c.b16 %v173, %v171
  %v254 = vpack.c.b16 %v174, %v172
  %v255 = vpack.c.b16 %v177, %v175
  %v256 = vpack.c.b16 %v178, %v176
  %v257 = vpack.c.b16 %v181, %v179
  %v258 = vpack.c.b16 %v182, %v180
  %v259 = vpack.c.b16 %v185, %v183
  %v260 = vpack.c.b16 %v186, %v184
  %v261 = vpack.c.b16 %v189, %v187
  %v262 = vpack.c.b16 %v190, %v188
  %v263 = vpack.c.b16 %v193, %v191
  %v264 = vpack.c.b16 %v194, %v192
  %v265 = vpack.c.b16 %v197, %v195
  %v266 = vpack.c.b16 %v198, %v196
  %v267 = vpack.c.b16 %v201, %v199
  %v268 = vpack.c.b16 %v202, %v200
  %v269 = vpack.c.b16 %v205, %v203
  %v270 = vpack.c.b16 %v206, %v204
  %v271 = vpack.c.b16 %v209, %v207
  %v272 = vpack.c.b16 %v210, %v208
  %v273 = vpack.c.b16 %v213, %v211
  %v274 = vpack.c.b16 %v214, %v212
  %v275 = vpack.c.b16 %v217, %v215
  %v276 = vpack.c.b16 %v218, %v216
  %v277 = vpack.c.b16 %v221, %v219
  %v278 = vpack.c.b16 %v222, %v220
  %v279 = vpack.c.b16 %v225, %v223
  %v280 = vpack.c.b16 %v226, %v224
  %v281 = vpack.c.b16 %v229, %v227
  %v282 = vpack.c.b16 %v230, %v228
  %v283 = vpack.c.b16 %v233, %v231
  %v284 = vpack.c.b16 %v234, %v232
  %v285 = vpack.c.b16 %v237, %v235
  %v286 = vpack.c.b16 %v238, %v236
  %335 = vmatprep.subr.bf16.mxu0 %v254
  %336 = vmatpush1.bf16.msra.mxu0 %v253
  %337 = vmatprep.subr.bf16.mxu0 %v252
  %338 = vmatpush1.bf16.msra.mxu0 %v251
  %339 = vmatprep.subr.bf16.mxu0 %v250
  %340 = vmatpush1.bf16.msra.mxu0 %v249
  %341 = vmatprep.subr.bf16.mxu0 %v248
  %342 = vmatpush1.bf16.msra.mxu0 %v247
  %343 = vmatprep.subr.bf16.mxu0 %v246
  %344 = vmatpush1.bf16.msra.mxu0 %v245
  %345 = vmatprep.subr.bf16.mxu0 %v244
  %346 = vmatpush1.bf16.msra.mxu0 %v243
  %347 = vmatprep.subr.bf16.mxu0 %v242
  %348 = vmatpush1.bf16.msra.mxu0 %v241
  %349 = vmatprep.subr.bf16.mxu0 %v240
  %350 = vmatpush1.bf16.msra.mxu0 %v239
  %351 = vmatprep.subr.bf16.mxu0 %v270
  %352 = vmatpush2.bf16.msra.mxu0 %v269
  %353 = vmatprep.subr.bf16.mxu0 %v268
  %354 = vmatpush2.bf16.msra.mxu0 %v267
  %355 = vmatprep.subr.bf16.mxu0 %v266
  %356 = vmatpush2.bf16.msra.mxu0 %v265
  %357 = vmatprep.subr.bf16.mxu0 %v264
  %358 = vmatpush2.bf16.msra.mxu0 %v263
  %359 = vmatprep.subr.bf16.mxu0 %v262
  %360 = vmatpush2.bf16.msra.mxu0 %v261
  %361 = vmatprep.subr.bf16.mxu0 %v260
  %362 = vmatpush2.bf16.msra.mxu0 %v259
  %363 = vmatprep.subr.bf16.mxu0 %v258
  %364 = vmatpush2.bf16.msra.mxu0 %v257
  %365 = vmatprep.subr.bf16.mxu0 %v256
  %366 = vmatpush2.bf16.msra.mxu0 %v255
  %367 = vmatprep.mubr.bf16.mxu0 %v90
  %368 = vmatmul.mubr.bf16.gmra.mxu0 %v89
  %v369 = vpop.f32.mrf.mxu0
  %v370 = vadd.f32 0.0, %v369
  %v371 = vpop.f32.mrf.mxu0
  %v372 = vadd.f32 0.0, %v371
  %v373 = vpop.f32.mrf.mxu0
  %v374 = vadd.f32 0.0, %v373
  %v375 = vpop.f32.mrf.mxu0
  %v376 = vadd.f32 0.0, %v375
  %377 = vdwg.mxu0
  %378 = vmatprep.subr.bf16.mxu0 %v286
  %379 = vmatpush1.bf16.msra.mxu0 %v285
  %380 = vmatprep.subr.bf16.mxu0 %v284
  %381 = vmatpush1.bf16.msra.mxu0 %v283
  %382 = vmatprep.subr.bf16.mxu0 %v282
  %383 = vmatpush1.bf16.msra.mxu0 %v281
  %384 = vmatprep.subr.bf16.mxu0 %v280
  %385 = vmatpush1.bf16.msra.mxu0 %v279
  %386 = vmatprep.subr.bf16.mxu0 %v278
  %387 = vmatpush1.bf16.msra.mxu0 %v277
  %388 = vmatprep.subr.bf16.mxu0 %v276
  %389 = vmatpush1.bf16.msra.mxu0 %v275
  %390 = vmatprep.subr.bf16.mxu0 %v274
  %391 = vmatpush1.bf16.msra.mxu0 %v273
  %392 = vmatprep.subr.bf16.mxu0 %v272
  %393 = vmatpush1.bf16.msra.mxu0 %v271
  %394 = vmatprep.subr.bf16.mxu0 0
  %395 = vmatpush2.bf16.msra.mxu0 0
  %396 = vmatprep.subr.bf16.mxu0 0
  %397 = vmatpush2.bf16.msra.mxu0 0
  %398 = vmatprep.subr.bf16.mxu0 0
  %399 = vmatpush2.bf16.msra.mxu0 0
  %400 = vmatprep.subr.bf16.mxu0 0
  %401 = vmatpush2.bf16.msra.mxu0 0
  %402 = vmatprep.subr.bf16.mxu0 0
  %403 = vmatpush2.bf16.msra.mxu0 0
  %404 = vmatprep.subr.bf16.mxu0 0
  %405 = vmatpush2.bf16.msra.mxu0 0
  %406 = vmatprep.subr.bf16.mxu0 0
  %407 = vmatpush2.bf16.msra.mxu0 0
  %408 = vmatprep.subr.bf16.mxu0 0
  %409 = vmatpush2.bf16.msra.mxu0 0
  %410 = vmatprep.mubr.bf16.mxu0 0
  %411 = vmatmul.mubr.bf16.gmra.mxu0 %v91
  %v412 = vpop.f32.mrf.mxu0
  %v413 = vadd.f32 %v370, %v412
  %v414 = vpop.f32.mrf.mxu0
  %v415 = vadd.f32 %v372, %v414
  %v416 = vpop.f32.mrf.mxu0
  %v417 = vadd.f32 %v374, %v416
  %v418 = vpop.f32.mrf.mxu0
  %v419 = vadd.f32 %v376, %v418
  %420 = vdwg.mxu0
  %v421 = vadd.f32 %v23, %v413
  %v422 = vadd.f32 %v24, %v415
  %v423 = vadd.f32 %v25, %v417
  %v424 = vadd.f32 %v26, %v419
  %425 = vst [vmem:[#allocation2] sm:$0xff] %v421
  %426 = vst [vmem:[#allocation2 + $0x8] sm:$0xff] %v422
  %427 = vst [vmem:[#allocation2 + $0x10] sm:$0xff] %v423
  %428 = vst [vmem:[#allocation2 + $0x18] sm:$0xff] %v424
  // Predicated region
  $region18: #{vae_with_classifier_forward.13} parent=0 // pred_check
    %p429 = pneg %p15
  $region19: #{vae_with_classifier_forward.13} parent=0 // pred_check_branch
    %431 = sbr.rel (%p429) target = $region21
  $region20: #{vae_with_classifier_forward.13} parent=0 // pred_region
    %v432 = vld [vmem:[#allocation2] sm:$0xff]
    %v433 = vld [vmem:[#allocation2 + $0x8] sm:$0xff]
    %v434 = vld [vmem:[#allocation2 + $0x10] sm:$0xff]
    %v435 = vld [vmem:[#allocation2 + $0x18] sm:$0xff]
    %v436 = vld [vmem:[%s2] sm:$0x3]
    %v438 = vlaneseq
    %v439 = vshrl.u32 %v438, 7
    %v440 = vsub.s32 0, %v439
    %v441 = vrot.slane %v436, %v440
    %v442 = vlaneseq
    %v443 = vshrl.u32 %v442, 7
    %v444 = vsub.s32 1, %v443
    %v445 = vrot.slane %v436, %v444
    %v448 = vadd.f32 %v432, %v441
    %v449 = vadd.f32 %v433, %v445
    %v450 = vadd.f32 %v434, %v441
    %v451 = vadd.f32 %v435, %v445
    %v452 = vmax.f32 %v448, 0.0
    %v453 = vmax.f32 %v449, 0.0
    %v454 = vmax.f32 %v450, 0.0
    %v455 = vmax.f32 %v451, 0.0
    %v456 = vpack.c.bf16 %v454, %v452
    %v457 = vpack.c.bf16 %v455, %v453
    %v460 = vunpack.c.l.b16 %v456
    %v461 = vunpack.c.l.b16 %v457
    %v462 = vunpack.c.h.b16 %v456
    %v463 = vunpack.c.h.b16 %v457
    %v464 = vpack.c.b16 %v461, %v460
    %v465 = vpack.c.b16 %v463, %v462
    %468 = vst [vmem:[%s3] sm:$0xff] %v464
    %469 = vst [vmem:[%s3 + $0x8] sm:$0xff] %v465
  $region21: #{vae_with_classifier_forward.13} parent=0 // pred_fallthru
    _
  // Predicated region
  $region22: #{vae_with_classifier_forward.13} parent=0 // pred_check
    _
  $region23: #{vae_with_classifier_forward.13} parent=0 // pred_check_branch
    %471 = sbr.rel (0) target = $region25
  $region24: #{vae_with_classifier_forward.13} parent=0 // pred_region
    _
  $region25: #{vae_with_classifier_forward.13} parent=0 // pred_fallthru
    _
  // Predicated region
  $region26: #{vae_with_classifier_forward.13} parent=0 // pred_check
    _
  $region27: #{vae_with_classifier_forward.13} parent=0 // pred_check_branch
    %473 = sbr.rel (0) target = $region29
  $region28: #{vae_with_classifier_forward.13} parent=0 // pred_region
    _
  $region29: #{vae_with_classifier_forward.13} parent=0 // pred_fallthru
    _

// kernel: vae_with_classifier_forward.12
$region0: #{vae_with_classifier_forward.12}
  #allocation0 [shape = 'u32[]', space=smem, size = 0x4, offset = 0x4, fixed_abs, tag = 'smem constant byte address 0x4 - core index']
  #allocation1 [shape = 'u32[144,128]{1,0:T(1,128)}', space=vmem, size = 0x12000, scoped, tag = 'internal scratch']
  #allocation2 [shape = 'f32[16,384]{1,0:T(8,128)}', space=vmem, size = 0x6000, scoped, tag = 'scratch operand']
  %s0 = inlined_call_operand.vmem [shape: bf16[16,512], index: 0, kind: input, shape index: {}]
  %s1 = inlined_call_operand.hbm [shape: bf16[512,384], index: 1, kind: input, shape index: {}]
  %s2 = inlined_call_operand.vmem [shape: f32[1,384], index: 2, kind: input, shape index: {}]
  %s3 = inlined_call_operand.vmem [shape: bf16[16,384], index: 3, kind: output, shape index: {}]
  %s4 = sld [smem:[#allocation0]]
  $region34: #{vae_with_classifier_forward.12} parent=0
    _
  %s6 = ssub.s32 1, %s4
  %s7 = scalar_select 0, %s6, %s4
  $region1: #{vae_with_classifier_forward.12} parent=0
    #allocation3 [shape = 'u8[393216]{0}', space=vmem, size = 0x60000, scoped, tag = 'input window, operand 1, single buffered']
    #allocation4 [shape = 's32[1]{0}', space=sflag, size = 0x4, scoped, tag = 'scoped memory for vae_with_classifier_forward.12']
    %8 = vsyncpa [#allocation4], 0
    // Predicated region
    $region2: #{vae_with_classifier_forward.12} parent=1 // pred_check
      _
    $region3: #{vae_with_classifier_forward.12} parent=1 // pred_check_branch
      %10 = sbr.rel (0) target = $region5
    $region4: #{vae_with_classifier_forward.12} parent=1 // pred_region
      _
    $region5: #{vae_with_classifier_forward.12} parent=1 // pred_fallthru
      _
    // Predicated region
    $region6: #{vae_with_classifier_forward.12} parent=1 // pred_check
      _
    $region7: #{vae_with_classifier_forward.12} parent=1 // pred_check_branch
      %12 = sbr.rel (0) target = $region9
    $region8: #{vae_with_classifier_forward.12} parent=1 // pred_region
      %s14 = ssub.s32 12288, 12288
      %15 = vsyncadd [#allocation4], %s14
      %s16 = sshll.u32 [#allocation3], 4
      %s17 = int_to_ptr.vmem [resolvable:$true] %s16
      %22 = dma.hbm_to_vmem [thread:$0]  %s1, 12288, %s17, [#allocation4], 192, 192, 12
    $region9: #{vae_with_classifier_forward.12} parent=1 // pred_fallthru
      _
    // Predicated region
    $region10: #{vae_with_classifier_forward.12} parent=1 // pred_check
      _
    $region11: #{vae_with_classifier_forward.12} parent=1 // pred_check_branch
      %24 = sbr.rel (0) target = $region13
    $region12: #{vae_with_classifier_forward.12} parent=1 // pred_region
      _
    $region13: #{vae_with_classifier_forward.12} parent=1 // pred_fallthru
      _
    // Predicated region
    $region14: #{vae_with_classifier_forward.12} parent=1 // pred_check
      _
    $region15: #{vae_with_classifier_forward.12} parent=1 // pred_check_branch
      %26 = sbr.rel (0) target = $region17
    $region16: #{vae_with_classifier_forward.12} parent=1 // pred_region
      %27 = dma.done [#allocation4], 12288
    $region17: #{vae_with_classifier_forward.12} parent=1 // pred_fallthru
      _
    %p29 = scmp.eq.s32.totalorder 0, 0
    // Predicated region
    $region18: #{vae_with_classifier_forward.12} parent=1 // pred_check
      %p30 = pneg %p29
    $region19: #{vae_with_classifier_forward.12} parent=1 // pred_check_branch
      %32 = sbr.rel (%p30) target = $region21
    $region20: #{vae_with_classifier_forward.12} parent=1 // pred_region
      %33 = vst [vmem:[#allocation2] sm:$0xff] 0.0
      %34 = vst [vmem:[#allocation2 + $0x8] sm:$0xff] 0.0
      %35 = vst [vmem:[#allocation2 + $0x10] sm:$0xff] 0.0
      %36 = vst [vmem:[#allocation2 + $0x18] sm:$0xff] 0.0
      %37 = vst [vmem:[#allocation2 + $0x20] sm:$0xff] 0.0
      %38 = vst [vmem:[#allocation2 + $0x28] sm:$0xff] 0.0
    $region21: #{vae_with_classifier_forward.12} parent=1 // pred_fallthru
      _
    %v39 = vld [vmem:[#allocation2] sm:$0xff]
    %v40 = vld [vmem:[#allocation2 + $0x8] sm:$0xff]
    %v41 = vld [vmem:[#allocation2 + $0x10] sm:$0xff]
    %v42 = vld [vmem:[#allocation2 + $0x18] sm:$0xff]
    %v43 = vld [vmem:[#allocation2 + $0x20] sm:$0xff]
    %v44 = vld [vmem:[#allocation2 + $0x28] sm:$0xff]
    %v45 = vld [vmem:[%s0] sm:$0xff]
    %v46 = vld [vmem:[%s0 + $0x8] sm:$0xff]
    %v47 = vld [vmem:[%s0 + $0x10] sm:$0xff]
    %v48 = vld [vmem:[%s0 + $0x18] sm:$0xff]
    %v49 = vld [vmem:[#allocation3] sm:$0xff]
    %v50 = vld [vmem:[#allocation3 + $0x8] sm:$0xf]
    %v51 = vld [vmem:[#allocation3 + $0xc] sm:$0xff]
    %v52 = vld [vmem:[#allocation3 + $0x14] sm:$0xf]
    %v53 = vld [vmem:[#allocation3 + $0x18] sm:$0xff]
    %v54 = vld [vmem:[#allocation3 + $0x20] sm:$0xf]
    %v55 = vld [vmem:[#allocation3 + $0x24] sm:$0xff]
    %v56 = vld [vmem:[#allocation3 + $0x2c] sm:$0xf]
    %v57 = vld [vmem:[#allocation3 + $0x30] sm:$0xff]
    %v58 = vld [vmem:[#allocation3 + $0x38] sm:$0xf]
    %v59 = vld [vmem:[#allocation3 + $0x3c] sm:$0xff]
    %v60 = vld [vmem:[#allocation3 + $0x44] sm:$0xf]
    %v61 = vld [vmem:[#allocation3 + $0x48] sm:$0xff]
    %v62 = vld [vmem:[#allocation3 + $0x50] sm:$0xf]
    %v63 = vld [vmem:[#allocation3 + $0x54] sm:$0xff]
    %v64 = vld [vmem:[#allocation3 + $0x5c] sm:$0xf]
    %v65 = vld [vmem:[#allocation3 + $0x60] sm:$0xff]
    %v66 = vld [vmem:[#allocation3 + $0x68] sm:$0xf]
    %v67 = vld [vmem:[#allocation3 + $0x6c] sm:$0xff]
    %v68 = vld [vmem:[#allocation3 + $0x74] sm:$0xf]
    %v69 = vld [vmem:[#allocation3 + $0x78] sm:$0xff]
    %v70 = vld [vmem:[#allocation3 + $0x80] sm:$0xf]
    %v71 = vld [vmem:[#allocation3 + $0x84] sm:$0xff]
    %v72 = vld [vmem:[#allocation3 + $0x8c] sm:$0xf]
    %v73 = vld [vmem:[#allocation3 + $0x90] sm:$0xff]
    %v74 = vld [vmem:[#allocation3 + $0x98] sm:$0xf]
    %v75 = vld [vmem:[#allocation3 + $0x9c] sm:$0xff]
    %v76 = vld [vmem:[#allocation3 + $0xa4] sm:$0xf]
    %v77 = vld [vmem:[#allocation3 + $0xa8] sm:$0xff]
    %v78 = vld [vmem:[#allocation3 + $0xb0] sm:$0xf]
    %v79 = vld [vmem:[#allocation3 + $0xb4] sm:$0xff]
    %v80 = vld [vmem:[#allocation3 + $0xbc] sm:$0xf]
    %v81 = vld [vmem:[#allocation3 + $0xc0] sm:$0xff]
    %v82 = vld [vmem:[#allocation3 + $0xc8] sm:$0xf]
    %v83 = vld [vmem:[#allocation3 + $0xcc] sm:$0xff]
    %v84 = vld [vmem:[#allocation3 + $0xd4] sm:$0xf]
    %v85 = vld [vmem:[#allocation3 + $0xd8] sm:$0xff]
    %v86 = vld [vmem:[#allocation3 + $0xe0] sm:$0xf]
    %v87 = vld [vmem:[#allocation3 + $0xe4] sm:$0xff]
    %v88 = vld [vmem:[#allocation3 + $0xec] sm:$0xf]
    %v89 = vld [vmem:[#allocation3 + $0xf0] sm:$0xff]
    %v90 = vld [vmem:[#allocation3 + $0xf8] sm:$0xf]
    %v91 = vld [vmem:[#allocation3 + $0xfc] sm:$0xff]
    %v92 = vld [vmem:[#allocation3 + $0x104] sm:$0xf]
    %v93 = vld [vmem:[#allocation3 + $0x108] sm:$0xff]
    %v94 = vld [vmem:[#allocation3 + $0x110] sm:$0xf]
    %v95 = vld [vmem:[#allocation3 + $0x114] sm:$0xff]
    %v96 = vld [vmem:[#allocation3 + $0x11c] sm:$0xf]
    %v97 = vld [vmem:[#allocation3 + $0x120] sm:$0xff]
    %v98 = vld [vmem:[#allocation3 + $0x128] sm:$0xf]
    %v99 = vld [vmem:[#allocation3 + $0x12c] sm:$0xff]
    %v100 = vld [vmem:[#allocation3 + $0x134] sm:$0xf]
    %v101 = vld [vmem:[#allocation3 + $0x138] sm:$0xff]
    %v102 = vld [vmem:[#allocation3 + $0x140] sm:$0xf]
    %v103 = vld [vmem:[#allocation3 + $0x144] sm:$0xff]
    %v104 = vld [vmem:[#allocation3 + $0x14c] sm:$0xf]
    %v105 = vld [vmem:[#allocation3 + $0x150] sm:$0xff]
    %v106 = vld [vmem:[#allocation3 + $0x158] sm:$0xf]
    %v107 = vld [vmem:[#allocation3 + $0x15c] sm:$0xff]
    %v108 = vld [vmem:[#allocation3 + $0x164] sm:$0xf]
    %v109 = vld [vmem:[#allocation3 + $0x168] sm:$0xff]
    %v110 = vld [vmem:[#allocation3 + $0x170] sm:$0xf]
    %v111 = vld [vmem:[#allocation3 + $0x174] sm:$0xff]
    %v112 = vld [vmem:[#allocation3 + $0x17c] sm:$0xf]
    %v113 = vld [vmem:[#allocation3 + $0x180] sm:$0xff]
    %v114 = vld [vmem:[#allocation3 + $0x188] sm:$0xf]
    %v115 = vld [vmem:[#allocation3 + $0x18c] sm:$0xff]
    %v116 = vld [vmem:[#allocation3 + $0x194] sm:$0xf]
    %v117 = vld [vmem:[#allocation3 + $0x198] sm:$0xff]
    %v118 = vld [vmem:[#allocation3 + $0x1a0] sm:$0xf]
    %v119 = vld [vmem:[#allocation3 + $0x1a4] sm:$0xff]
    %v120 = vld [vmem:[#allocation3 + $0x1ac] sm:$0xf]
    %v121 = vld [vmem:[#allocation3 + $0x1b0] sm:$0xff]
    %v122 = vld [vmem:[#allocation3 + $0x1b8] sm:$0xf]
    %v123 = vld [vmem:[#allocation3 + $0x1bc] sm:$0xff]
    %v124 = vld [vmem:[#allocation3 + $0x1c4] sm:$0xf]
    %v125 = vld [vmem:[#allocation3 + $0x1c8] sm:$0xff]
    %v126 = vld [vmem:[#allocation3 + $0x1d0] sm:$0xf]
    %v127 = vld [vmem:[#allocation3 + $0x1d4] sm:$0xff]
    %v128 = vld [vmem:[#allocation3 + $0x1dc] sm:$0xf]
    %v129 = vld [vmem:[#allocation3 + $0x1e0] sm:$0xff]
    %v130 = vld [vmem:[#allocation3 + $0x1e8] sm:$0xf]
    %v131 = vld [vmem:[#allocation3 + $0x1ec] sm:$0xff]
    %v132 = vld [vmem:[#allocation3 + $0x1f4] sm:$0xf]
    %v133 = vld [vmem:[#allocation3 + $0x1f8] sm:$0xff]
    %v134 = vld [vmem:[#allocation3 + $0x200] sm:$0xf]
    %v135 = vld [vmem:[#allocation3 + $0x204] sm:$0xff]
    %v136 = vld [vmem:[#allocation3 + $0x20c] sm:$0xf]
    %v137 = vld [vmem:[#allocation3 + $0x210] sm:$0xff]
    %v138 = vld [vmem:[#allocation3 + $0x218] sm:$0xf]
    %v139 = vld [vmem:[#allocation3 + $0x21c] sm:$0xff]
    %v140 = vld [vmem:[#allocation3 + $0x224] sm:$0xf]
    %v141 = vld [vmem:[#allocation3 + $0x228] sm:$0xff]
    %v142 = vld [vmem:[#allocation3 + $0x230] sm:$0xf]
    %v143 = vld [vmem:[#allocation3 + $0x234] sm:$0xff]
    %v144 = vld [vmem:[#allocation3 + $0x23c] sm:$0xf]
    %v145 = vld [vmem:[#allocation3 + $0x240] sm:$0xff]
    %v146 = vld [vmem:[#allocation3 + $0x248] sm:$0xf]
    %v147 = vld [vmem:[#allocation3 + $0x24c] sm:$0xff]
    %v148 = vld [vmem:[#allocation3 + $0x254] sm:$0xf]
    %v149 = vld [vmem:[#allocation3 + $0x258] sm:$0xff]
    %v150 = vld [vmem:[#allocation3 + $0x260] sm:$0xf]
    %v151 = vld [vmem:[#allocation3 + $0x264] sm:$0xff]
    %v152 = vld [vmem:[#allocation3 + $0x26c] sm:$0xf]
    %v153 = vld [vmem:[#allocation3 + $0x270] sm:$0xff]
    %v154 = vld [vmem:[#allocation3 + $0x278] sm:$0xf]
    %v155 = vld [vmem:[#allocation3 + $0x27c] sm:$0xff]
    %v156 = vld [vmem:[#allocation3 + $0x284] sm:$0xf]
    %v157 = vld [vmem:[#allocation3 + $0x288] sm:$0xff]
    %v158 = vld [vmem:[#allocation3 + $0x290] sm:$0xf]
    %v159 = vld [vmem:[#allocation3 + $0x294] sm:$0xff]
    %v160 = vld [vmem:[#allocation3 + $0x29c] sm:$0xf]
    %v161 = vld [vmem:[#allocation3 + $0x2a0] sm:$0xff]
    %v162 = vld [vmem:[#allocation3 + $0x2a8] sm:$0xf]
    %v163 = vld [vmem:[#allocation3 + $0x2ac] sm:$0xff]
    %v164 = vld [vmem:[#allocation3 + $0x2b4] sm:$0xf]
    %v165 = vld [vmem:[#allocation3 + $0x2b8] sm:$0xff]
    %v166 = vld [vmem:[#allocation3 + $0x2c0] sm:$0xf]
    %v167 = vld [vmem:[#allocation3 + $0x2c4] sm:$0xff]
    %v168 = vld [vmem:[#allocation3 + $0x2cc] sm:$0xf]
    %v169 = vld [vmem:[#allocation3 + $0x2d0] sm:$0xff]
    %v170 = vld [vmem:[#allocation3 + $0x2d8] sm:$0xf]
    %v171 = vld [vmem:[#allocation3 + $0x2dc] sm:$0xff]
    %v172 = vld [vmem:[#allocation3 + $0x2e4] sm:$0xf]
    %v173 = vld [vmem:[#allocation3 + $0x2e8] sm:$0xff]
    %v174 = vld [vmem:[#allocation3 + $0x2f0] sm:$0xf]
    %v175 = vld [vmem:[#allocation3 + $0x2f4] sm:$0xff]
    %v176 = vld [vmem:[#allocation3 + $0x2fc] sm:$0xf]
    %v181 = vunpack.c.l.b16 %v45
    %v182 = vunpack.c.h.b16 %v45
    %v183 = vunpack.c.l.b16 %v46
    %v184 = vunpack.c.h.b16 %v46
    %v185 = vunpack.c.l.b16 %v47
    %v186 = vunpack.c.h.b16 %v47
    %v187 = vunpack.c.l.b16 %v48
    %v188 = vunpack.c.h.b16 %v48
    %v189 = vpack.c.b16 %v185, %v181
    %v190 = vpack.c.b16 %v186, %v182
    %v191 = vpack.c.b16 %v187, %v183
    %v192 = vpack.c.b16 %v188, %v184
    %v325 = vunpack.c.l.b16 %v49
    %v326 = vunpack.c.h.b16 %v49
    %v327 = vunpack.c.l.b16 %v50
    %v328 = vunpack.c.l.b16 %v51
    %v329 = vunpack.c.h.b16 %v51
    %v330 = vunpack.c.l.b16 %v52
    %v331 = vunpack.c.l.b16 %v53
    %v332 = vunpack.c.h.b16 %v53
    %v333 = vunpack.c.l.b16 %v54
    %v334 = vunpack.c.l.b16 %v55
    %v335 = vunpack.c.h.b16 %v55
    %v336 = vunpack.c.l.b16 %v56
    %v337 = vunpack.c.l.b16 %v57
    %v338 = vunpack.c.h.b16 %v57
    %v339 = vunpack.c.l.b16 %v58
    %v340 = vunpack.c.l.b16 %v59
    %v341 = vunpack.c.h.b16 %v59
    %v342 = vunpack.c.l.b16 %v60
    %v343 = vunpack.c.l.b16 %v61
    %v344 = vunpack.c.h.b16 %v61
    %v345 = vunpack.c.l.b16 %v62
    %v346 = vunpack.c.l.b16 %v63
    %v347 = vunpack.c.h.b16 %v63
    %v348 = vunpack.c.l.b16 %v64
    %v349 = vunpack.c.l.b16 %v65
    %v350 = vunpack.c.h.b16 %v65
    %v351 = vunpack.c.l.b16 %v66
    %v352 = vunpack.c.l.b16 %v67
    %v353 = vunpack.c.h.b16 %v67
    %v354 = vunpack.c.l.b16 %v68
    %v355 = vunpack.c.l.b16 %v69
    %v356 = vunpack.c.h.b16 %v69
    %v357 = vunpack.c.l.b16 %v70
    %v358 = vunpack.c.l.b16 %v71
    %v359 = vunpack.c.h.b16 %v71
    %v360 = vunpack.c.l.b16 %v72
    %v361 = vunpack.c.l.b16 %v73
    %v362 = vunpack.c.h.b16 %v73
    %v363 = vunpack.c.l.b16 %v74
    %v364 = vunpack.c.l.b16 %v75
    %v365 = vunpack.c.h.b16 %v75
    %v366 = vunpack.c.l.b16 %v76
    %v367 = vunpack.c.l.b16 %v77
    %v368 = vunpack.c.h.b16 %v77
    %v369 = vunpack.c.l.b16 %v78
    %v370 = vunpack.c.l.b16 %v79
    %v371 = vunpack.c.h.b16 %v79
    %v372 = vunpack.c.l.b16 %v80
    %v373 = vunpack.c.l.b16 %v81
    %v374 = vunpack.c.h.b16 %v81
    %v375 = vunpack.c.l.b16 %v82
    %v376 = vunpack.c.l.b16 %v83
    %v377 = vunpack.c.h.b16 %v83
    %v378 = vunpack.c.l.b16 %v84
    %v379 = vunpack.c.l.b16 %v85
    %v380 = vunpack.c.h.b16 %v85
    %v381 = vunpack.c.l.b16 %v86
    %v382 = vunpack.c.l.b16 %v87
    %v383 = vunpack.c.h.b16 %v87
    %v384 = vunpack.c.l.b16 %v88
    %v385 = vunpack.c.l.b16 %v89
    %v386 = vunpack.c.h.b16 %v89
    %v387 = vunpack.c.l.b16 %v90
    %v388 = vunpack.c.l.b16 %v91
    %v389 = vunpack.c.h.b16 %v91
    %v390 = vunpack.c.l.b16 %v92
    %v391 = vunpack.c.l.b16 %v93
    %v392 = vunpack.c.h.b16 %v93
    %v393 = vunpack.c.l.b16 %v94
    %v394 = vunpack.c.l.b16 %v95
    %v395 = vunpack.c.h.b16 %v95
    %v396 = vunpack.c.l.b16 %v96
    %v397 = vunpack.c.l.b16 %v97
    %v398 = vunpack.c.h.b16 %v97
    %v399 = vunpack.c.l.b16 %v98
    %v400 = vunpack.c.l.b16 %v99
    %v401 = vunpack.c.h.b16 %v99
    %v402 = vunpack.c.l.b16 %v100
    %v403 = vunpack.c.l.b16 %v101
    %v404 = vunpack.c.h.b16 %v101
    %v405 = vunpack.c.l.b16 %v102
    %v406 = vunpack.c.l.b16 %v103
    %v407 = vunpack.c.h.b16 %v103
    %v408 = vunpack.c.l.b16 %v104
    %v409 = vunpack.c.l.b16 %v105
    %v410 = vunpack.c.h.b16 %v105
    %v411 = vunpack.c.l.b16 %v106
    %v412 = vunpack.c.l.b16 %v107
    %v413 = vunpack.c.h.b16 %v107
    %v414 = vunpack.c.l.b16 %v108
    %v415 = vunpack.c.l.b16 %v109
    %v416 = vunpack.c.h.b16 %v109
    %v417 = vunpack.c.l.b16 %v110
    %v418 = vunpack.c.l.b16 %v111
    %v419 = vunpack.c.h.b16 %v111
    %v420 = vunpack.c.l.b16 %v112
    %v421 = vunpack.c.l.b16 %v113
    %v422 = vunpack.c.h.b16 %v113
    %v423 = vunpack.c.l.b16 %v114
    %v424 = vunpack.c.l.b16 %v115
    %v425 = vunpack.c.h.b16 %v115
    %v426 = vunpack.c.l.b16 %v116
    %v427 = vunpack.c.l.b16 %v117
    %v428 = vunpack.c.h.b16 %v117
    %v429 = vunpack.c.l.b16 %v118
    %v430 = vunpack.c.l.b16 %v119
    %v431 = vunpack.c.h.b16 %v119
    %v432 = vunpack.c.l.b16 %v120
    %v433 = vunpack.c.l.b16 %v121
    %v434 = vunpack.c.h.b16 %v121
    %v435 = vunpack.c.l.b16 %v122
    %v436 = vunpack.c.l.b16 %v123
    %v437 = vunpack.c.h.b16 %v123
    %v438 = vunpack.c.l.b16 %v124
    %v439 = vunpack.c.l.b16 %v125
    %v440 = vunpack.c.h.b16 %v125
    %v441 = vunpack.c.l.b16 %v126
    %v442 = vunpack.c.l.b16 %v127
    %v443 = vunpack.c.h.b16 %v127
    %v444 = vunpack.c.l.b16 %v128
    %v445 = vunpack.c.l.b16 %v129
    %v446 = vunpack.c.h.b16 %v129
    %v447 = vunpack.c.l.b16 %v130
    %v448 = vunpack.c.l.b16 %v131
    %v449 = vunpack.c.h.b16 %v131
    %v450 = vunpack.c.l.b16 %v132
    %v451 = vunpack.c.l.b16 %v133
    %v452 = vunpack.c.h.b16 %v133
    %v453 = vunpack.c.l.b16 %v134
    %v454 = vunpack.c.l.b16 %v135
    %v455 = vunpack.c.h.b16 %v135
    %v456 = vunpack.c.l.b16 %v136
    %v457 = vunpack.c.l.b16 %v137
    %v458 = vunpack.c.h.b16 %v137
    %v459 = vunpack.c.l.b16 %v138
    %v460 = vunpack.c.l.b16 %v139
    %v461 = vunpack.c.h.b16 %v139
    %v462 = vunpack.c.l.b16 %v140
    %v463 = vunpack.c.l.b16 %v141
    %v464 = vunpack.c.h.b16 %v141
    %v465 = vunpack.c.l.b16 %v142
    %v466 = vunpack.c.l.b16 %v143
    %v467 = vunpack.c.h.b16 %v143
    %v468 = vunpack.c.l.b16 %v144
    %v469 = vunpack.c.l.b16 %v145
    %v470 = vunpack.c.h.b16 %v145
    %v471 = vunpack.c.l.b16 %v146
    %v472 = vunpack.c.l.b16 %v147
    %v473 = vunpack.c.h.b16 %v147
    %v474 = vunpack.c.l.b16 %v148
    %v475 = vunpack.c.l.b16 %v149
    %v476 = vunpack.c.h.b16 %v149
    %v477 = vunpack.c.l.b16 %v150
    %v478 = vunpack.c.l.b16 %v151
    %v479 = vunpack.c.h.b16 %v151
    %v480 = vunpack.c.l.b16 %v152
    %v481 = vunpack.c.l.b16 %v153
    %v482 = vunpack.c.h.b16 %v153
    %v483 = vunpack.c.l.b16 %v154
    %v484 = vunpack.c.l.b16 %v155
    %v485 = vunpack.c.h.b16 %v155
    %v486 = vunpack.c.l.b16 %v156
    %v487 = vunpack.c.l.b16 %v157
    %v488 = vunpack.c.h.b16 %v157
    %v489 = vunpack.c.l.b16 %v158
    %v490 = vunpack.c.l.b16 %v159
    %v491 = vunpack.c.h.b16 %v159
    %v492 = vunpack.c.l.b16 %v160
    %v493 = vunpack.c.l.b16 %v161
    %v494 = vunpack.c.h.b16 %v161
    %v495 = vunpack.c.l.b16 %v162
    %v496 = vunpack.c.l.b16 %v163
    %v497 = vunpack.c.h.b16 %v163
    %v498 = vunpack.c.l.b16 %v164
    %v499 = vunpack.c.l.b16 %v165
    %v500 = vunpack.c.h.b16 %v165
    %v501 = vunpack.c.l.b16 %v166
    %v502 = vunpack.c.l.b16 %v167
    %v503 = vunpack.c.h.b16 %v167
    %v504 = vunpack.c.l.b16 %v168
    %v505 = vunpack.c.l.b16 %v169
    %v506 = vunpack.c.h.b16 %v169
    %v507 = vunpack.c.l.b16 %v170
    %v508 = vunpack.c.l.b16 %v171
    %v509 = vunpack.c.h.b16 %v171
    %v510 = vunpack.c.l.b16 %v172
    %v511 = vunpack.c.l.b16 %v173
    %v512 = vunpack.c.h.b16 %v173
    %v513 = vunpack.c.l.b16 %v174
    %v514 = vunpack.c.l.b16 %v175
    %v515 = vunpack.c.h.b16 %v175
    %v516 = vunpack.c.l.b16 %v176
    %v517 = vpack.c.b16 %v328, %v325
    %v518 = vpack.c.b16 %v329, %v326
    %v519 = vpack.c.b16 %v330, %v327
    %v520 = vpack.c.b16 %v334, %v331
    %v521 = vpack.c.b16 %v335, %v332
    %v522 = vpack.c.b16 %v336, %v333
    %v523 = vpack.c.b16 %v340, %v337
    %v524 = vpack.c.b16 %v341, %v338
    %v525 = vpack.c.b16 %v342, %v339
    %v526 = vpack.c.b16 %v346, %v343
    %v527 = vpack.c.b16 %v347, %v344
    %v528 = vpack.c.b16 %v348, %v345
    %v529 = vpack.c.b16 %v352, %v349
    %v530 = vpack.c.b16 %v353, %v350
    %v531 = vpack.c.b16 %v354, %v351
    %v532 = vpack.c.b16 %v358, %v355
    %v533 = vpack.c.b16 %v359, %v356
    %v534 = vpack.c.b16 %v360, %v357
    %v535 = vpack.c.b16 %v364, %v361
    %v536 = vpack.c.b16 %v365, %v362
    %v537 = vpack.c.b16 %v366, %v363
    %v538 = vpack.c.b16 %v370, %v367
    %v539 = vpack.c.b16 %v371, %v368
    %v540 = vpack.c.b16 %v372, %v369
    %v541 = vpack.c.b16 %v376, %v373
    %v542 = vpack.c.b16 %v377, %v374
    %v543 = vpack.c.b16 %v378, %v375
    %v544 = vpack.c.b16 %v382, %v379
    %v545 = vpack.c.b16 %v383, %v380
    %v546 = vpack.c.b16 %v384, %v381
    %v547 = vpack.c.b16 %v388, %v385
    %v548 = vpack.c.b16 %v389, %v386
    %v549 = vpack.c.b16 %v390, %v387
    %v550 = vpack.c.b16 %v394, %v391
    %v551 = vpack.c.b16 %v395, %v392
    %v552 = vpack.c.b16 %v396, %v393
    %v553 = vpack.c.b16 %v400, %v397
    %v554 = vpack.c.b16 %v401, %v398
    %v555 = vpack.c.b16 %v402, %v399
    %v556 = vpack.c.b16 %v406, %v403
    %v557 = vpack.c.b16 %v407, %v404
    %v558 = vpack.c.b16 %v408, %v405
    %v559 = vpack.c.b16 %v412, %v409
    %v560 = vpack.c.b16 %v413, %v410
    %v561 = vpack.c.b16 %v414, %v411
    %v562 = vpack.c.b16 %v418, %v415
    %v563 = vpack.c.b16 %v419, %v416
    %v564 = vpack.c.b16 %v420, %v417
    %v565 = vpack.c.b16 %v424, %v421
    %v566 = vpack.c.b16 %v425, %v422
    %v567 = vpack.c.b16 %v426, %v423
    %v568 = vpack.c.b16 %v430, %v427
    %v569 = vpack.c.b16 %v431, %v428
    %v570 = vpack.c.b16 %v432, %v429
    %v571 = vpack.c.b16 %v436, %v433
    %v572 = vpack.c.b16 %v437, %v434
    %v573 = vpack.c.b16 %v438, %v435
    %v574 = vpack.c.b16 %v442, %v439
    %v575 = vpack.c.b16 %v443, %v440
    %v576 = vpack.c.b16 %v444, %v441
    %v577 = vpack.c.b16 %v448, %v445
    %v578 = vpack.c.b16 %v449, %v446
    %v579 = vpack.c.b16 %v450, %v447
    %v580 = vpack.c.b16 %v454, %v451
    %v581 = vpack.c.b16 %v455, %v452
    %v582 = vpack.c.b16 %v456, %v453
    %v583 = vpack.c.b16 %v460, %v457
    %v584 = vpack.c.b16 %v461, %v458
    %v585 = vpack.c.b16 %v462, %v459
    %v586 = vpack.c.b16 %v466, %v463
    %v587 = vpack.c.b16 %v467, %v464
    %v588 = vpack.c.b16 %v468, %v465
    %v589 = vpack.c.b16 %v472, %v469
    %v590 = vpack.c.b16 %v473, %v470
    %v591 = vpack.c.b16 %v474, %v471
    %v592 = vpack.c.b16 %v478, %v475
    %v593 = vpack.c.b16 %v479, %v476
    %v594 = vpack.c.b16 %v480, %v477
    %v595 = vpack.c.b16 %v484, %v481
    %v596 = vpack.c.b16 %v485, %v482
    %v597 = vpack.c.b16 %v486, %v483
    %v598 = vpack.c.b16 %v490, %v487
    %v599 = vpack.c.b16 %v491, %v488
    %v600 = vpack.c.b16 %v492, %v489
    %v601 = vpack.c.b16 %v496, %v493
    %v602 = vpack.c.b16 %v497, %v494
    %v603 = vpack.c.b16 %v498, %v495
    %v604 = vpack.c.b16 %v502, %v499
    %v605 = vpack.c.b16 %v503, %v500
    %v606 = vpack.c.b16 %v504, %v501
    %v607 = vpack.c.b16 %v508, %v505
    %v608 = vpack.c.b16 %v509, %v506
    %v609 = vpack.c.b16 %v510, %v507
    %v610 = vpack.c.b16 %v514, %v511
    %v611 = vpack.c.b16 %v515, %v512
    %v612 = vpack.c.b16 %v516, %v513
    %709 = vmatprep.subr.bf16.mxu0 %v539
    %710 = vmatpush1.bf16.msra.mxu0 %v538
    %711 = vmatprep.subr.bf16.mxu0 %v536
    %712 = vmatpush1.bf16.msra.mxu0 %v535
    %713 = vmatprep.subr.bf16.mxu0 %v533
    %714 = vmatpush1.bf16.msra.mxu0 %v532
    %715 = vmatprep.subr.bf16.mxu0 %v530
    %716 = vmatpush1.bf16.msra.mxu0 %v529
    %717 = vmatprep.subr.bf16.mxu0 %v527
    %718 = vmatpush1.bf16.msra.mxu0 %v526
    %719 = vmatprep.subr.bf16.mxu0 %v524
    %720 = vmatpush1.bf16.msra.mxu0 %v523
    %721 = vmatprep.subr.bf16.mxu0 %v521
    %722 = vmatpush1.bf16.msra.mxu0 %v520
    %723 = vmatprep.subr.bf16.mxu0 %v518
    %724 = vmatpush1.bf16.msra.mxu0 %v517
    %725 = vmatprep.subr.bf16.mxu0 %v563
    %726 = vmatpush2.bf16.msra.mxu0 %v562
    %727 = vmatprep.subr.bf16.mxu0 %v560
    %728 = vmatpush2.bf16.msra.mxu0 %v559
    %729 = vmatprep.subr.bf16.mxu0 %v557
    %730 = vmatpush2.bf16.msra.mxu0 %v556
    %731 = vmatprep.subr.bf16.mxu0 %v554
    %732 = vmatpush2.bf16.msra.mxu0 %v553
    %733 = vmatprep.subr.bf16.mxu0 %v551
    %734 = vmatpush2.bf16.msra.mxu0 %v550
    %735 = vmatprep.subr.bf16.mxu0 %v548
    %736 = vmatpush2.bf16.msra.mxu0 %v547
    %737 = vmatprep.subr.bf16.mxu0 %v545
    %738 = vmatpush2.bf16.msra.mxu0 %v544
    %739 = vmatprep.subr.bf16.mxu0 %v542
    %740 = vmatpush2.bf16.msra.mxu0 %v541
    %741 = vmatprep.mubr.bf16.mxu0 %v190
    %742 = vmatmul.mubr.bf16.gmra.mxu0 %v189
    %v743 = vpop.f32.mrf.mxu0
    %v744 = vadd.f32 0.0, %v743
    %v745 = vpop.f32.mrf.mxu0
    %v746 = vadd.f32 0.0, %v745
    %v747 = vpop.f32.mrf.mxu0
    %v748 = vadd.f32 0.0, %v747
    %v749 = vpop.f32.mrf.mxu0
    %v750 = vadd.f32 0.0, %v749
    %751 = vdwg.mxu0
    %752 = vmatprep.subr.bf16.mxu0 %v587
    %753 = vmatpush1.bf16.msra.mxu0 %v586
    %754 = vmatprep.subr.bf16.mxu0 %v584
    %755 = vmatpush1.bf16.msra.mxu0 %v583
    %756 = vmatprep.subr.bf16.mxu0 %v581
    %757 = vmatpush1.bf16.msra.mxu0 %v580
    %758 = vmatprep.subr.bf16.mxu0 %v578
    %759 = vmatpush1.bf16.msra.mxu0 %v577
    %760 = vmatprep.subr.bf16.mxu0 %v575
    %761 = vmatpush1.bf16.msra.mxu0 %v574
    %762 = vmatprep.subr.bf16.mxu0 %v572
    %763 = vmatpush1.bf16.msra.mxu0 %v571
    %764 = vmatprep.subr.bf16.mxu0 %v569
    %765 = vmatpush1.bf16.msra.mxu0 %v568
    %766 = vmatprep.subr.bf16.mxu0 %v566
    %767 = vmatpush1.bf16.msra.mxu0 %v565
    %768 = vmatprep.subr.bf16.mxu0 %v611
    %769 = vmatpush2.bf16.msra.mxu0 %v610
    %770 = vmatprep.subr.bf16.mxu0 %v608
    %771 = vmatpush2.bf16.msra.mxu0 %v607
    %772 = vmatprep.subr.bf16.mxu0 %v605
    %773 = vmatpush2.bf16.msra.mxu0 %v604
    %774 = vmatprep.subr.bf16.mxu0 %v602
    %775 = vmatpush2.bf16.msra.mxu0 %v601
    %776 = vmatprep.subr.bf16.mxu0 %v599
    %777 = vmatpush2.bf16.msra.mxu0 %v598
    %778 = vmatprep.subr.bf16.mxu0 %v596
    %779 = vmatpush2.bf16.msra.mxu0 %v595
    %780 = vmatprep.subr.bf16.mxu0 %v593
    %781 = vmatpush2.bf16.msra.mxu0 %v592
    %782 = vmatprep.subr.bf16.mxu0 %v590
    %783 = vmatpush2.bf16.msra.mxu0 %v589
    %784 = vmatprep.mubr.bf16.mxu0 %v192
    %785 = vmatmul.mubr.bf16.gmra.mxu0 %v191
    %v786 = vpop.f32.mrf.mxu0
    %v787 = vadd.f32 %v744, %v786
    %v788 = vpop.f32.mrf.mxu0
    %v789 = vadd.f32 %v746, %v788
    %v790 = vpop.f32.mrf.mxu0
    %v791 = vadd.f32 %v748, %v790
    %v792 = vpop.f32.mrf.mxu0
    %v793 = vadd.f32 %v750, %v792
    %794 = vdwg.mxu0
    %795 = vmatprep.subr.bf16.mxu0 0
    %796 = vmatpush1.bf16.msra.mxu0 %v540
    %797 = vmatprep.subr.bf16.mxu0 0
    %798 = vmatpush1.bf16.msra.mxu0 %v537
    %799 = vmatprep.subr.bf16.mxu0 0
    %800 = vmatpush1.bf16.msra.mxu0 %v534
    %801 = vmatprep.subr.bf16.mxu0 0
    %802 = vmatpush1.bf16.msra.mxu0 %v531
    %803 = vmatprep.subr.bf16.mxu0 0
    %804 = vmatpush1.bf16.msra.mxu0 %v528
    %805 = vmatprep.subr.bf16.mxu0 0
    %806 = vmatpush1.bf16.msra.mxu0 %v525
    %807 = vmatprep.subr.bf16.mxu0 0
    %808 = vmatpush1.bf16.msra.mxu0 %v522
    %809 = vmatprep.subr.bf16.mxu0 0
    %810 = vmatpush1.bf16.msra.mxu0 %v519
    %811 = vmatprep.subr.bf16.mxu0 0
    %812 = vmatpush2.bf16.msra.mxu0 %v564
    %813 = vmatprep.subr.bf16.mxu0 0
    %814 = vmatpush2.bf16.msra.mxu0 %v561
    %815 = vmatprep.subr.bf16.mxu0 0
    %816 = vmatpush2.bf16.msra.mxu0 %v558
    %817 = vmatprep.subr.bf16.mxu0 0
    %818 = vmatpush2.bf16.msra.mxu0 %v555
    %819 = vmatprep.subr.bf16.mxu0 0
    %820 = vmatpush2.bf16.msra.mxu0 %v552
    %821 = vmatprep.subr.bf16.mxu0 0
    %822 = vmatpush2.bf16.msra.mxu0 %v549
    %823 = vmatprep.subr.bf16.mxu0 0
    %824 = vmatpush2.bf16.msra.mxu0 %v546
    %825 = vmatprep.subr.bf16.mxu0 0
    %826 = vmatpush2.bf16.msra.mxu0 %v543
    %827 = vmatprep.mubr.bf16.mxu0 %v190
    %828 = vmatmul.mubr.bf16.gmra.mxu0 %v189
    %v829 = vpop.f32.mrf.mxu0
    %v830 = vadd.f32 0.0, %v829
    %v831 = vpop.f32.mrf.mxu0
    %v832 = vpop.f32.mrf.mxu0
    %v833 = vadd.f32 0.0, %v832
    %v834 = vpop.f32.mrf.mxu0
    %835 = vdwg.mxu0
    %836 = vmatprep.subr.bf16.mxu0 0
    %837 = vmatpush1.bf16.msra.mxu0 %v588
    %838 = vmatprep.subr.bf16.mxu0 0
    %839 = vmatpush1.bf16.msra.mxu0 %v585
    %840 = vmatprep.subr.bf16.mxu0 0
    %841 = vmatpush1.bf16.msra.mxu0 %v582
    %842 = vmatprep.subr.bf16.mxu0 0
    %843 = vmatpush1.bf16.msra.mxu0 %v579
    %844 = vmatprep.subr.bf16.mxu0 0
    %845 = vmatpush1.bf16.msra.mxu0 %v576
    %846 = vmatprep.subr.bf16.mxu0 0
    %847 = vmatpush1.bf16.msra.mxu0 %v573
    %848 = vmatprep.subr.bf16.mxu0 0
    %849 = vmatpush1.bf16.msra.mxu0 %v570
    %850 = vmatprep.subr.bf16.mxu0 0
    %851 = vmatpush1.bf16.msra.mxu0 %v567
    %852 = vmatprep.subr.bf16.mxu0 0
    %853 = vmatpush2.bf16.msra.mxu0 %v612
    %854 = vmatprep.subr.bf16.mxu0 0
    %855 = vmatpush2.bf16.msra.mxu0 %v609
    %856 = vmatprep.subr.bf16.mxu0 0
    %857 = vmatpush2.bf16.msra.mxu0 %v606
    %858 = vmatprep.subr.bf16.mxu0 0
    %859 = vmatpush2.bf16.msra.mxu0 %v603
    %860 = vmatprep.subr.bf16.mxu0 0
    %861 = vmatpush2.bf16.msra.mxu0 %v600
    %862 = vmatprep.subr.bf16.mxu0 0
    %863 = vmatpush2.bf16.msra.mxu0 %v597
    %864 = vmatprep.subr.bf16.mxu0 0
    %865 = vmatpush2.bf16.msra.mxu0 %v594
    %866 = vmatprep.subr.bf16.mxu0 0
    %867 = vmatpush2.bf16.msra.mxu0 %v591
    %868 = vmatprep.mubr.bf16.mxu0 %v192
    %869 = vmatmul.mubr.bf16.gmra.mxu0 %v191
    %v870 = vpop.f32.mrf.mxu0
    %v871 = vadd.f32 %v830, %v870
    %v872 = vpop.f32.mrf.mxu0
    %v873 = vpop.f32.mrf.mxu0
    %v874 = vadd.f32 %v833, %v873
    %v875 = vpop.f32.mrf.mxu0
    %876 = vdwg.mxu0
    %v877 = vadd.f32 %v39, %v787
    %v878 = vadd.f32 %v40, %v789
    %v879 = vadd.f32 %v41, %v871
    %v880 = vadd.f32 %v42, %v791
    %v881 = vadd.f32 %v43, %v793
    %v882 = vadd.f32 %v44, %v874
    %883 = vst [vmem:[#allocation2] sm:$0xff] %v877
    %884 = vst [vmem:[#allocation2 + $0x8] sm:$0xff] %v878
    %885 = vst [vmem:[#allocation2 + $0x10] sm:$0xff] %v879
    %886 = vst [vmem:[#allocation2 + $0x18] sm:$0xff] %v880
    %887 = vst [vmem:[#allocation2 + $0x20] sm:$0xff] %v881
    %888 = vst [vmem:[#allocation2 + $0x28] sm:$0xff] %v882
    // Predicated region
    $region22: #{vae_with_classifier_forward.12} parent=1 // pred_check
      %p889 = pneg %p29
    $region23: #{vae_with_classifier_forward.12} parent=1 // pred_check_branch
      %891 = sbr.rel (%p889) target = $region25
    $region24: #{vae_with_classifier_forward.12} parent=1 // pred_region
      %v892 = vld [vmem:[#allocation2] sm:$0xff]
      %v893 = vld [vmem:[#allocation2 + $0x8] sm:$0xff]
      %v894 = vld [vmem:[#allocation2 + $0x10] sm:$0xff]
      %v895 = vld [vmem:[#allocation2 + $0x18] sm:$0xff]
      %v896 = vld [vmem:[#allocation2 + $0x20] sm:$0xff]
      %v897 = vld [vmem:[#allocation2 + $0x28] sm:$0xff]
      %v898 = vld [vmem:[%s2] sm:$0x7]
      %v900 = vlaneseq
      %v901 = vshrl.u32 %v900, 7
      %v902 = vsub.s32 0, %v901
      %v903 = vrot.slane %v898, %v902
      %v904 = vlaneseq
      %v905 = vshrl.u32 %v904, 7
      %v906 = vsub.s32 1, %v905
      %v907 = vrot.slane %v898, %v906
      %v908 = vlaneseq
      %v909 = vshrl.u32 %v908, 7
      %v910 = vsub.s32 2, %v909
      %v911 = vrot.slane %v898, %v910
      %v915 = vadd.f32 %v892, %v903
      %v916 = vadd.f32 %v893, %v907
      %v917 = vadd.f32 %v894, %v911
      %v918 = vadd.f32 %v895, %v903
      %v919 = vadd.f32 %v896, %v907
      %v920 = vadd.f32 %v897, %v911
      %v921 = vmax.f32 %v915, 0.0
      %v922 = vmax.f32 %v916, 0.0
      %v923 = vmax.f32 %v917, 0.0
      %v924 = vmax.f32 %v918, 0.0
      %v925 = vmax.f32 %v919, 0.0
      %v926 = vmax.f32 %v920, 0.0
      %v927 = vpack.c.bf16 %v924, %v921
      %v928 = vpack.c.bf16 %v925, %v922
      %v929 = vpack.c.bf16 %v926, %v923
      %v933 = vunpack.c.l.b16 %v927
      %v934 = vunpack.c.l.b16 %v928
      %v935 = vunpack.c.l.b16 %v929
      %v936 = vunpack.c.h.b16 %v927
      %v937 = vunpack.c.h.b16 %v928
      %v938 = vunpack.c.h.b16 %v929
      %v939 = vpack.c.b16 %v934, %v933
      %v940 = vpack.c.b16 %v935, %v935
      %v941 = vpack.c.b16 %v937, %v936
      %v942 = vpack.c.b16 %v938, %v938
      %947 = vst [vmem:[%s3] sm:$0xff] %v939
      %948 = vst [vmem:[%s3 + $0x8] sm:$0xf] %v940
      %949 = vst [vmem:[%s3 + $0xc] sm:$0xff] %v941
      %950 = vst [vmem:[%s3 + $0x14] sm:$0xf] %v942
    $region25: #{vae_with_classifier_forward.12} parent=1 // pred_fallthru
      _
    // Predicated region
    $region26: #{vae_with_classifier_forward.12} parent=1 // pred_check
      _
    $region27: #{vae_with_classifier_forward.12} parent=1 // pred_check_branch
      %952 = sbr.rel (0) target = $region29
    $region28: #{vae_with_classifier_forward.12} parent=1 // pred_region
      _
    $region29: #{vae_with_classifier_forward.12} parent=1 // pred_fallthru
      _
    // Predicated region
    $region30: #{vae_with_classifier_forward.12} parent=1 // pred_check
      _
    $region31: #{vae_with_classifier_forward.12} parent=1 // pred_check_branch
      %954 = sbr.rel (0) target = $region33
    $region32: #{vae_with_classifier_forward.12} parent=1 // pred_region
      _
    $region33: #{vae_with_classifier_forward.12} parent=1 // pred_fallthru
      _
    %955 = vsyncpa [#allocation4], 1

// kernel: vae_with_classifier_forward.14
$region0: #{vae_with_classifier_forward.14}
  #allocation0 [shape = 'u32[]', space=smem, size = 0x4, offset = 0x4, fixed_abs, tag = 'smem constant byte address 0x4 - core index']
  #allocation1 [shape = 'u32[144,128]{1,0:T(1,128)}', space=vmem, size = 0x12000, scoped, tag = 'internal scratch']
  #allocation2 [shape = 'f32[16,128]{1,0:T(8,128)}', space=vmem, size = 0x2000, scoped, tag = 'scratch operand']
  %s0 = inlined_call_operand.vmem [shape: bf16[16,256], index: 0, kind: input, shape index: {}]
  %s1 = inlined_call_operand.vmem [shape: bf16[256,128], index: 1, kind: input, shape index: {}]
  %s2 = inlined_call_operand.vmem [shape: f32[1,128], index: 2, kind: input, shape index: {}]
  %s3 = inlined_call_operand.vmem [shape: f32[16,128], index: 3, kind: output, shape index: {}]
  %s4 = sld [smem:[#allocation0]]
  $region30: #{vae_with_classifier_forward.14} parent=0
    _
  %s6 = ssub.s32 1, %s4
  %s7 = scalar_select 0, %s6, %s4
  // Predicated region
  $region2: #{vae_with_classifier_forward.14} parent=0 // pred_check
    _
  $region3: #{vae_with_classifier_forward.14} parent=0 // pred_check_branch
    %9 = sbr.rel (0) target = $region5
  $region4: #{vae_with_classifier_forward.14} parent=0 // pred_region
    _
  $region5: #{vae_with_classifier_forward.14} parent=0 // pred_fallthru
    _
  // Predicated region
  $region6: #{vae_with_classifier_forward.14} parent=0 // pred_check
    _
  $region7: #{vae_with_classifier_forward.14} parent=0 // pred_check_branch
    %11 = sbr.rel (0) target = $region9
  $region8: #{vae_with_classifier_forward.14} parent=0 // pred_region
    _
  $region9: #{vae_with_classifier_forward.14} parent=0 // pred_fallthru
    _
  // Predicated region
  $region10: #{vae_with_classifier_forward.14} parent=0 // pred_check
    _
  $region11: #{vae_with_classifier_forward.14} parent=0 // pred_check_branch
    %13 = sbr.rel (0) target = $region13
  $region12: #{vae_with_classifier_forward.14} parent=0 // pred_region
    _
  $region13: #{vae_with_classifier_forward.14} parent=0 // pred_fallthru
    _
  %p15 = scmp.eq.s32.totalorder 0, 0
  // Predicated region
  $region14: #{vae_with_classifier_forward.14} parent=0 // pred_check
    %p16 = pneg %p15
  $region15: #{vae_with_classifier_forward.14} parent=0 // pred_check_branch
    %18 = sbr.rel (%p16) target = $region17
  $region16: #{vae_with_classifier_forward.14} parent=0 // pred_region
    %19 = vst [vmem:[#allocation2] sm:$0xff] 0.0
    %20 = vst [vmem:[#allocation2 + $0x8] sm:$0xff] 0.0
  $region17: #{vae_with_classifier_forward.14} parent=0 // pred_fallthru
    _
  %v21 = vld [vmem:[#allocation2] sm:$0xff]
  %v22 = vld [vmem:[#allocation2 + $0x8] sm:$0xff]
  %v23 = vld [vmem:[%s0] sm:$0xff]
  %v24 = vld [vmem:[%s0 + $0x8] sm:$0xff]
  %v25 = vld [vmem:[%s1] sm:$0xf]
  %v26 = vld [vmem:[%s1 + $0x4] sm:$0xf]
  %v27 = vld [vmem:[%s1 + $0x8] sm:$0xf]
  %v28 = vld [vmem:[%s1 + $0xc] sm:$0xf]
  %v29 = vld [vmem:[%s1 + $0x10] sm:$0xf]
  %v30 = vld [vmem:[%s1 + $0x14] sm:$0xf]
  %v31 = vld [vmem:[%s1 + $0x18] sm:$0xf]
  %v32 = vld [vmem:[%s1 + $0x1c] sm:$0xf]
  %v33 = vld [vmem:[%s1 + $0x20] sm:$0xf]
  %v34 = vld [vmem:[%s1 + $0x24] sm:$0xf]
  %v35 = vld [vmem:[%s1 + $0x28] sm:$0xf]
  %v36 = vld [vmem:[%s1 + $0x2c] sm:$0xf]
  %v37 = vld [vmem:[%s1 + $0x30] sm:$0xf]
  %v38 = vld [vmem:[%s1 + $0x34] sm:$0xf]
  %v39 = vld [vmem:[%s1 + $0x38] sm:$0xf]
  %v40 = vld [vmem:[%s1 + $0x3c] sm:$0xf]
  %v41 = vld [vmem:[%s1 + $0x40] sm:$0xf]
  %v42 = vld [vmem:[%s1 + $0x44] sm:$0xf]
  %v43 = vld [vmem:[%s1 + $0x48] sm:$0xf]
  %v44 = vld [vmem:[%s1 + $0x4c] sm:$0xf]
  %v45 = vld [vmem:[%s1 + $0x50] sm:$0xf]
  %v46 = vld [vmem:[%s1 + $0x54] sm:$0xf]
  %v47 = vld [vmem:[%s1 + $0x58] sm:$0xf]
  %v48 = vld [vmem:[%s1 + $0x5c] sm:$0xf]
  %v49 = vld [vmem:[%s1 + $0x60] sm:$0xf]
  %v50 = vld [vmem:[%s1 + $0x64] sm:$0xf]
  %v51 = vld [vmem:[%s1 + $0x68] sm:$0xf]
  %v52 = vld [vmem:[%s1 + $0x6c] sm:$0xf]
  %v53 = vld [vmem:[%s1 + $0x70] sm:$0xf]
  %v54 = vld [vmem:[%s1 + $0x74] sm:$0xf]
  %v55 = vld [vmem:[%s1 + $0x78] sm:$0xf]
  %v56 = vld [vmem:[%s1 + $0x7c] sm:$0xf]
  %v59 = vunpack.c.l.b16 %v23
  %v60 = vunpack.c.h.b16 %v23
  %v61 = vunpack.c.l.b16 %v24
  %v62 = vunpack.c.h.b16 %v24
  %v63 = vpack.c.b16 %v61, %v59
  %v64 = vpack.c.b16 %v62, %v60
  %v99 = vunpack.c.l.b16 %v25
  %v100 = vunpack.c.l.b16 %v26
  %v101 = vunpack.c.l.b16 %v27
  %v102 = vunpack.c.l.b16 %v28
  %v103 = vunpack.c.l.b16 %v29
  %v104 = vunpack.c.l.b16 %v30
  %v105 = vunpack.c.l.b16 %v31
  %v106 = vunpack.c.l.b16 %v32
  %v107 = vunpack.c.l.b16 %v33
  %v108 = vunpack.c.l.b16 %v34
  %v109 = vunpack.c.l.b16 %v35
  %v110 = vunpack.c.l.b16 %v36
  %v111 = vunpack.c.l.b16 %v37
  %v112 = vunpack.c.l.b16 %v38
  %v113 = vunpack.c.l.b16 %v39
  %v114 = vunpack.c.l.b16 %v40
  %v115 = vunpack.c.l.b16 %v41
  %v116 = vunpack.c.l.b16 %v42
  %v117 = vunpack.c.l.b16 %v43
  %v118 = vunpack.c.l.b16 %v44
  %v119 = vunpack.c.l.b16 %v45
  %v120 = vunpack.c.l.b16 %v46
  %v121 = vunpack.c.l.b16 %v47
  %v122 = vunpack.c.l.b16 %v48
  %v123 = vunpack.c.l.b16 %v49
  %v124 = vunpack.c.l.b16 %v50
  %v125 = vunpack.c.l.b16 %v51
  %v126 = vunpack.c.l.b16 %v52
  %v127 = vunpack.c.l.b16 %v53
  %v128 = vunpack.c.l.b16 %v54
  %v129 = vunpack.c.l.b16 %v55
  %v130 = vunpack.c.l.b16 %v56
  %v131 = vpack.c.b16 %v100, %v99
  %v132 = vpack.c.b16 %v102, %v101
  %v133 = vpack.c.b16 %v104, %v103
  %v134 = vpack.c.b16 %v106, %v105
  %v135 = vpack.c.b16 %v108, %v107
  %v136 = vpack.c.b16 %v110, %v109
  %v137 = vpack.c.b16 %v112, %v111
  %v138 = vpack.c.b16 %v114, %v113
  %v139 = vpack.c.b16 %v116, %v115
  %v140 = vpack.c.b16 %v118, %v117
  %v141 = vpack.c.b16 %v120, %v119
  %v142 = vpack.c.b16 %v122, %v121
  %v143 = vpack.c.b16 %v124, %v123
  %v144 = vpack.c.b16 %v126, %v125
  %v145 = vpack.c.b16 %v128, %v127
  %v146 = vpack.c.b16 %v130, %v129
  %163 = vmatprep.subr.bf16.mxu0 0
  %164 = vmatpush1.bf16.msra.mxu0 %v138
  %165 = vmatprep.subr.bf16.mxu0 0
  %166 = vmatpush1.bf16.msra.mxu0 %v137
  %167 = vmatprep.subr.bf16.mxu0 0
  %168 = vmatpush1.bf16.msra.mxu0 %v136
  %169 = vmatprep.subr.bf16.mxu0 0
  %170 = vmatpush1.bf16.msra.mxu0 %v135
  %171 = vmatprep.subr.bf16.mxu0 0
  %172 = vmatpush1.bf16.msra.mxu0 %v134
  %173 = vmatprep.subr.bf16.mxu0 0
  %174 = vmatpush1.bf16.msra.mxu0 %v133
  %175 = vmatprep.subr.bf16.mxu0 0
  %176 = vmatpush1.bf16.msra.mxu0 %v132
  %177 = vmatprep.subr.bf16.mxu0 0
  %178 = vmatpush1.bf16.msra.mxu0 %v131
  %179 = vmatprep.subr.bf16.mxu0 0
  %180 = vmatpush2.bf16.msra.mxu0 %v146
  %181 = vmatprep.subr.bf16.mxu0 0
  %182 = vmatpush2.bf16.msra.mxu0 %v145
  %183 = vmatprep.subr.bf16.mxu0 0
  %184 = vmatpush2.bf16.msra.mxu0 %v144
  %185 = vmatprep.subr.bf16.mxu0 0
  %186 = vmatpush2.bf16.msra.mxu0 %v143
  %187 = vmatprep.subr.bf16.mxu0 0
  %188 = vmatpush2.bf16.msra.mxu0 %v142
  %189 = vmatprep.subr.bf16.mxu0 0
  %190 = vmatpush2.bf16.msra.mxu0 %v141
  %191 = vmatprep.subr.bf16.mxu0 0
  %192 = vmatpush2.bf16.msra.mxu0 %v140
  %193 = vmatprep.subr.bf16.mxu0 0
  %194 = vmatpush2.bf16.msra.mxu0 %v139
  %195 = vmatprep.mubr.bf16.mxu0 %v64
  %196 = vmatmul.mubr.bf16.gmra.mxu0 %v63
  %v197 = vpop.f32.mrf.mxu0
  %v198 = vadd.f32 0.0, %v197
  %v199 = vpop.f32.mrf.mxu0
  %v200 = vpop.f32.mrf.mxu0
  %v201 = vadd.f32 0.0, %v200
  %v202 = vpop.f32.mrf.mxu0
  %203 = vdwg.mxu0
  %v204 = vadd.f32 %v21, %v198
  %v205 = vadd.f32 %v22, %v201
  %206 = vst [vmem:[#allocation2] sm:$0xff] %v204
  %207 = vst [vmem:[#allocation2 + $0x8] sm:$0xff] %v205
  // Predicated region
  $region18: #{vae_with_classifier_forward.14} parent=0 // pred_check
    %p208 = pneg %p15
  $region19: #{vae_with_classifier_forward.14} parent=0 // pred_check_branch
    %210 = sbr.rel (%p208) target = $region21
  $region20: #{vae_with_classifier_forward.14} parent=0 // pred_region
    %v211 = vld [vmem:[#allocation2] sm:$0xff]
    %v212 = vld [vmem:[#allocation2 + $0x8] sm:$0xff]
    %v213 = vld [vmem:[%s2] sm:$0x1]
    %v215 = vlaneseq
    %v216 = vshrl.u32 %v215, 7
    %v217 = vsub.s32 0, %v216
    %v218 = vrot.slane %v213, %v217
    %v220 = vadd.f32 %v211, %v218
    %v221 = vadd.f32 %v212, %v218
    %v222 = vmax.f32 %v220, 0.0
    %v223 = vmax.f32 %v221, 0.0
    %224 = vst [vmem:[%s3] sm:$0xff] %v222
    %225 = vst [vmem:[%s3 + $0x8] sm:$0xff] %v223
  $region21: #{vae_with_classifier_forward.14} parent=0 // pred_fallthru
    _
  // Predicated region
  $region22: #{vae_with_classifier_forward.14} parent=0 // pred_check
    _
  $region23: #{vae_with_classifier_forward.14} parent=0 // pred_check_branch
    %227 = sbr.rel (0) target = $region25
  $region24: #{vae_with_classifier_forward.14} parent=0 // pred_region
    _
  $region25: #{vae_with_classifier_forward.14} parent=0 // pred_fallthru
    _
  // Predicated region
  $region26: #{vae_with_classifier_forward.14} parent=0 // pred_check
    _
  $region27: #{vae_with_classifier_forward.14} parent=0 // pred_check_branch
    %229 = sbr.rel (0) target = $region29
  $region28: #{vae_with_classifier_forward.14} parent=0 // pred_region
    _
  $region29: #{vae_with_classifier_forward.14} parent=0 // pred_fallthru
    _

// kernel: vae_with_classifier_forward.20
$region0: #{vae_with_classifier_forward.20}
  #allocation0 [shape = 'u32[]', space=smem, size = 0x4, offset = 0x4, fixed_abs, tag = 'smem constant byte address 0x4 - core index']
  #allocation1 [shape = 'u32[144,128]{1,0:T(1,128)}', space=vmem, size = 0x12000, scoped, tag = 'internal scratch']
  #allocation2 [shape = 'f32[16,128]{1,0:T(8,128)}', space=vmem, size = 0x2000, scoped, tag = 'scratch operand']
  %s0 = inlined_call_operand.vmem [shape: bf16[16,128], index: 0, kind: input, shape index: {}]
  %s1 = inlined_call_operand.vmem [shape: bf16[128,128], index: 1, kind: input, shape index: {}]
  %s2 = inlined_call_operand.vmem [shape: f32[1,128], index: 2, kind: input, shape index: {}]
  %s3 = inlined_call_operand.vmem [shape: bf16[16,128], index: 3, kind: output, shape index: {}]
  %s4 = sld [smem:[#allocation0]]
  $region30: #{vae_with_classifier_forward.20} parent=0
    _
  %s6 = ssub.s32 1, %s4
  %s7 = scalar_select 0, %s6, %s4
  // Predicated region
  $region2: #{vae_with_classifier_forward.20} parent=0 // pred_check
    _
  $region3: #{vae_with_classifier_forward.20} parent=0 // pred_check_branch
    %9 = sbr.rel (0) target = $region5
  $region4: #{vae_with_classifier_forward.20} parent=0 // pred_region
    _
  $region5: #{vae_with_classifier_forward.20} parent=0 // pred_fallthru
    _
  // Predicated region
  $region6: #{vae_with_classifier_forward.20} parent=0 // pred_check
    _
  $region7: #{vae_with_classifier_forward.20} parent=0 // pred_check_branch
    %11 = sbr.rel (0) target = $region9
  $region8: #{vae_with_classifier_forward.20} parent=0 // pred_region
    _
  $region9: #{vae_with_classifier_forward.20} parent=0 // pred_fallthru
    _
  // Predicated region
  $region10: #{vae_with_classifier_forward.20} parent=0 // pred_check
    _
  $region11: #{vae_with_classifier_forward.20} parent=0 // pred_check_branch
    %13 = sbr.rel (0) target = $region13
  $region12: #{vae_with_classifier_forward.20} parent=0 // pred_region
    _
  $region13: #{vae_with_classifier_forward.20} parent=0 // pred_fallthru
    _
  %p15 = scmp.eq.s32.totalorder 0, 0
  // Predicated region
  $region14: #{vae_with_classifier_forward.20} parent=0 // pred_check
    %p16 = pneg %p15
  $region15: #{vae_with_classifier_forward.20} parent=0 // pred_check_branch
    %18 = sbr.rel (%p16) target = $region17
  $region16: #{vae_with_classifier_forward.20} parent=0 // pred_region
    %19 = vst [vmem:[#allocation2] sm:$0xff] 0.0
    %20 = vst [vmem:[#allocation2 + $0x8] sm:$0xff] 0.0
  $region17: #{vae_with_classifier_forward.20} parent=0 // pred_fallthru
    _
  %v21 = vld [vmem:[#allocation2] sm:$0xff]
  %v22 = vld [vmem:[#allocation2 + $0x8] sm:$0xff]
  %v23 = vld [vmem:[%s0] sm:$0xf]
  %v24 = vld [vmem:[%s0 + $0x4] sm:$0xf]
  %v25 = vld [vmem:[%s1] sm:$0xf]
  %v26 = vld [vmem:[%s1 + $0x4] sm:$0xf]
  %v27 = vld [vmem:[%s1 + $0x8] sm:$0xf]
  %v28 = vld [vmem:[%s1 + $0xc] sm:$0xf]
  %v29 = vld [vmem:[%s1 + $0x10] sm:$0xf]
  %v30 = vld [vmem:[%s1 + $0x14] sm:$0xf]
  %v31 = vld [vmem:[%s1 + $0x18] sm:$0xf]
  %v32 = vld [vmem:[%s1 + $0x1c] sm:$0xf]
  %v33 = vld [vmem:[%s1 + $0x20] sm:$0xf]
  %v34 = vld [vmem:[%s1 + $0x24] sm:$0xf]
  %v35 = vld [vmem:[%s1 + $0x28] sm:$0xf]
  %v36 = vld [vmem:[%s1 + $0x2c] sm:$0xf]
  %v37 = vld [vmem:[%s1 + $0x30] sm:$0xf]
  %v38 = vld [vmem:[%s1 + $0x34] sm:$0xf]
  %v39 = vld [vmem:[%s1 + $0x38] sm:$0xf]
  %v40 = vld [vmem:[%s1 + $0x3c] sm:$0xf]
  %v43 = vunpack.c.l.b16 %v23
  %v44 = vunpack.c.l.b16 %v24
  %v45 = vpack.c.b16 %v44, %v43
  %v63 = vunpack.c.l.b16 %v25
  %v64 = vunpack.c.l.b16 %v26
  %v65 = vunpack.c.l.b16 %v27
  %v66 = vunpack.c.l.b16 %v28
  %v67 = vunpack.c.l.b16 %v29
  %v68 = vunpack.c.l.b16 %v30
  %v69 = vunpack.c.l.b16 %v31
  %v70 = vunpack.c.l.b16 %v32
  %v71 = vunpack.c.l.b16 %v33
  %v72 = vunpack.c.l.b16 %v34
  %v73 = vunpack.c.l.b16 %v35
  %v74 = vunpack.c.l.b16 %v36
  %v75 = vunpack.c.l.b16 %v37
  %v76 = vunpack.c.l.b16 %v38
  %v77 = vunpack.c.l.b16 %v39
  %v78 = vunpack.c.l.b16 %v40
  %v79 = vpack.c.b16 %v64, %v63
  %v80 = vpack.c.b16 %v66, %v65
  %v81 = vpack.c.b16 %v68, %v67
  %v82 = vpack.c.b16 %v70, %v69
  %v83 = vpack.c.b16 %v72, %v71
  %v84 = vpack.c.b16 %v74, %v73
  %v85 = vpack.c.b16 %v76, %v75
  %v86 = vpack.c.b16 %v78, %v77
  %95 = vmatprep.subr.bf16.mxu0 0
  %96 = vmatpush1.bf16.msra.mxu0 %v86
  %97 = vmatprep.subr.bf16.mxu0 0
  %98 = vmatpush1.bf16.msra.mxu0 %v85
  %99 = vmatprep.subr.bf16.mxu0 0
  %100 = vmatpush1.bf16.msra.mxu0 %v84
  %101 = vmatprep.subr.bf16.mxu0 0
  %102 = vmatpush1.bf16.msra.mxu0 %v83
  %103 = vmatprep.subr.bf16.mxu0 0
  %104 = vmatpush1.bf16.msra.mxu0 %v82
  %105 = vmatprep.subr.bf16.mxu0 0
  %106 = vmatpush1.bf16.msra.mxu0 %v81
  %107 = vmatprep.subr.bf16.mxu0 0
  %108 = vmatpush1.bf16.msra.mxu0 %v80
  %109 = vmatprep.subr.bf16.mxu0 0
  %110 = vmatpush1.bf16.msra.mxu0 %v79
  %111 = vmatprep.subr.bf16.mxu0 0
  %112 = vmatpush2.bf16.msra.mxu0 0
  %113 = vmatprep.subr.bf16.mxu0 0
  %114 = vmatpush2.bf16.msra.mxu0 0
  %115 = vmatprep.subr.bf16.mxu0 0
  %116 = vmatpush2.bf16.msra.mxu0 0
  %117 = vmatprep.subr.bf16.mxu0 0
  %118 = vmatpush2.bf16.msra.mxu0 0
  %119 = vmatprep.subr.bf16.mxu0 0
  %120 = vmatpush2.bf16.msra.mxu0 0
  %121 = vmatprep.subr.bf16.mxu0 0
  %122 = vmatpush2.bf16.msra.mxu0 0
  %123 = vmatprep.subr.bf16.mxu0 0
  %124 = vmatpush2.bf16.msra.mxu0 0
  %125 = vmatprep.subr.bf16.mxu0 0
  %126 = vmatpush2.bf16.msra.mxu0 0
  %127 = vmatprep.mubr.bf16.mxu0 0
  %128 = vmatmul.mubr.bf16.gmra.mxu0 %v45
  %v129 = vpop.f32.mrf.mxu0
  %v130 = vadd.f32 0.0, %v129
  %v131 = vpop.f32.mrf.mxu0
  %v132 = vpop.f32.mrf.mxu0
  %v133 = vadd.f32 0.0, %v132
  %v134 = vpop.f32.mrf.mxu0
  %135 = vdwg.mxu0
  %v136 = vadd.f32 %v21, %v130
  %v137 = vadd.f32 %v22, %v133
  %138 = vst [vmem:[#allocation2] sm:$0xff] %v136
  %139 = vst [vmem:[#allocation2 + $0x8] sm:$0xff] %v137
  // Predicated region
  $region18: #{vae_with_classifier_forward.20} parent=0 // pred_check
    %p140 = pneg %p15
  $region19: #{vae_with_classifier_forward.20} parent=0 // pred_check_branch
    %142 = sbr.rel (%p140) target = $region21
  $region20: #{vae_with_classifier_forward.20} parent=0 // pred_region
    %v143 = vld [vmem:[#allocation2] sm:$0xff]
    %v144 = vld [vmem:[#allocation2 + $0x8] sm:$0xff]
    %v145 = vld [vmem:[%s2] sm:$0x1]
    %v147 = vlaneseq
    %v148 = vshrl.u32 %v147, 7
    %v149 = vsub.s32 0, %v148
    %v150 = vrot.slane %v145, %v149
    %v152 = vadd.f32 %v143, %v150
    %v153 = vadd.f32 %v144, %v150
    %v154 = vmax.f32 %v152, 0.0
    %v155 = vmax.f32 %v153, 0.0
    %v156 = vpack.c.bf16 %v155, %v154
    %v158 = vunpack.c.l.b16 %v156
    %v159 = vunpack.c.h.b16 %v156
    %v160 = vpack.c.b16 %v158, %v158
    %v161 = vpack.c.b16 %v159, %v159
    %164 = vst [vmem:[%s3] sm:$0xf] %v160
    %165 = vst [vmem:[%s3 + $0x4] sm:$0xf] %v161
  $region21: #{vae_with_classifier_forward.20} parent=0 // pred_fallthru
    _
  // Predicated region
  $region22: #{vae_with_classifier_forward.20} parent=0 // pred_check
    _
  $region23: #{vae_with_classifier_forward.20} parent=0 // pred_check_branch
    %167 = sbr.rel (0) target = $region25
  $region24: #{vae_with_classifier_forward.20} parent=0 // pred_region
    _
  $region25: #{vae_with_classifier_forward.20} parent=0 // pred_fallthru
    _
  // Predicated region
  $region26: #{vae_with_classifier_forward.20} parent=0 // pred_check
    _
  $region27: #{vae_with_classifier_forward.20} parent=0 // pred_check_branch
    %169 = sbr.rel (0) target = $region29
  $region28: #{vae_with_classifier_forward.20} parent=0 // pred_region
    _
  $region29: #{vae_with_classifier_forward.20} parent=0 // pred_fallthru
    _

// kernel: vae_with_classifier_forward.21
$region0: #{vae_with_classifier_forward.21}
  #allocation0 [shape = 'u32[]', space=smem, size = 0x4, offset = 0x4, fixed_abs, tag = 'smem constant byte address 0x4 - core index']
  #allocation1 [shape = 'u32[144,128]{1,0:T(1,128)}', space=vmem, size = 0x12000, scoped, tag = 'internal scratch']
  #allocation2 [shape = 'f32[16,128]{1,0:T(8,128)}', space=vmem, size = 0x2000, scoped, tag = 'scratch operand']
  %s0 = inlined_call_operand.vmem [shape: bf16[16,128], index: 0, kind: input, shape index: {}]
  %s1 = inlined_call_operand.vmem [shape: bf16[128,128], index: 1, kind: input, shape index: {}]
  %s2 = inlined_call_operand.vmem [shape: f32[1,128], index: 2, kind: input, shape index: {}]
  %s3 = inlined_call_operand.vmem [shape: f32[16,128], index: 3, kind: output, shape index: {}]
  %s4 = sld [smem:[#allocation0]]
  $region30: #{vae_with_classifier_forward.21} parent=0
    _
  %s6 = ssub.s32 1, %s4
  %s7 = scalar_select 0, %s6, %s4
  // Predicated region
  $region2: #{vae_with_classifier_forward.21} parent=0 // pred_check
    _
  $region3: #{vae_with_classifier_forward.21} parent=0 // pred_check_branch
    %9 = sbr.rel (0) target = $region5
  $region4: #{vae_with_classifier_forward.21} parent=0 // pred_region
    _
  $region5: #{vae_with_classifier_forward.21} parent=0 // pred_fallthru
    _
  // Predicated region
  $region6: #{vae_with_classifier_forward.21} parent=0 // pred_check
    _
  $region7: #{vae_with_classifier_forward.21} parent=0 // pred_check_branch
    %11 = sbr.rel (0) target = $region9
  $region8: #{vae_with_classifier_forward.21} parent=0 // pred_region
    _
  $region9: #{vae_with_classifier_forward.21} parent=0 // pred_fallthru
    _
  // Predicated region
  $region10: #{vae_with_classifier_forward.21} parent=0 // pred_check
    _
  $region11: #{vae_with_classifier_forward.21} parent=0 // pred_check_branch
    %13 = sbr.rel (0) target = $region13
  $region12: #{vae_with_classifier_forward.21} parent=0 // pred_region
    _
  $region13: #{vae_with_classifier_forward.21} parent=0 // pred_fallthru
    _
  %p15 = scmp.eq.s32.totalorder 0, 0
  // Predicated region
  $region14: #{vae_with_classifier_forward.21} parent=0 // pred_check
    %p16 = pneg %p15
  $region15: #{vae_with_classifier_forward.21} parent=0 // pred_check_branch
    %18 = sbr.rel (%p16) target = $region17
  $region16: #{vae_with_classifier_forward.21} parent=0 // pred_region
    %19 = vst [vmem:[#allocation2] sm:$0xff] 0.0
    %20 = vst [vmem:[#allocation2 + $0x8] sm:$0xff] 0.0
  $region17: #{vae_with_classifier_forward.21} parent=0 // pred_fallthru
    _
  %v21 = vld [vmem:[#allocation2] sm:$0xff]
  %v22 = vld [vmem:[#allocation2 + $0x8] sm:$0xff]
  %v23 = vld [vmem:[%s0] sm:$0xf]
  %v24 = vld [vmem:[%s0 + $0x4] sm:$0xf]
  %v25 = vld [vmem:[%s1] sm:$0xf]
  %v26 = vld [vmem:[%s1 + $0x4] sm:$0xf]
  %v27 = vld [vmem:[%s1 + $0x8] sm:$0xf]
  %v28 = vld [vmem:[%s1 + $0xc] sm:$0xf]
  %v29 = vld [vmem:[%s1 + $0x10] sm:$0xf]
  %v30 = vld [vmem:[%s1 + $0x14] sm:$0xf]
  %v31 = vld [vmem:[%s1 + $0x18] sm:$0xf]
  %v32 = vld [vmem:[%s1 + $0x1c] sm:$0xf]
  %v33 = vld [vmem:[%s1 + $0x20] sm:$0xf]
  %v34 = vld [vmem:[%s1 + $0x24] sm:$0xf]
  %v35 = vld [vmem:[%s1 + $0x28] sm:$0xf]
  %v36 = vld [vmem:[%s1 + $0x2c] sm:$0xf]
  %v37 = vld [vmem:[%s1 + $0x30] sm:$0xf]
  %v38 = vld [vmem:[%s1 + $0x34] sm:$0xf]
  %v39 = vld [vmem:[%s1 + $0x38] sm:$0xf]
  %v40 = vld [vmem:[%s1 + $0x3c] sm:$0xf]
  %v43 = vunpack.c.l.b16 %v23
  %v44 = vunpack.c.l.b16 %v24
  %v45 = vpack.c.b16 %v44, %v43
  %v63 = vunpack.c.l.b16 %v25
  %v64 = vunpack.c.l.b16 %v26
  %v65 = vunpack.c.l.b16 %v27
  %v66 = vunpack.c.l.b16 %v28
  %v67 = vunpack.c.l.b16 %v29
  %v68 = vunpack.c.l.b16 %v30
  %v69 = vunpack.c.l.b16 %v31
  %v70 = vunpack.c.l.b16 %v32
  %v71 = vunpack.c.l.b16 %v33
  %v72 = vunpack.c.l.b16 %v34
  %v73 = vunpack.c.l.b16 %v35
  %v74 = vunpack.c.l.b16 %v36
  %v75 = vunpack.c.l.b16 %v37
  %v76 = vunpack.c.l.b16 %v38
  %v77 = vunpack.c.l.b16 %v39
  %v78 = vunpack.c.l.b16 %v40
  %v79 = vpack.c.b16 %v64, %v63
  %v80 = vpack.c.b16 %v66, %v65
  %v81 = vpack.c.b16 %v68, %v67
  %v82 = vpack.c.b16 %v70, %v69
  %v83 = vpack.c.b16 %v72, %v71
  %v84 = vpack.c.b16 %v74, %v73
  %v85 = vpack.c.b16 %v76, %v75
  %v86 = vpack.c.b16 %v78, %v77
  %95 = vmatprep.subr.bf16.mxu0 0
  %96 = vmatpush1.bf16.msra.mxu0 %v86
  %97 = vmatprep.subr.bf16.mxu0 0
  %98 = vmatpush1.bf16.msra.mxu0 %v85
  %99 = vmatprep.subr.bf16.mxu0 0
  %100 = vmatpush1.bf16.msra.mxu0 %v84
  %101 = vmatprep.subr.bf16.mxu0 0
  %102 = vmatpush1.bf16.msra.mxu0 %v83
  %103 = vmatprep.subr.bf16.mxu0 0
  %104 = vmatpush1.bf16.msra.mxu0 %v82
  %105 = vmatprep.subr.bf16.mxu0 0
  %106 = vmatpush1.bf16.msra.mxu0 %v81
  %107 = vmatprep.subr.bf16.mxu0 0
  %108 = vmatpush1.bf16.msra.mxu0 %v80
  %109 = vmatprep.subr.bf16.mxu0 0
  %110 = vmatpush1.bf16.msra.mxu0 %v79
  %111 = vmatprep.subr.bf16.mxu0 0
  %112 = vmatpush2.bf16.msra.mxu0 0
  %113 = vmatprep.subr.bf16.mxu0 0
  %114 = vmatpush2.bf16.msra.mxu0 0
  %115 = vmatprep.subr.bf16.mxu0 0
  %116 = vmatpush2.bf16.msra.mxu0 0
  %117 = vmatprep.subr.bf16.mxu0 0
  %118 = vmatpush2.bf16.msra.mxu0 0
  %119 = vmatprep.subr.bf16.mxu0 0
  %120 = vmatpush2.bf16.msra.mxu0 0
  %121 = vmatprep.subr.bf16.mxu0 0
  %122 = vmatpush2.bf16.msra.mxu0 0
  %123 = vmatprep.subr.bf16.mxu0 0
  %124 = vmatpush2.bf16.msra.mxu0 0
  %125 = vmatprep.subr.bf16.mxu0 0
  %126 = vmatpush2.bf16.msra.mxu0 0
  %127 = vmatprep.mubr.bf16.mxu0 0
  %128 = vmatmul.mubr.bf16.gmra.mxu0 %v45
  %v129 = vpop.f32.mrf.mxu0
  %v130 = vadd.f32 0.0, %v129
  %v131 = vpop.f32.mrf.mxu0
  %v132 = vpop.f32.mrf.mxu0
  %v133 = vadd.f32 0.0, %v132
  %v134 = vpop.f32.mrf.mxu0
  %135 = vdwg.mxu0
  %v136 = vadd.f32 %v21, %v130
  %v137 = vadd.f32 %v22, %v133
  %138 = vst [vmem:[#allocation2] sm:$0xff] %v136
  %139 = vst [vmem:[#allocation2 + $0x8] sm:$0xff] %v137
  // Predicated region
  $region18: #{vae_with_classifier_forward.21} parent=0 // pred_check
    %p140 = pneg %p15
  $region19: #{vae_with_classifier_forward.21} parent=0 // pred_check_branch
    %142 = sbr.rel (%p140) target = $region21
  $region20: #{vae_with_classifier_forward.21} parent=0 // pred_region
    %v143 = vld [vmem:[#allocation2] sm:$0xff]
    %v144 = vld [vmem:[#allocation2 + $0x8] sm:$0xff]
    %v145 = vld [vmem:[%s2] sm:$0x1]
    %v147 = vlaneseq
    %v148 = vshrl.u32 %v147, 7
    %v149 = vsub.s32 0, %v148
    %v150 = vrot.slane %v145, %v149
    %v152 = vadd.f32 %v143, %v150
    %v153 = vadd.f32 %v144, %v150
    %154 = vst [vmem:[%s3] sm:$0xff] %v152
    %155 = vst [vmem:[%s3 + $0x8] sm:$0xff] %v153
  $region21: #{vae_with_classifier_forward.21} parent=0 // pred_fallthru
    _
  // Predicated region
  $region22: #{vae_with_classifier_forward.21} parent=0 // pred_check
    _
  $region23: #{vae_with_classifier_forward.21} parent=0 // pred_check_branch
    %157 = sbr.rel (0) target = $region25
  $region24: #{vae_with_classifier_forward.21} parent=0 // pred_region
    _
  $region25: #{vae_with_classifier_forward.21} parent=0 // pred_fallthru
    _
  // Predicated region
  $region26: #{vae_with_classifier_forward.21} parent=0 // pred_check
    _
  $region27: #{vae_with_classifier_forward.21} parent=0 // pred_check_branch
    %159 = sbr.rel (0) target = $region29
  $region28: #{vae_with_classifier_forward.21} parent=0 // pred_region
    _
  $region29: #{vae_with_classifier_forward.21} parent=0 // pred_fallthru
    _

// kernel: vae_with_classifier_forward.15
$region0: #{vae_with_classifier_forward.15}
  #allocation0 [shape = 'u32[]', space=smem, size = 0x4, offset = 0x4, fixed_abs, tag = 'smem constant byte address 0x4 - core index']
  #allocation1 [shape = 'u32[144,128]{1,0:T(1,128)}', space=vmem, size = 0x12000, scoped, tag = 'internal scratch']
  %s0 = inlined_call_operand.vmem [shape: bf16[16,128], index: 0, kind: input, shape index: {}]
  %s1 = inlined_call_operand.vmem [shape: bf16[128,256], index: 1, kind: input, shape index: {}]
  %s2 = inlined_call_operand.vmem [shape: f32[1,256], index: 2, kind: input, shape index: {}]
  %s3 = inlined_call_operand.vmem [shape: f32[16,128], index: 3, kind: input, shape index: {}]
  %s4 = inlined_call_operand.vmem [shape: f32[16,128], index: 4, kind: output, shape index: {0}]
  %s5 = inlined_call_operand.vmem [shape: f32[16,128], index: 5, kind: output, shape index: {1}]
  %s6 = inlined_call_operand.vmem [shape: bf16[16,128], index: 6, kind: output, shape index: {2}]
  %7 = xla_tuple %s4, %s5, %s6
  %s8 = sld [smem:[#allocation0]]
  $region42: #{vae_with_classifier_forward.15} parent=0
    _
  %s10 = ssub.s32 1, %s8
  %s11 = scalar_select 0, %s10, %s8
  // Predicated region
  $region2: #{vae_with_classifier_forward.15} parent=0 // pred_check
    _
  $region3: #{vae_with_classifier_forward.15} parent=0 // pred_check_branch
    %13 = sbr.rel (0) target = $region5
  $region4: #{vae_with_classifier_forward.15} parent=0 // pred_region
    _
  $region5: #{vae_with_classifier_forward.15} parent=0 // pred_fallthru
    _
  // Predicated region
  $region6: #{vae_with_classifier_forward.15} parent=0 // pred_check
    _
  $region7: #{vae_with_classifier_forward.15} parent=0 // pred_check_branch
    %15 = sbr.rel (0) target = $region9
  $region8: #{vae_with_classifier_forward.15} parent=0 // pred_region
    _
  $region9: #{vae_with_classifier_forward.15} parent=0 // pred_fallthru
    _
  // Predicated region
  $region10: #{vae_with_classifier_forward.15} parent=0 // pred_check
    _
  $region11: #{vae_with_classifier_forward.15} parent=0 // pred_check_branch
    %17 = sbr.rel (0) target = $region13
  $region12: #{vae_with_classifier_forward.15} parent=0 // pred_region
    _
  $region13: #{vae_with_classifier_forward.15} parent=0 // pred_fallthru
    _
  // Predicated region
  $region14: #{vae_with_classifier_forward.15} parent=0 // pred_check
    _
  $region15: #{vae_with_classifier_forward.15} parent=0 // pred_check_branch
    %19 = sbr.rel (0) target = $region17
  $region16: #{vae_with_classifier_forward.15} parent=0 // pred_region
    _
  $region17: #{vae_with_classifier_forward.15} parent=0 // pred_fallthru
    _
  %v21 = vld [vmem:[%s0] sm:$0xf]
  %v22 = vld [vmem:[%s0 + $0x4] sm:$0xf]
  %v23 = vld [vmem:[%s1] sm:$0xff]
  %v24 = vld [vmem:[%s1 + $0x8] sm:$0xff]
  %v25 = vld [vmem:[%s1 + $0x10] sm:$0xff]
  %v26 = vld [vmem:[%s1 + $0x18] sm:$0xff]
  %v27 = vld [vmem:[%s1 + $0x20] sm:$0xff]
  %v28 = vld [vmem:[%s1 + $0x28] sm:$0xff]
  %v29 = vld [vmem:[%s1 + $0x30] sm:$0xff]
  %v30 = vld [vmem:[%s1 + $0x38] sm:$0xff]
  %v31 = vld [vmem:[%s1 + $0x40] sm:$0xff]
  %v32 = vld [vmem:[%s1 + $0x48] sm:$0xff]
  %v33 = vld [vmem:[%s1 + $0x50] sm:$0xff]
  %v34 = vld [vmem:[%s1 + $0x58] sm:$0xff]
  %v35 = vld [vmem:[%s1 + $0x60] sm:$0xff]
  %v36 = vld [vmem:[%s1 + $0x68] sm:$0xff]
  %v37 = vld [vmem:[%s1 + $0x70] sm:$0xff]
  %v38 = vld [vmem:[%s1 + $0x78] sm:$0xff]
  %v39 = vld [vmem:[%s2] sm:$0x3]
  %v41 = vlaneseq
  %v42 = vshrl.u32 %v41, 7
  %v43 = vsub.s32 0, %v42
  %v44 = vrot.slane %v39, %v43
  %v45 = vlaneseq
  %v46 = vshrl.u32 %v45, 7
  %v47 = vsub.s32 1, %v46
  %v48 = vrot.slane %v39, %v47
  %v53 = vunpack.c.l.b16 %v21
  %v54 = vunpack.c.l.b16 %v22
  %v55 = vpack.c.b16 %v54, %v53
  %v73 = vunpack.c.l.b16 %v23
  %v74 = vunpack.c.h.b16 %v23
  %v75 = vunpack.c.l.b16 %v24
  %v76 = vunpack.c.h.b16 %v24
  %v77 = vunpack.c.l.b16 %v25
  %v78 = vunpack.c.h.b16 %v25
  %v79 = vunpack.c.l.b16 %v26
  %v80 = vunpack.c.h.b16 %v26
  %v81 = vunpack.c.l.b16 %v27
  %v82 = vunpack.c.h.b16 %v27
  %v83 = vunpack.c.l.b16 %v28
  %v84 = vunpack.c.h.b16 %v28
  %v85 = vunpack.c.l.b16 %v29
  %v86 = vunpack.c.h.b16 %v29
  %v87 = vunpack.c.l.b16 %v30
  %v88 = vunpack.c.h.b16 %v30
  %v89 = vunpack.c.l.b16 %v31
  %v90 = vunpack.c.h.b16 %v31
  %v91 = vunpack.c.l.b16 %v32
  %v92 = vunpack.c.h.b16 %v32
  %v93 = vunpack.c.l.b16 %v33
  %v94 = vunpack.c.h.b16 %v33
  %v95 = vunpack.c.l.b16 %v34
  %v96 = vunpack.c.h.b16 %v34
  %v97 = vunpack.c.l.b16 %v35
  %v98 = vunpack.c.h.b16 %v35
  %v99 = vunpack.c.l.b16 %v36
  %v100 = vunpack.c.h.b16 %v36
  %v101 = vunpack.c.l.b16 %v37
  %v102 = vunpack.c.h.b16 %v37
  %v103 = vunpack.c.l.b16 %v38
  %v104 = vunpack.c.h.b16 %v38
  %v105 = vpack.c.b16 %v75, %v73
  %v106 = vpack.c.b16 %v76, %v74
  %v107 = vpack.c.b16 %v79, %v77
  %v108 = vpack.c.b16 %v80, %v78
  %v109 = vpack.c.b16 %v83, %v81
  %v110 = vpack.c.b16 %v84, %v82
  %v111 = vpack.c.b16 %v87, %v85
  %v112 = vpack.c.b16 %v88, %v86
  %v113 = vpack.c.b16 %v91, %v89
  %v114 = vpack.c.b16 %v92, %v90
  %v115 = vpack.c.b16 %v95, %v93
  %v116 = vpack.c.b16 %v96, %v94
  %v117 = vpack.c.b16 %v99, %v97
  %v118 = vpack.c.b16 %v100, %v98
  %v119 = vpack.c.b16 %v103, %v101
  %v120 = vpack.c.b16 %v104, %v102
  %137 = vmatprep.subr.bf16.mxu0 %v120
  %138 = vmatpush1.bf16.msra.mxu0 %v119
  %139 = vmatprep.subr.bf16.mxu0 %v118
  %140 = vmatpush1.bf16.msra.mxu0 %v117
  %141 = vmatprep.subr.bf16.mxu0 %v116
  %142 = vmatpush1.bf16.msra.mxu0 %v115
  %143 = vmatprep.subr.bf16.mxu0 %v114
  %144 = vmatpush1.bf16.msra.mxu0 %v113
  %145 = vmatprep.subr.bf16.mxu0 %v112
  %146 = vmatpush1.bf16.msra.mxu0 %v111
  %147 = vmatprep.subr.bf16.mxu0 %v110
  %148 = vmatpush1.bf16.msra.mxu0 %v109
  %149 = vmatprep.subr.bf16.mxu0 %v108
  %150 = vmatpush1.bf16.msra.mxu0 %v107
  %151 = vmatprep.subr.bf16.mxu0 %v106
  %152 = vmatpush1.bf16.msra.mxu0 %v105
  %153 = vmatprep.subr.bf16.mxu0 0
  %154 = vmatpush2.bf16.msra.mxu0 0
  %155 = vmatprep.subr.bf16.mxu0 0
  %156 = vmatpush2.bf16.msra.mxu0 0
  %157 = vmatprep.subr.bf16.mxu0 0
  %158 = vmatpush2.bf16.msra.mxu0 0
  %159 = vmatprep.subr.bf16.mxu0 0
  %160 = vmatpush2.bf16.msra.mxu0 0
  %161 = vmatprep.subr.bf16.mxu0 0
  %162 = vmatpush2.bf16.msra.mxu0 0
  %163 = vmatprep.subr.bf16.mxu0 0
  %164 = vmatpush2.bf16.msra.mxu0 0
  %165 = vmatprep.subr.bf16.mxu0 0
  %166 = vmatpush2.bf16.msra.mxu0 0
  %167 = vmatprep.subr.bf16.mxu0 0
  %168 = vmatpush2.bf16.msra.mxu0 0
  %169 = vmatprep.mubr.bf16.mxu0 0
  %170 = vmatmul.mubr.bf16.gmra.mxu0 %v55
  %v171 = vpop.f32.mrf.mxu0
  %v172 = vadd.f32 %v44, %v171
  %v173 = vpop.f32.mrf.mxu0
  %v174 = vadd.f32 %v48, %v173
  %v175 = vpop.f32.mrf.mxu0
  %v176 = vadd.f32 %v44, %v175
  %v177 = vpop.f32.mrf.mxu0
  %v178 = vadd.f32 %v48, %v177
  %179 = vdwg.mxu0
  %v180 = vmax.f32 %v174, -5.0
  %v181 = vmax.f32 %v178, -5.0
  %v182 = vmin.f32 %v180, 5.0
  %v183 = vmin.f32 %v181, 5.0
  %184 = vst [vmem:[%s4] sm:$0xff] %v172
  %185 = vst [vmem:[%s4 + $0x8] sm:$0xff] %v176
  %186 = vst [vmem:[%s5] sm:$0xff] %v182
  %187 = vst [vmem:[%s5 + $0x8] sm:$0xff] %v183
  %v188 = vld [vmem:[%s3] sm:$0xff]
  %v189 = vld [vmem:[%s3 + $0x8] sm:$0xff]
  %v190 = vmul.f32 %v182, 0.5
  %v191 = vmul.f32 %v183, 0.5
  %v192 = vmul.f32 %v190, 1.442695
  %v193 = vpow.pop %v192
  %v194 = vmul.f32 %v191, 1.442695
  %v195 = vpow.pop %v194
  %v196 = vmul.f32 %v188, %v193
  %v197 = vmul.f32 %v189, %v195
  %v198 = vadd.f32 %v172, %v196
  %v199 = vadd.f32 %v176, %v197
  %v200 = vpack.c.bf16 %v199, %v198
  %v202 = vunpack.c.l.b16 %v200
  %v203 = vunpack.c.h.b16 %v200
  %v204 = vpack.c.b16 %v202, %v202
  %v205 = vpack.c.b16 %v203, %v203
  %208 = vst [vmem:[%s6] sm:$0xf] %v204
  %209 = vst [vmem:[%s6 + $0x4] sm:$0xf] %v205
  // Predicated region
  $region18: #{vae_with_classifier_forward.15} parent=0 // pred_check
    _
  $region19: #{vae_with_classifier_forward.15} parent=0 // pred_check_branch
    %211 = sbr.rel (0) target = $region21
  $region20: #{vae_with_classifier_forward.15} parent=0 // pred_region
    _
  $region21: #{vae_with_classifier_forward.15} parent=0 // pred_fallthru
    _
  // Predicated region
  $region22: #{vae_with_classifier_forward.15} parent=0 // pred_check
    _
  $region23: #{vae_with_classifier_forward.15} parent=0 // pred_check_branch
    %213 = sbr.rel (0) target = $region25
  $region24: #{vae_with_classifier_forward.15} parent=0 // pred_region
    _
  $region25: #{vae_with_classifier_forward.15} parent=0 // pred_fallthru
    _
  // Predicated region
  $region26: #{vae_with_classifier_forward.15} parent=0 // pred_check
    _
  $region27: #{vae_with_classifier_forward.15} parent=0 // pred_check_branch
    %215 = sbr.rel (0) target = $region29
  $region28: #{vae_with_classifier_forward.15} parent=0 // pred_region
    _
  $region29: #{vae_with_classifier_forward.15} parent=0 // pred_fallthru
    _
  // Predicated region
  $region30: #{vae_with_classifier_forward.15} parent=0 // pred_check
    _
  $region31: #{vae_with_classifier_forward.15} parent=0 // pred_check_branch
    %217 = sbr.rel (0) target = $region33
  $region32: #{vae_with_classifier_forward.15} parent=0 // pred_region
    _
  $region33: #{vae_with_classifier_forward.15} parent=0 // pred_fallthru
    _
  // Predicated region
  $region34: #{vae_with_classifier_forward.15} parent=0 // pred_check
    _
  $region35: #{vae_with_classifier_forward.15} parent=0 // pred_check_branch
    %219 = sbr.rel (0) target = $region37
  $region36: #{vae_with_classifier_forward.15} parent=0 // pred_region
    _
  $region37: #{vae_with_classifier_forward.15} parent=0 // pred_fallthru
    _
  // Predicated region
  $region38: #{vae_with_classifier_forward.15} parent=0 // pred_check
    _
  $region39: #{vae_with_classifier_forward.15} parent=0 // pred_check_branch
    %221 = sbr.rel (0) target = $region41
  $region40: #{vae_with_classifier_forward.15} parent=0 // pred_region
    _
  $region41: #{vae_with_classifier_forward.15} parent=0 // pred_fallthru
    _

// kernel: vae_with_classifier_forward.16
$region0: #{vae_with_classifier_forward.16}
  #allocation0 [shape = 'u32[]', space=smem, size = 0x4, offset = 0x4, fixed_abs, tag = 'smem constant byte address 0x4 - core index']
  #allocation1 [shape = 'u32[144,128]{1,0:T(1,128)}', space=vmem, size = 0x12000, scoped, tag = 'internal scratch']
  #allocation2 [shape = 'f32[16,256]{1,0:T(8,128)}', space=vmem, size = 0x4000, scoped, tag = 'scratch operand']
  %s0 = inlined_call_operand.vmem [shape: bf16[16,128], index: 0, kind: input, shape index: {}]
  %s1 = inlined_call_operand.vmem [shape: bf16[128,256], index: 1, kind: input, shape index: {}]
  %s2 = inlined_call_operand.vmem [shape: f32[1,256], index: 2, kind: input, shape index: {}]
  %s3 = inlined_call_operand.vmem [shape: bf16[16,256], index: 3, kind: output, shape index: {}]
  %s4 = sld [smem:[#allocation0]]
  $region30: #{vae_with_classifier_forward.16} parent=0
    _
  %s6 = ssub.s32 1, %s4
  %s7 = scalar_select 0, %s6, %s4
  // Predicated region
  $region2: #{vae_with_classifier_forward.16} parent=0 // pred_check
    _
  $region3: #{vae_with_classifier_forward.16} parent=0 // pred_check_branch
    %9 = sbr.rel (0) target = $region5
  $region4: #{vae_with_classifier_forward.16} parent=0 // pred_region
    _
  $region5: #{vae_with_classifier_forward.16} parent=0 // pred_fallthru
    _
  // Predicated region
  $region6: #{vae_with_classifier_forward.16} parent=0 // pred_check
    _
  $region7: #{vae_with_classifier_forward.16} parent=0 // pred_check_branch
    %11 = sbr.rel (0) target = $region9
  $region8: #{vae_with_classifier_forward.16} parent=0 // pred_region
    _
  $region9: #{vae_with_classifier_forward.16} parent=0 // pred_fallthru
    _
  // Predicated region
  $region10: #{vae_with_classifier_forward.16} parent=0 // pred_check
    _
  $region11: #{vae_with_classifier_forward.16} parent=0 // pred_check_branch
    %13 = sbr.rel (0) target = $region13
  $region12: #{vae_with_classifier_forward.16} parent=0 // pred_region
    _
  $region13: #{vae_with_classifier_forward.16} parent=0 // pred_fallthru
    _
  %p15 = scmp.eq.s32.totalorder 0, 0
  // Predicated region
  $region14: #{vae_with_classifier_forward.16} parent=0 // pred_check
    %p16 = pneg %p15
  $region15: #{vae_with_classifier_forward.16} parent=0 // pred_check_branch
    %18 = sbr.rel (%p16) target = $region17
  $region16: #{vae_with_classifier_forward.16} parent=0 // pred_region
    %19 = vst [vmem:[#allocation2] sm:$0xff] 0.0
    %20 = vst [vmem:[#allocation2 + $0x8] sm:$0xff] 0.0
    %21 = vst [vmem:[#allocation2 + $0x10] sm:$0xff] 0.0
    %22 = vst [vmem:[#allocation2 + $0x18] sm:$0xff] 0.0
  $region17: #{vae_with_classifier_forward.16} parent=0 // pred_fallthru
    _
  %v23 = vld [vmem:[#allocation2] sm:$0xff]
  %v24 = vld [vmem:[#allocation2 + $0x8] sm:$0xff]
  %v25 = vld [vmem:[#allocation2 + $0x10] sm:$0xff]
  %v26 = vld [vmem:[#allocation2 + $0x18] sm:$0xff]
  %v27 = vld [vmem:[%s0] sm:$0xf]
  %v28 = vld [vmem:[%s0 + $0x4] sm:$0xf]
  %v29 = vld [vmem:[%s1] sm:$0xff]
  %v30 = vld [vmem:[%s1 + $0x8] sm:$0xff]
  %v31 = vld [vmem:[%s1 + $0x10] sm:$0xff]
  %v32 = vld [vmem:[%s1 + $0x18] sm:$0xff]
  %v33 = vld [vmem:[%s1 + $0x20] sm:$0xff]
  %v34 = vld [vmem:[%s1 + $0x28] sm:$0xff]
  %v35 = vld [vmem:[%s1 + $0x30] sm:$0xff]
  %v36 = vld [vmem:[%s1 + $0x38] sm:$0xff]
  %v37 = vld [vmem:[%s1 + $0x40] sm:$0xff]
  %v38 = vld [vmem:[%s1 + $0x48] sm:$0xff]
  %v39 = vld [vmem:[%s1 + $0x50] sm:$0xff]
  %v40 = vld [vmem:[%s1 + $0x58] sm:$0xff]
  %v41 = vld [vmem:[%s1 + $0x60] sm:$0xff]
  %v42 = vld [vmem:[%s1 + $0x68] sm:$0xff]
  %v43 = vld [vmem:[%s1 + $0x70] sm:$0xff]
  %v44 = vld [vmem:[%s1 + $0x78] sm:$0xff]
  %v47 = vunpack.c.l.b16 %v27
  %v48 = vunpack.c.l.b16 %v28
  %v49 = vpack.c.b16 %v48, %v47
  %v67 = vunpack.c.l.b16 %v29
  %v68 = vunpack.c.h.b16 %v29
  %v69 = vunpack.c.l.b16 %v30
  %v70 = vunpack.c.h.b16 %v30
  %v71 = vunpack.c.l.b16 %v31
  %v72 = vunpack.c.h.b16 %v31
  %v73 = vunpack.c.l.b16 %v32
  %v74 = vunpack.c.h.b16 %v32
  %v75 = vunpack.c.l.b16 %v33
  %v76 = vunpack.c.h.b16 %v33
  %v77 = vunpack.c.l.b16 %v34
  %v78 = vunpack.c.h.b16 %v34
  %v79 = vunpack.c.l.b16 %v35
  %v80 = vunpack.c.h.b16 %v35
  %v81 = vunpack.c.l.b16 %v36
  %v82 = vunpack.c.h.b16 %v36
  %v83 = vunpack.c.l.b16 %v37
  %v84 = vunpack.c.h.b16 %v37
  %v85 = vunpack.c.l.b16 %v38
  %v86 = vunpack.c.h.b16 %v38
  %v87 = vunpack.c.l.b16 %v39
  %v88 = vunpack.c.h.b16 %v39
  %v89 = vunpack.c.l.b16 %v40
  %v90 = vunpack.c.h.b16 %v40
  %v91 = vunpack.c.l.b16 %v41
  %v92 = vunpack.c.h.b16 %v41
  %v93 = vunpack.c.l.b16 %v42
  %v94 = vunpack.c.h.b16 %v42
  %v95 = vunpack.c.l.b16 %v43
  %v96 = vunpack.c.h.b16 %v43
  %v97 = vunpack.c.l.b16 %v44
  %v98 = vunpack.c.h.b16 %v44
  %v99 = vpack.c.b16 %v69, %v67
  %v100 = vpack.c.b16 %v70, %v68
  %v101 = vpack.c.b16 %v73, %v71
  %v102 = vpack.c.b16 %v74, %v72
  %v103 = vpack.c.b16 %v77, %v75
  %v104 = vpack.c.b16 %v78, %v76
  %v105 = vpack.c.b16 %v81, %v79
  %v106 = vpack.c.b16 %v82, %v80
  %v107 = vpack.c.b16 %v85, %v83
  %v108 = vpack.c.b16 %v86, %v84
  %v109 = vpack.c.b16 %v89, %v87
  %v110 = vpack.c.b16 %v90, %v88
  %v111 = vpack.c.b16 %v93, %v91
  %v112 = vpack.c.b16 %v94, %v92
  %v113 = vpack.c.b16 %v97, %v95
  %v114 = vpack.c.b16 %v98, %v96
  %131 = vmatprep.subr.bf16.mxu0 %v114
  %132 = vmatpush1.bf16.msra.mxu0 %v113
  %133 = vmatprep.subr.bf16.mxu0 %v112
  %134 = vmatpush1.bf16.msra.mxu0 %v111
  %135 = vmatprep.subr.bf16.mxu0 %v110
  %136 = vmatpush1.bf16.msra.mxu0 %v109
  %137 = vmatprep.subr.bf16.mxu0 %v108
  %138 = vmatpush1.bf16.msra.mxu0 %v107
  %139 = vmatprep.subr.bf16.mxu0 %v106
  %140 = vmatpush1.bf16.msra.mxu0 %v105
  %141 = vmatprep.subr.bf16.mxu0 %v104
  %142 = vmatpush1.bf16.msra.mxu0 %v103
  %143 = vmatprep.subr.bf16.mxu0 %v102
  %144 = vmatpush1.bf16.msra.mxu0 %v101
  %145 = vmatprep.subr.bf16.mxu0 %v100
  %146 = vmatpush1.bf16.msra.mxu0 %v99
  %147 = vmatprep.subr.bf16.mxu0 0
  %148 = vmatpush2.bf16.msra.mxu0 0
  %149 = vmatprep.subr.bf16.mxu0 0
  %150 = vmatpush2.bf16.msra.mxu0 0
  %151 = vmatprep.subr.bf16.mxu0 0
  %152 = vmatpush2.bf16.msra.mxu0 0
  %153 = vmatprep.subr.bf16.mxu0 0
  %154 = vmatpush2.bf16.msra.mxu0 0
  %155 = vmatprep.subr.bf16.mxu0 0
  %156 = vmatpush2.bf16.msra.mxu0 0
  %157 = vmatprep.subr.bf16.mxu0 0
  %158 = vmatpush2.bf16.msra.mxu0 0
  %159 = vmatprep.subr.bf16.mxu0 0
  %160 = vmatpush2.bf16.msra.mxu0 0
  %161 = vmatprep.subr.bf16.mxu0 0
  %162 = vmatpush2.bf16.msra.mxu0 0
  %163 = vmatprep.mubr.bf16.mxu0 0
  %164 = vmatmul.mubr.bf16.gmra.mxu0 %v49
  %v165 = vpop.f32.mrf.mxu0
  %v166 = vadd.f32 0.0, %v165
  %v167 = vpop.f32.mrf.mxu0
  %v168 = vadd.f32 0.0, %v167
  %v169 = vpop.f32.mrf.mxu0
  %v170 = vadd.f32 0.0, %v169
  %v171 = vpop.f32.mrf.mxu0
  %v172 = vadd.f32 0.0, %v171
  %173 = vdwg.mxu0
  %v174 = vadd.f32 %v23, %v166
  %v175 = vadd.f32 %v24, %v168
  %v176 = vadd.f32 %v25, %v170
  %v177 = vadd.f32 %v26, %v172
  %178 = vst [vmem:[#allocation2] sm:$0xff] %v174
  %179 = vst [vmem:[#allocation2 + $0x8] sm:$0xff] %v175
  %180 = vst [vmem:[#allocation2 + $0x10] sm:$0xff] %v176
  %181 = vst [vmem:[#allocation2 + $0x18] sm:$0xff] %v177
  // Predicated region
  $region18: #{vae_with_classifier_forward.16} parent=0 // pred_check
    %p182 = pneg %p15
  $region19: #{vae_with_classifier_forward.16} parent=0 // pred_check_branch
    %184 = sbr.rel (%p182) target = $region21
  $region20: #{vae_with_classifier_forward.16} parent=0 // pred_region
    %v185 = vld [vmem:[#allocation2] sm:$0xff]
    %v186 = vld [vmem:[#allocation2 + $0x8] sm:$0xff]
    %v187 = vld [vmem:[#allocation2 + $0x10] sm:$0xff]
    %v188 = vld [vmem:[#allocation2 + $0x18] sm:$0xff]
    %v189 = vld [vmem:[%s2] sm:$0x3]
    %v191 = vlaneseq
    %v192 = vshrl.u32 %v191, 7
    %v193 = vsub.s32 0, %v192
    %v194 = vrot.slane %v189, %v193
    %v195 = vlaneseq
    %v196 = vshrl.u32 %v195, 7
    %v197 = vsub.s32 1, %v196
    %v198 = vrot.slane %v189, %v197
    %v201 = vadd.f32 %v185, %v194
    %v202 = vadd.f32 %v186, %v198
    %v203 = vadd.f32 %v187, %v194
    %v204 = vadd.f32 %v188, %v198
    %v205 = vmax.f32 %v201, 0.0
    %v206 = vmax.f32 %v202, 0.0
    %v207 = vmax.f32 %v203, 0.0
    %v208 = vmax.f32 %v204, 0.0
    %v209 = vpack.c.bf16 %v207, %v205
    %v210 = vpack.c.bf16 %v208, %v206
    %v213 = vunpack.c.l.b16 %v209
    %v214 = vunpack.c.l.b16 %v210
    %v215 = vunpack.c.h.b16 %v209
    %v216 = vunpack.c.h.b16 %v210
    %v217 = vpack.c.b16 %v214, %v213
    %v218 = vpack.c.b16 %v216, %v215
    %221 = vst [vmem:[%s3] sm:$0xff] %v217
    %222 = vst [vmem:[%s3 + $0x8] sm:$0xff] %v218
  $region21: #{vae_with_classifier_forward.16} parent=0 // pred_fallthru
    _
  // Predicated region
  $region22: #{vae_with_classifier_forward.16} parent=0 // pred_check
    _
  $region23: #{vae_with_classifier_forward.16} parent=0 // pred_check_branch
    %224 = sbr.rel (0) target = $region25
  $region24: #{vae_with_classifier_forward.16} parent=0 // pred_region
    _
  $region25: #{vae_with_classifier_forward.16} parent=0 // pred_fallthru
    _
  // Predicated region
  $region26: #{vae_with_classifier_forward.16} parent=0 // pred_check
    _
  $region27: #{vae_with_classifier_forward.16} parent=0 // pred_check_branch
    %226 = sbr.rel (0) target = $region29
  $region28: #{vae_with_classifier_forward.16} parent=0 // pred_region
    _
  $region29: #{vae_with_classifier_forward.16} parent=0 // pred_fallthru
    _

// kernel: vae_with_classifier_forward.17
$region0: #{vae_with_classifier_forward.17}
  #allocation0 [shape = 'u32[]', space=smem, size = 0x4, offset = 0x4, fixed_abs, tag = 'smem constant byte address 0x4 - core index']
  #allocation1 [shape = 'u32[144,128]{1,0:T(1,128)}', space=vmem, size = 0x12000, scoped, tag = 'internal scratch']
  #allocation2 [shape = 'f32[16,384]{1,0:T(8,128)}', space=vmem, size = 0x6000, scoped, tag = 'scratch operand']
  %s0 = inlined_call_operand.vmem [shape: bf16[16,256], index: 0, kind: input, shape index: {}]
  %s1 = inlined_call_operand.vmem [shape: bf16[256,384], index: 1, kind: input, shape index: {}]
  %s2 = inlined_call_operand.vmem [shape: f32[1,384], index: 2, kind: input, shape index: {}]
  %s3 = inlined_call_operand.vmem [shape: bf16[16,384], index: 3, kind: output, shape index: {}]
  %s4 = sld [smem:[#allocation0]]
  $region30: #{vae_with_classifier_forward.17} parent=0
    _
  %s6 = ssub.s32 1, %s4
  %s7 = scalar_select 0, %s6, %s4
  // Predicated region
  $region2: #{vae_with_classifier_forward.17} parent=0 // pred_check
    _
  $region3: #{vae_with_classifier_forward.17} parent=0 // pred_check_branch
    %9 = sbr.rel (0) target = $region5
  $region4: #{vae_with_classifier_forward.17} parent=0 // pred_region
    _
  $region5: #{vae_with_classifier_forward.17} parent=0 // pred_fallthru
    _
  // Predicated region
  $region6: #{vae_with_classifier_forward.17} parent=0 // pred_check
    _
  $region7: #{vae_with_classifier_forward.17} parent=0 // pred_check_branch
    %11 = sbr.rel (0) target = $region9
  $region8: #{vae_with_classifier_forward.17} parent=0 // pred_region
    _
  $region9: #{vae_with_classifier_forward.17} parent=0 // pred_fallthru
    _
  // Predicated region
  $region10: #{vae_with_classifier_forward.17} parent=0 // pred_check
    _
  $region11: #{vae_with_classifier_forward.17} parent=0 // pred_check_branch
    %13 = sbr.rel (0) target = $region13
  $region12: #{vae_with_classifier_forward.17} parent=0 // pred_region
    _
  $region13: #{vae_with_classifier_forward.17} parent=0 // pred_fallthru
    _
  %p15 = scmp.eq.s32.totalorder 0, 0
  // Predicated region
  $region14: #{vae_with_classifier_forward.17} parent=0 // pred_check
    %p16 = pneg %p15
  $region15: #{vae_with_classifier_forward.17} parent=0 // pred_check_branch
    %18 = sbr.rel (%p16) target = $region17
  $region16: #{vae_with_classifier_forward.17} parent=0 // pred_region
    %19 = vst [vmem:[#allocation2] sm:$0xff] 0.0
    %20 = vst [vmem:[#allocation2 + $0x8] sm:$0xff] 0.0
    %21 = vst [vmem:[#allocation2 + $0x10] sm:$0xff] 0.0
    %22 = vst [vmem:[#allocation2 + $0x18] sm:$0xff] 0.0
    %23 = vst [vmem:[#allocation2 + $0x20] sm:$0xff] 0.0
    %24 = vst [vmem:[#allocation2 + $0x28] sm:$0xff] 0.0
  $region17: #{vae_with_classifier_forward.17} parent=0 // pred_fallthru
    _
  %v25 = vld [vmem:[#allocation2] sm:$0xff]
  %v26 = vld [vmem:[#allocation2 + $0x8] sm:$0xff]
  %v27 = vld [vmem:[#allocation2 + $0x10] sm:$0xff]
  %v28 = vld [vmem:[#allocation2 + $0x18] sm:$0xff]
  %v29 = vld [vmem:[#allocation2 + $0x20] sm:$0xff]
  %v30 = vld [vmem:[#allocation2 + $0x28] sm:$0xff]
  %v31 = vld [vmem:[%s0] sm:$0xff]
  %v32 = vld [vmem:[%s0 + $0x8] sm:$0xff]
  %v33 = vld [vmem:[%s1] sm:$0xff]
  %v34 = vld [vmem:[%s1 + $0x8] sm:$0xf]
  %v35 = vld [vmem:[%s1 + $0xc] sm:$0xff]
  %v36 = vld [vmem:[%s1 + $0x14] sm:$0xf]
  %v37 = vld [vmem:[%s1 + $0x18] sm:$0xff]
  %v38 = vld [vmem:[%s1 + $0x20] sm:$0xf]
  %v39 = vld [vmem:[%s1 + $0x24] sm:$0xff]
  %v40 = vld [vmem:[%s1 + $0x2c] sm:$0xf]
  %v41 = vld [vmem:[%s1 + $0x30] sm:$0xff]
  %v42 = vld [vmem:[%s1 + $0x38] sm:$0xf]
  %v43 = vld [vmem:[%s1 + $0x3c] sm:$0xff]
  %v44 = vld [vmem:[%s1 + $0x44] sm:$0xf]
  %v45 = vld [vmem:[%s1 + $0x48] sm:$0xff]
  %v46 = vld [vmem:[%s1 + $0x50] sm:$0xf]
  %v47 = vld [vmem:[%s1 + $0x54] sm:$0xff]
  %v48 = vld [vmem:[%s1 + $0x5c] sm:$0xf]
  %v49 = vld [vmem:[%s1 + $0x60] sm:$0xff]
  %v50 = vld [vmem:[%s1 + $0x68] sm:$0xf]
  %v51 = vld [vmem:[%s1 + $0x6c] sm:$0xff]
  %v52 = vld [vmem:[%s1 + $0x74] sm:$0xf]
  %v53 = vld [vmem:[%s1 + $0x78] sm:$0xff]
  %v54 = vld [vmem:[%s1 + $0x80] sm:$0xf]
  %v55 = vld [vmem:[%s1 + $0x84] sm:$0xff]
  %v56 = vld [vmem:[%s1 + $0x8c] sm:$0xf]
  %v57 = vld [vmem:[%s1 + $0x90] sm:$0xff]
  %v58 = vld [vmem:[%s1 + $0x98] sm:$0xf]
  %v59 = vld [vmem:[%s1 + $0x9c] sm:$0xff]
  %v60 = vld [vmem:[%s1 + $0xa4] sm:$0xf]
  %v61 = vld [vmem:[%s1 + $0xa8] sm:$0xff]
  %v62 = vld [vmem:[%s1 + $0xb0] sm:$0xf]
  %v63 = vld [vmem:[%s1 + $0xb4] sm:$0xff]
  %v64 = vld [vmem:[%s1 + $0xbc] sm:$0xf]
  %v65 = vld [vmem:[%s1 + $0xc0] sm:$0xff]
  %v66 = vld [vmem:[%s1 + $0xc8] sm:$0xf]
  %v67 = vld [vmem:[%s1 + $0xcc] sm:$0xff]
  %v68 = vld [vmem:[%s1 + $0xd4] sm:$0xf]
  %v69 = vld [vmem:[%s1 + $0xd8] sm:$0xff]
  %v70 = vld [vmem:[%s1 + $0xe0] sm:$0xf]
  %v71 = vld [vmem:[%s1 + $0xe4] sm:$0xff]
  %v72 = vld [vmem:[%s1 + $0xec] sm:$0xf]
  %v73 = vld [vmem:[%s1 + $0xf0] sm:$0xff]
  %v74 = vld [vmem:[%s1 + $0xf8] sm:$0xf]
  %v75 = vld [vmem:[%s1 + $0xfc] sm:$0xff]
  %v76 = vld [vmem:[%s1 + $0x104] sm:$0xf]
  %v77 = vld [vmem:[%s1 + $0x108] sm:$0xff]
  %v78 = vld [vmem:[%s1 + $0x110] sm:$0xf]
  %v79 = vld [vmem:[%s1 + $0x114] sm:$0xff]
  %v80 = vld [vmem:[%s1 + $0x11c] sm:$0xf]
  %v81 = vld [vmem:[%s1 + $0x120] sm:$0xff]
  %v82 = vld [vmem:[%s1 + $0x128] sm:$0xf]
  %v83 = vld [vmem:[%s1 + $0x12c] sm:$0xff]
  %v84 = vld [vmem:[%s1 + $0x134] sm:$0xf]
  %v85 = vld [vmem:[%s1 + $0x138] sm:$0xff]
  %v86 = vld [vmem:[%s1 + $0x140] sm:$0xf]
  %v87 = vld [vmem:[%s1 + $0x144] sm:$0xff]
  %v88 = vld [vmem:[%s1 + $0x14c] sm:$0xf]
  %v89 = vld [vmem:[%s1 + $0x150] sm:$0xff]
  %v90 = vld [vmem:[%s1 + $0x158] sm:$0xf]
  %v91 = vld [vmem:[%s1 + $0x15c] sm:$0xff]
  %v92 = vld [vmem:[%s1 + $0x164] sm:$0xf]
  %v93 = vld [vmem:[%s1 + $0x168] sm:$0xff]
  %v94 = vld [vmem:[%s1 + $0x170] sm:$0xf]
  %v95 = vld [vmem:[%s1 + $0x174] sm:$0xff]
  %v96 = vld [vmem:[%s1 + $0x17c] sm:$0xf]
  %v99 = vunpack.c.l.b16 %v31
  %v100 = vunpack.c.h.b16 %v31
  %v101 = vunpack.c.l.b16 %v32
  %v102 = vunpack.c.h.b16 %v32
  %v103 = vpack.c.b16 %v101, %v99
  %v104 = vpack.c.b16 %v102, %v100
  %v171 = vunpack.c.l.b16 %v33
  %v172 = vunpack.c.h.b16 %v33
  %v173 = vunpack.c.l.b16 %v34
  %v174 = vunpack.c.l.b16 %v35
  %v175 = vunpack.c.h.b16 %v35
  %v176 = vunpack.c.l.b16 %v36
  %v177 = vunpack.c.l.b16 %v37
  %v178 = vunpack.c.h.b16 %v37
  %v179 = vunpack.c.l.b16 %v38
  %v180 = vunpack.c.l.b16 %v39
  %v181 = vunpack.c.h.b16 %v39
  %v182 = vunpack.c.l.b16 %v40
  %v183 = vunpack.c.l.b16 %v41
  %v184 = vunpack.c.h.b16 %v41
  %v185 = vunpack.c.l.b16 %v42
  %v186 = vunpack.c.l.b16 %v43
  %v187 = vunpack.c.h.b16 %v43
  %v188 = vunpack.c.l.b16 %v44
  %v189 = vunpack.c.l.b16 %v45
  %v190 = vunpack.c.h.b16 %v45
  %v191 = vunpack.c.l.b16 %v46
  %v192 = vunpack.c.l.b16 %v47
  %v193 = vunpack.c.h.b16 %v47
  %v194 = vunpack.c.l.b16 %v48
  %v195 = vunpack.c.l.b16 %v49
  %v196 = vunpack.c.h.b16 %v49
  %v197 = vunpack.c.l.b16 %v50
  %v198 = vunpack.c.l.b16 %v51
  %v199 = vunpack.c.h.b16 %v51
  %v200 = vunpack.c.l.b16 %v52
  %v201 = vunpack.c.l.b16 %v53
  %v202 = vunpack.c.h.b16 %v53
  %v203 = vunpack.c.l.b16 %v54
  %v204 = vunpack.c.l.b16 %v55
  %v205 = vunpack.c.h.b16 %v55
  %v206 = vunpack.c.l.b16 %v56
  %v207 = vunpack.c.l.b16 %v57
  %v208 = vunpack.c.h.b16 %v57
  %v209 = vunpack.c.l.b16 %v58
  %v210 = vunpack.c.l.b16 %v59
  %v211 = vunpack.c.h.b16 %v59
  %v212 = vunpack.c.l.b16 %v60
  %v213 = vunpack.c.l.b16 %v61
  %v214 = vunpack.c.h.b16 %v61
  %v215 = vunpack.c.l.b16 %v62
  %v216 = vunpack.c.l.b16 %v63
  %v217 = vunpack.c.h.b16 %v63
  %v218 = vunpack.c.l.b16 %v64
  %v219 = vunpack.c.l.b16 %v65
  %v220 = vunpack.c.h.b16 %v65
  %v221 = vunpack.c.l.b16 %v66
  %v222 = vunpack.c.l.b16 %v67
  %v223 = vunpack.c.h.b16 %v67
  %v224 = vunpack.c.l.b16 %v68
  %v225 = vunpack.c.l.b16 %v69
  %v226 = vunpack.c.h.b16 %v69
  %v227 = vunpack.c.l.b16 %v70
  %v228 = vunpack.c.l.b16 %v71
  %v229 = vunpack.c.h.b16 %v71
  %v230 = vunpack.c.l.b16 %v72
  %v231 = vunpack.c.l.b16 %v73
  %v232 = vunpack.c.h.b16 %v73
  %v233 = vunpack.c.l.b16 %v74
  %v234 = vunpack.c.l.b16 %v75
  %v235 = vunpack.c.h.b16 %v75
  %v236 = vunpack.c.l.b16 %v76
  %v237 = vunpack.c.l.b16 %v77
  %v238 = vunpack.c.h.b16 %v77
  %v239 = vunpack.c.l.b16 %v78
  %v240 = vunpack.c.l.b16 %v79
  %v241 = vunpack.c.h.b16 %v79
  %v242 = vunpack.c.l.b16 %v80
  %v243 = vunpack.c.l.b16 %v81
  %v244 = vunpack.c.h.b16 %v81
  %v245 = vunpack.c.l.b16 %v82
  %v246 = vunpack.c.l.b16 %v83
  %v247 = vunpack.c.h.b16 %v83
  %v248 = vunpack.c.l.b16 %v84
  %v249 = vunpack.c.l.b16 %v85
  %v250 = vunpack.c.h.b16 %v85
  %v251 = vunpack.c.l.b16 %v86
  %v252 = vunpack.c.l.b16 %v87
  %v253 = vunpack.c.h.b16 %v87
  %v254 = vunpack.c.l.b16 %v88
  %v255 = vunpack.c.l.b16 %v89
  %v256 = vunpack.c.h.b16 %v89
  %v257 = vunpack.c.l.b16 %v90
  %v258 = vunpack.c.l.b16 %v91
  %v259 = vunpack.c.h.b16 %v91
  %v260 = vunpack.c.l.b16 %v92
  %v261 = vunpack.c.l.b16 %v93
  %v262 = vunpack.c.h.b16 %v93
  %v263 = vunpack.c.l.b16 %v94
  %v264 = vunpack.c.l.b16 %v95
  %v265 = vunpack.c.h.b16 %v95
  %v266 = vunpack.c.l.b16 %v96
  %v267 = vpack.c.b16 %v174, %v171
  %v268 = vpack.c.b16 %v175, %v172
  %v269 = vpack.c.b16 %v176, %v173
  %v270 = vpack.c.b16 %v180, %v177
  %v271 = vpack.c.b16 %v181, %v178
  %v272 = vpack.c.b16 %v182, %v179
  %v273 = vpack.c.b16 %v186, %v183
  %v274 = vpack.c.b16 %v187, %v184
  %v275 = vpack.c.b16 %v188, %v185
  %v276 = vpack.c.b16 %v192, %v189
  %v277 = vpack.c.b16 %v193, %v190
  %v278 = vpack.c.b16 %v194, %v191
  %v279 = vpack.c.b16 %v198, %v195
  %v280 = vpack.c.b16 %v199, %v196
  %v281 = vpack.c.b16 %v200, %v197
  %v282 = vpack.c.b16 %v204, %v201
  %v283 = vpack.c.b16 %v205, %v202
  %v284 = vpack.c.b16 %v206, %v203
  %v285 = vpack.c.b16 %v210, %v207
  %v286 = vpack.c.b16 %v211, %v208
  %v287 = vpack.c.b16 %v212, %v209
  %v288 = vpack.c.b16 %v216, %v213
  %v289 = vpack.c.b16 %v217, %v214
  %v290 = vpack.c.b16 %v218, %v215
  %v291 = vpack.c.b16 %v222, %v219
  %v292 = vpack.c.b16 %v223, %v220
  %v293 = vpack.c.b16 %v224, %v221
  %v294 = vpack.c.b16 %v228, %v225
  %v295 = vpack.c.b16 %v229, %v226
  %v296 = vpack.c.b16 %v230, %v227
  %v297 = vpack.c.b16 %v234, %v231
  %v298 = vpack.c.b16 %v235, %v232
  %v299 = vpack.c.b16 %v236, %v233
  %v300 = vpack.c.b16 %v240, %v237
  %v301 = vpack.c.b16 %v241, %v238
  %v302 = vpack.c.b16 %v242, %v239
  %v303 = vpack.c.b16 %v246, %v243
  %v304 = vpack.c.b16 %v247, %v244
  %v305 = vpack.c.b16 %v248, %v245
  %v306 = vpack.c.b16 %v252, %v249
  %v307 = vpack.c.b16 %v253, %v250
  %v308 = vpack.c.b16 %v254, %v251
  %v309 = vpack.c.b16 %v258, %v255
  %v310 = vpack.c.b16 %v259, %v256
  %v311 = vpack.c.b16 %v260, %v257
  %v312 = vpack.c.b16 %v264, %v261
  %v313 = vpack.c.b16 %v265, %v262
  %v314 = vpack.c.b16 %v266, %v263
  %363 = vmatprep.subr.bf16.mxu0 %v289
  %364 = vmatpush1.bf16.msra.mxu0 %v288
  %365 = vmatprep.subr.bf16.mxu0 %v286
  %366 = vmatpush1.bf16.msra.mxu0 %v285
  %367 = vmatprep.subr.bf16.mxu0 %v283
  %368 = vmatpush1.bf16.msra.mxu0 %v282
  %369 = vmatprep.subr.bf16.mxu0 %v280
  %370 = vmatpush1.bf16.msra.mxu0 %v279
  %371 = vmatprep.subr.bf16.mxu0 %v277
  %372 = vmatpush1.bf16.msra.mxu0 %v276
  %373 = vmatprep.subr.bf16.mxu0 %v274
  %374 = vmatpush1.bf16.msra.mxu0 %v273
  %375 = vmatprep.subr.bf16.mxu0 %v271
  %376 = vmatpush1.bf16.msra.mxu0 %v270
  %377 = vmatprep.subr.bf16.mxu0 %v268
  %378 = vmatpush1.bf16.msra.mxu0 %v267
  %379 = vmatprep.subr.bf16.mxu0 %v313
  %380 = vmatpush2.bf16.msra.mxu0 %v312
  %381 = vmatprep.subr.bf16.mxu0 %v310
  %382 = vmatpush2.bf16.msra.mxu0 %v309
  %383 = vmatprep.subr.bf16.mxu0 %v307
  %384 = vmatpush2.bf16.msra.mxu0 %v306
  %385 = vmatprep.subr.bf16.mxu0 %v304
  %386 = vmatpush2.bf16.msra.mxu0 %v303
  %387 = vmatprep.subr.bf16.mxu0 %v301
  %388 = vmatpush2.bf16.msra.mxu0 %v300
  %389 = vmatprep.subr.bf16.mxu0 %v298
  %390 = vmatpush2.bf16.msra.mxu0 %v297
  %391 = vmatprep.subr.bf16.mxu0 %v295
  %392 = vmatpush2.bf16.msra.mxu0 %v294
  %393 = vmatprep.subr.bf16.mxu0 %v292
  %394 = vmatpush2.bf16.msra.mxu0 %v291
  %395 = vmatprep.mubr.bf16.mxu0 %v104
  %396 = vmatmul.mubr.bf16.gmra.mxu0 %v103
  %v397 = vpop.f32.mrf.mxu0
  %v398 = vadd.f32 0.0, %v397
  %v399 = vpop.f32.mrf.mxu0
  %v400 = vadd.f32 0.0, %v399
  %v401 = vpop.f32.mrf.mxu0
  %v402 = vadd.f32 0.0, %v401
  %v403 = vpop.f32.mrf.mxu0
  %v404 = vadd.f32 0.0, %v403
  %405 = vdwg.mxu0
  %406 = vmatprep.subr.bf16.mxu0 0
  %407 = vmatpush1.bf16.msra.mxu0 %v290
  %408 = vmatprep.subr.bf16.mxu0 0
  %409 = vmatpush1.bf16.msra.mxu0 %v287
  %410 = vmatprep.subr.bf16.mxu0 0
  %411 = vmatpush1.bf16.msra.mxu0 %v284
  %412 = vmatprep.subr.bf16.mxu0 0
  %413 = vmatpush1.bf16.msra.mxu0 %v281
  %414 = vmatprep.subr.bf16.mxu0 0
  %415 = vmatpush1.bf16.msra.mxu0 %v278
  %416 = vmatprep.subr.bf16.mxu0 0
  %417 = vmatpush1.bf16.msra.mxu0 %v275
  %418 = vmatprep.subr.bf16.mxu0 0
  %419 = vmatpush1.bf16.msra.mxu0 %v272
  %420 = vmatprep.subr.bf16.mxu0 0
  %421 = vmatpush1.bf16.msra.mxu0 %v269
  %422 = vmatprep.subr.bf16.mxu0 0
  %423 = vmatpush2.bf16.msra.mxu0 %v314
  %424 = vmatprep.subr.bf16.mxu0 0
  %425 = vmatpush2.bf16.msra.mxu0 %v311
  %426 = vmatprep.subr.bf16.mxu0 0
  %427 = vmatpush2.bf16.msra.mxu0 %v308
  %428 = vmatprep.subr.bf16.mxu0 0
  %429 = vmatpush2.bf16.msra.mxu0 %v305
  %430 = vmatprep.subr.bf16.mxu0 0
  %431 = vmatpush2.bf16.msra.mxu0 %v302
  %432 = vmatprep.subr.bf16.mxu0 0
  %433 = vmatpush2.bf16.msra.mxu0 %v299
  %434 = vmatprep.subr.bf16.mxu0 0
  %435 = vmatpush2.bf16.msra.mxu0 %v296
  %436 = vmatprep.subr.bf16.mxu0 0
  %437 = vmatpush2.bf16.msra.mxu0 %v293
  %438 = vmatprep.mubr.bf16.mxu0 %v104
  %439 = vmatmul.mubr.bf16.gmra.mxu0 %v103
  %v440 = vpop.f32.mrf.mxu0
  %v441 = vadd.f32 0.0, %v440
  %v442 = vpop.f32.mrf.mxu0
  %v443 = vpop.f32.mrf.mxu0
  %v444 = vadd.f32 0.0, %v443
  %v445 = vpop.f32.mrf.mxu0
  %446 = vdwg.mxu0
  %v447 = vadd.f32 %v25, %v398
  %v448 = vadd.f32 %v26, %v400
  %v449 = vadd.f32 %v27, %v441
  %v450 = vadd.f32 %v28, %v402
  %v451 = vadd.f32 %v29, %v404
  %v452 = vadd.f32 %v30, %v444
  %453 = vst [vmem:[#allocation2] sm:$0xff] %v447
  %454 = vst [vmem:[#allocation2 + $0x8] sm:$0xff] %v448
  %455 = vst [vmem:[#allocation2 + $0x10] sm:$0xff] %v449
  %456 = vst [vmem:[#allocation2 + $0x18] sm:$0xff] %v450
  %457 = vst [vmem:[#allocation2 + $0x20] sm:$0xff] %v451
  %458 = vst [vmem:[#allocation2 + $0x28] sm:$0xff] %v452
  // Predicated region
  $region18: #{vae_with_classifier_forward.17} parent=0 // pred_check
    %p459 = pneg %p15
  $region19: #{vae_with_classifier_forward.17} parent=0 // pred_check_branch
    %461 = sbr.rel (%p459) target = $region21
  $region20: #{vae_with_classifier_forward.17} parent=0 // pred_region
    %v462 = vld [vmem:[#allocation2] sm:$0xff]
    %v463 = vld [vmem:[#allocation2 + $0x8] sm:$0xff]
    %v464 = vld [vmem:[#allocation2 + $0x10] sm:$0xff]
    %v465 = vld [vmem:[#allocation2 + $0x18] sm:$0xff]
    %v466 = vld [vmem:[#allocation2 + $0x20] sm:$0xff]
    %v467 = vld [vmem:[#allocation2 + $0x28] sm:$0xff]
    %v468 = vld [vmem:[%s2] sm:$0x7]
    %v470 = vlaneseq
    %v471 = vshrl.u32 %v470, 7
    %v472 = vsub.s32 0, %v471
    %v473 = vrot.slane %v468, %v472
    %v474 = vlaneseq
    %v475 = vshrl.u32 %v474, 7
    %v476 = vsub.s32 1, %v475
    %v477 = vrot.slane %v468, %v476
    %v478 = vlaneseq
    %v479 = vshrl.u32 %v478, 7
    %v480 = vsub.s32 2, %v479
    %v481 = vrot.slane %v468, %v480
    %v485 = vadd.f32 %v462, %v473
    %v486 = vadd.f32 %v463, %v477
    %v487 = vadd.f32 %v464, %v481
    %v488 = vadd.f32 %v465, %v473
    %v489 = vadd.f32 %v466, %v477
    %v490 = vadd.f32 %v467, %v481
    %v491 = vmax.f32 %v485, 0.0
    %v492 = vmax.f32 %v486, 0.0
    %v493 = vmax.f32 %v487, 0.0
    %v494 = vmax.f32 %v488, 0.0
    %v495 = vmax.f32 %v489, 0.0
    %v496 = vmax.f32 %v490, 0.0
    %v497 = vpack.c.bf16 %v494, %v491
    %v498 = vpack.c.bf16 %v495, %v492
    %v499 = vpack.c.bf16 %v496, %v493
    %v503 = vunpack.c.l.b16 %v497
    %v504 = vunpack.c.l.b16 %v498
    %v505 = vunpack.c.l.b16 %v499
    %v506 = vunpack.c.h.b16 %v497
    %v507 = vunpack.c.h.b16 %v498
    %v508 = vunpack.c.h.b16 %v499
    %v509 = vpack.c.b16 %v504, %v503
    %v510 = vpack.c.b16 %v505, %v505
    %v511 = vpack.c.b16 %v507, %v506
    %v512 = vpack.c.b16 %v508, %v508
    %517 = vst [vmem:[%s3] sm:$0xff] %v509
    %518 = vst [vmem:[%s3 + $0x8] sm:$0xf] %v510
    %519 = vst [vmem:[%s3 + $0xc] sm:$0xff] %v511
    %520 = vst [vmem:[%s3 + $0x14] sm:$0xf] %v512
  $region21: #{vae_with_classifier_forward.17} parent=0 // pred_fallthru
    _
  // Predicated region
  $region22: #{vae_with_classifier_forward.17} parent=0 // pred_check
    _
  $region23: #{vae_with_classifier_forward.17} parent=0 // pred_check_branch
    %522 = sbr.rel (0) target = $region25
  $region24: #{vae_with_classifier_forward.17} parent=0 // pred_region
    _
  $region25: #{vae_with_classifier_forward.17} parent=0 // pred_fallthru
    _
  // Predicated region
  $region26: #{vae_with_classifier_forward.17} parent=0 // pred_check
    _
  $region27: #{vae_with_classifier_forward.17} parent=0 // pred_check_branch
    %524 = sbr.rel (0) target = $region29
  $region28: #{vae_with_classifier_forward.17} parent=0 // pred_region
    _
  $region29: #{vae_with_classifier_forward.17} parent=0 // pred_fallthru
    _

// kernel: vae_with_classifier_forward.18
$region0: #{vae_with_classifier_forward.18}
  #allocation0 [shape = 'u32[]', space=smem, size = 0x4, offset = 0x4, fixed_abs, tag = 'smem constant byte address 0x4 - core index']
  #allocation1 [shape = 'u32[144,128]{1,0:T(1,128)}', space=vmem, size = 0x12000, scoped, tag = 'internal scratch']
  #allocation2 [shape = 'f32[16,512]{1,0:T(8,128)}', space=vmem, size = 0x8000, scoped, tag = 'scratch operand']
  %s0 = inlined_call_operand.vmem [shape: bf16[16,384], index: 0, kind: input, shape index: {}]
  %s1 = inlined_call_operand.vmem [shape: bf16[384,512], index: 1, kind: input, shape index: {}]
  %s2 = inlined_call_operand.vmem [shape: f32[1,512], index: 2, kind: input, shape index: {}]
  %s3 = inlined_call_operand.vmem [shape: bf16[16,512], index: 3, kind: output, shape index: {}]
  %s4 = sld [smem:[#allocation0]]
  $region30: #{vae_with_classifier_forward.18} parent=0
    _
  %s6 = ssub.s32 1, %s4
  %s7 = scalar_select 0, %s6, %s4
  // Predicated region
  $region2: #{vae_with_classifier_forward.18} parent=0 // pred_check
    _
  $region3: #{vae_with_classifier_forward.18} parent=0 // pred_check_branch
    %9 = sbr.rel (0) target = $region5
  $region4: #{vae_with_classifier_forward.18} parent=0 // pred_region
    _
  $region5: #{vae_with_classifier_forward.18} parent=0 // pred_fallthru
    _
  // Predicated region
  $region6: #{vae_with_classifier_forward.18} parent=0 // pred_check
    _
  $region7: #{vae_with_classifier_forward.18} parent=0 // pred_check_branch
    %11 = sbr.rel (0) target = $region9
  $region8: #{vae_with_classifier_forward.18} parent=0 // pred_region
    _
  $region9: #{vae_with_classifier_forward.18} parent=0 // pred_fallthru
    _
  // Predicated region
  $region10: #{vae_with_classifier_forward.18} parent=0 // pred_check
    _
  $region11: #{vae_with_classifier_forward.18} parent=0 // pred_check_branch
    %13 = sbr.rel (0) target = $region13
  $region12: #{vae_with_classifier_forward.18} parent=0 // pred_region
    _
  $region13: #{vae_with_classifier_forward.18} parent=0 // pred_fallthru
    _
  %p15 = scmp.eq.s32.totalorder 0, 0
  // Predicated region
  $region14: #{vae_with_classifier_forward.18} parent=0 // pred_check
    %p16 = pneg %p15
  $region15: #{vae_with_classifier_forward.18} parent=0 // pred_check_branch
    %18 = sbr.rel (%p16) target = $region17
  $region16: #{vae_with_classifier_forward.18} parent=0 // pred_region
    %19 = vst [vmem:[#allocation2] sm:$0xff] 0.0
    %20 = vst [vmem:[#allocation2 + $0x8] sm:$0xff] 0.0
    %21 = vst [vmem:[#allocation2 + $0x10] sm:$0xff] 0.0
    %22 = vst [vmem:[#allocation2 + $0x18] sm:$0xff] 0.0
    %23 = vst [vmem:[#allocation2 + $0x20] sm:$0xff] 0.0
    %24 = vst [vmem:[#allocation2 + $0x28] sm:$0xff] 0.0
    %25 = vst [vmem:[#allocation2 + $0x30] sm:$0xff] 0.0
    %26 = vst [vmem:[#allocation2 + $0x38] sm:$0xff] 0.0
  $region17: #{vae_with_classifier_forward.18} parent=0 // pred_fallthru
    _
  %v27 = vld [vmem:[#allocation2] sm:$0xff]
  %v28 = vld [vmem:[#allocation2 + $0x8] sm:$0xff]
  %v29 = vld [vmem:[#allocation2 + $0x10] sm:$0xff]
  %v30 = vld [vmem:[#allocation2 + $0x18] sm:$0xff]
  %v31 = vld [vmem:[#allocation2 + $0x20] sm:$0xff]
  %v32 = vld [vmem:[#allocation2 + $0x28] sm:$0xff]
  %v33 = vld [vmem:[#allocation2 + $0x30] sm:$0xff]
  %v34 = vld [vmem:[#allocation2 + $0x38] sm:$0xff]
  %v35 = vld [vmem:[%s0] sm:$0xff]
  %v36 = vld [vmem:[%s0 + $0x8] sm:$0xf]
  %v37 = vld [vmem:[%s0 + $0xc] sm:$0xff]
  %v38 = vld [vmem:[%s0 + $0x14] sm:$0xf]
  %v39 = vld [vmem:[%s1] sm:$0xff]
  %v40 = vld [vmem:[%s1 + $0x8] sm:$0xff]
  %v41 = vld [vmem:[%s1 + $0x10] sm:$0xff]
  %v42 = vld [vmem:[%s1 + $0x18] sm:$0xff]
  %v43 = vld [vmem:[%s1 + $0x20] sm:$0xff]
  %v44 = vld [vmem:[%s1 + $0x28] sm:$0xff]
  %v45 = vld [vmem:[%s1 + $0x30] sm:$0xff]
  %v46 = vld [vmem:[%s1 + $0x38] sm:$0xff]
  %v47 = vld [vmem:[%s1 + $0x40] sm:$0xff]
  %v48 = vld [vmem:[%s1 + $0x48] sm:$0xff]
  %v49 = vld [vmem:[%s1 + $0x50] sm:$0xff]
  %v50 = vld [vmem:[%s1 + $0x58] sm:$0xff]
  %v51 = vld [vmem:[%s1 + $0x60] sm:$0xff]
  %v52 = vld [vmem:[%s1 + $0x68] sm:$0xff]
  %v53 = vld [vmem:[%s1 + $0x70] sm:$0xff]
  %v54 = vld [vmem:[%s1 + $0x78] sm:$0xff]
  %v55 = vld [vmem:[%s1 + $0x80] sm:$0xff]
  %v56 = vld [vmem:[%s1 + $0x88] sm:$0xff]
  %v57 = vld [vmem:[%s1 + $0x90] sm:$0xff]
  %v58 = vld [vmem:[%s1 + $0x98] sm:$0xff]
  %v59 = vld [vmem:[%s1 + $0xa0] sm:$0xff]
  %v60 = vld [vmem:[%s1 + $0xa8] sm:$0xff]
  %v61 = vld [vmem:[%s1 + $0xb0] sm:$0xff]
  %v62 = vld [vmem:[%s1 + $0xb8] sm:$0xff]
  %v63 = vld [vmem:[%s1 + $0xc0] sm:$0xff]
  %v64 = vld [vmem:[%s1 + $0xc8] sm:$0xff]
  %v65 = vld [vmem:[%s1 + $0xd0] sm:$0xff]
  %v66 = vld [vmem:[%s1 + $0xd8] sm:$0xff]
  %v67 = vld [vmem:[%s1 + $0xe0] sm:$0xff]
  %v68 = vld [vmem:[%s1 + $0xe8] sm:$0xff]
  %v69 = vld [vmem:[%s1 + $0xf0] sm:$0xff]
  %v70 = vld [vmem:[%s1 + $0xf8] sm:$0xff]
  %v71 = vld [vmem:[%s1 + $0x100] sm:$0xff]
  %v72 = vld [vmem:[%s1 + $0x108] sm:$0xff]
  %v73 = vld [vmem:[%s1 + $0x110] sm:$0xff]
  %v74 = vld [vmem:[%s1 + $0x118] sm:$0xff]
  %v75 = vld [vmem:[%s1 + $0x120] sm:$0xff]
  %v76 = vld [vmem:[%s1 + $0x128] sm:$0xff]
  %v77 = vld [vmem:[%s1 + $0x130] sm:$0xff]
  %v78 = vld [vmem:[%s1 + $0x138] sm:$0xff]
  %v79 = vld [vmem:[%s1 + $0x140] sm:$0xff]
  %v80 = vld [vmem:[%s1 + $0x148] sm:$0xff]
  %v81 = vld [vmem:[%s1 + $0x150] sm:$0xff]
  %v82 = vld [vmem:[%s1 + $0x158] sm:$0xff]
  %v83 = vld [vmem:[%s1 + $0x160] sm:$0xff]
  %v84 = vld [vmem:[%s1 + $0x168] sm:$0xff]
  %v85 = vld [vmem:[%s1 + $0x170] sm:$0xff]
  %v86 = vld [vmem:[%s1 + $0x178] sm:$0xff]
  %v87 = vld [vmem:[%s1 + $0x180] sm:$0xff]
  %v88 = vld [vmem:[%s1 + $0x188] sm:$0xff]
  %v89 = vld [vmem:[%s1 + $0x190] sm:$0xff]
  %v90 = vld [vmem:[%s1 + $0x198] sm:$0xff]
  %v91 = vld [vmem:[%s1 + $0x1a0] sm:$0xff]
  %v92 = vld [vmem:[%s1 + $0x1a8] sm:$0xff]
  %v93 = vld [vmem:[%s1 + $0x1b0] sm:$0xff]
  %v94 = vld [vmem:[%s1 + $0x1b8] sm:$0xff]
  %v95 = vld [vmem:[%s1 + $0x1c0] sm:$0xff]
  %v96 = vld [vmem:[%s1 + $0x1c8] sm:$0xff]
  %v97 = vld [vmem:[%s1 + $0x1d0] sm:$0xff]
  %v98 = vld [vmem:[%s1 + $0x1d8] sm:$0xff]
  %v99 = vld [vmem:[%s1 + $0x1e0] sm:$0xff]
  %v100 = vld [vmem:[%s1 + $0x1e8] sm:$0xff]
  %v101 = vld [vmem:[%s1 + $0x1f0] sm:$0xff]
  %v102 = vld [vmem:[%s1 + $0x1f8] sm:$0xff]
  %v103 = vld [vmem:[%s1 + $0x200] sm:$0xff]
  %v104 = vld [vmem:[%s1 + $0x208] sm:$0xff]
  %v105 = vld [vmem:[%s1 + $0x210] sm:$0xff]
  %v106 = vld [vmem:[%s1 + $0x218] sm:$0xff]
  %v107 = vld [vmem:[%s1 + $0x220] sm:$0xff]
  %v108 = vld [vmem:[%s1 + $0x228] sm:$0xff]
  %v109 = vld [vmem:[%s1 + $0x230] sm:$0xff]
  %v110 = vld [vmem:[%s1 + $0x238] sm:$0xff]
  %v111 = vld [vmem:[%s1 + $0x240] sm:$0xff]
  %v112 = vld [vmem:[%s1 + $0x248] sm:$0xff]
  %v113 = vld [vmem:[%s1 + $0x250] sm:$0xff]
  %v114 = vld [vmem:[%s1 + $0x258] sm:$0xff]
  %v115 = vld [vmem:[%s1 + $0x260] sm:$0xff]
  %v116 = vld [vmem:[%s1 + $0x268] sm:$0xff]
  %v117 = vld [vmem:[%s1 + $0x270] sm:$0xff]
  %v118 = vld [vmem:[%s1 + $0x278] sm:$0xff]
  %v119 = vld [vmem:[%s1 + $0x280] sm:$0xff]
  %v120 = vld [vmem:[%s1 + $0x288] sm:$0xff]
  %v121 = vld [vmem:[%s1 + $0x290] sm:$0xff]
  %v122 = vld [vmem:[%s1 + $0x298] sm:$0xff]
  %v123 = vld [vmem:[%s1 + $0x2a0] sm:$0xff]
  %v124 = vld [vmem:[%s1 + $0x2a8] sm:$0xff]
  %v125 = vld [vmem:[%s1 + $0x2b0] sm:$0xff]
  %v126 = vld [vmem:[%s1 + $0x2b8] sm:$0xff]
  %v127 = vld [vmem:[%s1 + $0x2c0] sm:$0xff]
  %v128 = vld [vmem:[%s1 + $0x2c8] sm:$0xff]
  %v129 = vld [vmem:[%s1 + $0x2d0] sm:$0xff]
  %v130 = vld [vmem:[%s1 + $0x2d8] sm:$0xff]
  %v131 = vld [vmem:[%s1 + $0x2e0] sm:$0xff]
  %v132 = vld [vmem:[%s1 + $0x2e8] sm:$0xff]
  %v133 = vld [vmem:[%s1 + $0x2f0] sm:$0xff]
  %v134 = vld [vmem:[%s1 + $0x2f8] sm:$0xff]
  %v139 = vunpack.c.l.b16 %v35
  %v140 = vunpack.c.h.b16 %v35
  %v141 = vunpack.c.l.b16 %v36
  %v142 = vunpack.c.l.b16 %v37
  %v143 = vunpack.c.h.b16 %v37
  %v144 = vunpack.c.l.b16 %v38
  %v145 = vpack.c.b16 %v142, %v139
  %v146 = vpack.c.b16 %v143, %v140
  %v147 = vpack.c.b16 %v144, %v141
  %v247 = vunpack.c.l.b16 %v39
  %v248 = vunpack.c.h.b16 %v39
  %v249 = vunpack.c.l.b16 %v40
  %v250 = vunpack.c.h.b16 %v40
  %v251 = vunpack.c.l.b16 %v41
  %v252 = vunpack.c.h.b16 %v41
  %v253 = vunpack.c.l.b16 %v42
  %v254 = vunpack.c.h.b16 %v42
  %v255 = vunpack.c.l.b16 %v43
  %v256 = vunpack.c.h.b16 %v43
  %v257 = vunpack.c.l.b16 %v44
  %v258 = vunpack.c.h.b16 %v44
  %v259 = vunpack.c.l.b16 %v45
  %v260 = vunpack.c.h.b16 %v45
  %v261 = vunpack.c.l.b16 %v46
  %v262 = vunpack.c.h.b16 %v46
  %v263 = vunpack.c.l.b16 %v47
  %v264 = vunpack.c.h.b16 %v47
  %v265 = vunpack.c.l.b16 %v48
  %v266 = vunpack.c.h.b16 %v48
  %v267 = vunpack.c.l.b16 %v49
  %v268 = vunpack.c.h.b16 %v49
  %v269 = vunpack.c.l.b16 %v50
  %v270 = vunpack.c.h.b16 %v50
  %v271 = vunpack.c.l.b16 %v51
  %v272 = vunpack.c.h.b16 %v51
  %v273 = vunpack.c.l.b16 %v52
  %v274 = vunpack.c.h.b16 %v52
  %v275 = vunpack.c.l.b16 %v53
  %v276 = vunpack.c.h.b16 %v53
  %v277 = vunpack.c.l.b16 %v54
  %v278 = vunpack.c.h.b16 %v54
  %v279 = vunpack.c.l.b16 %v55
  %v280 = vunpack.c.h.b16 %v55
  %v281 = vunpack.c.l.b16 %v56
  %v282 = vunpack.c.h.b16 %v56
  %v283 = vunpack.c.l.b16 %v57
  %v284 = vunpack.c.h.b16 %v57
  %v285 = vunpack.c.l.b16 %v58
  %v286 = vunpack.c.h.b16 %v58
  %v287 = vunpack.c.l.b16 %v59
  %v288 = vunpack.c.h.b16 %v59
  %v289 = vunpack.c.l.b16 %v60
  %v290 = vunpack.c.h.b16 %v60
  %v291 = vunpack.c.l.b16 %v61
  %v292 = vunpack.c.h.b16 %v61
  %v293 = vunpack.c.l.b16 %v62
  %v294 = vunpack.c.h.b16 %v62
  %v295 = vunpack.c.l.b16 %v63
  %v296 = vunpack.c.h.b16 %v63
  %v297 = vunpack.c.l.b16 %v64
  %v298 = vunpack.c.h.b16 %v64
  %v299 = vunpack.c.l.b16 %v65
  %v300 = vunpack.c.h.b16 %v65
  %v301 = vunpack.c.l.b16 %v66
  %v302 = vunpack.c.h.b16 %v66
  %v303 = vunpack.c.l.b16 %v67
  %v304 = vunpack.c.h.b16 %v67
  %v305 = vunpack.c.l.b16 %v68
  %v306 = vunpack.c.h.b16 %v68
  %v307 = vunpack.c.l.b16 %v69
  %v308 = vunpack.c.h.b16 %v69
  %v309 = vunpack.c.l.b16 %v70
  %v310 = vunpack.c.h.b16 %v70
  %v311 = vunpack.c.l.b16 %v71
  %v312 = vunpack.c.h.b16 %v71
  %v313 = vunpack.c.l.b16 %v72
  %v314 = vunpack.c.h.b16 %v72
  %v315 = vunpack.c.l.b16 %v73
  %v316 = vunpack.c.h.b16 %v73
  %v317 = vunpack.c.l.b16 %v74
  %v318 = vunpack.c.h.b16 %v74
  %v319 = vunpack.c.l.b16 %v75
  %v320 = vunpack.c.h.b16 %v75
  %v321 = vunpack.c.l.b16 %v76
  %v322 = vunpack.c.h.b16 %v76
  %v323 = vunpack.c.l.b16 %v77
  %v324 = vunpack.c.h.b16 %v77
  %v325 = vunpack.c.l.b16 %v78
  %v326 = vunpack.c.h.b16 %v78
  %v327 = vunpack.c.l.b16 %v79
  %v328 = vunpack.c.h.b16 %v79
  %v329 = vunpack.c.l.b16 %v80
  %v330 = vunpack.c.h.b16 %v80
  %v331 = vunpack.c.l.b16 %v81
  %v332 = vunpack.c.h.b16 %v81
  %v333 = vunpack.c.l.b16 %v82
  %v334 = vunpack.c.h.b16 %v82
  %v335 = vunpack.c.l.b16 %v83
  %v336 = vunpack.c.h.b16 %v83
  %v337 = vunpack.c.l.b16 %v84
  %v338 = vunpack.c.h.b16 %v84
  %v339 = vunpack.c.l.b16 %v85
  %v340 = vunpack.c.h.b16 %v85
  %v341 = vunpack.c.l.b16 %v86
  %v342 = vunpack.c.h.b16 %v86
  %v343 = vunpack.c.l.b16 %v87
  %v344 = vunpack.c.h.b16 %v87
  %v345 = vunpack.c.l.b16 %v88
  %v346 = vunpack.c.h.b16 %v88
  %v347 = vunpack.c.l.b16 %v89
  %v348 = vunpack.c.h.b16 %v89
  %v349 = vunpack.c.l.b16 %v90
  %v350 = vunpack.c.h.b16 %v90
  %v351 = vunpack.c.l.b16 %v91
  %v352 = vunpack.c.h.b16 %v91
  %v353 = vunpack.c.l.b16 %v92
  %v354 = vunpack.c.h.b16 %v92
  %v355 = vunpack.c.l.b16 %v93
  %v356 = vunpack.c.h.b16 %v93
  %v357 = vunpack.c.l.b16 %v94
  %v358 = vunpack.c.h.b16 %v94
  %v359 = vunpack.c.l.b16 %v95
  %v360 = vunpack.c.h.b16 %v95
  %v361 = vunpack.c.l.b16 %v96
  %v362 = vunpack.c.h.b16 %v96
  %v363 = vunpack.c.l.b16 %v97
  %v364 = vunpack.c.h.b16 %v97
  %v365 = vunpack.c.l.b16 %v98
  %v366 = vunpack.c.h.b16 %v98
  %v367 = vunpack.c.l.b16 %v99
  %v368 = vunpack.c.h.b16 %v99
  %v369 = vunpack.c.l.b16 %v100
  %v370 = vunpack.c.h.b16 %v100
  %v371 = vunpack.c.l.b16 %v101
  %v372 = vunpack.c.h.b16 %v101
  %v373 = vunpack.c.l.b16 %v102
  %v374 = vunpack.c.h.b16 %v102
  %v375 = vunpack.c.l.b16 %v103
  %v376 = vunpack.c.h.b16 %v103
  %v377 = vunpack.c.l.b16 %v104
  %v378 = vunpack.c.h.b16 %v104
  %v379 = vunpack.c.l.b16 %v105
  %v380 = vunpack.c.h.b16 %v105
  %v381 = vunpack.c.l.b16 %v106
  %v382 = vunpack.c.h.b16 %v106
  %v383 = vunpack.c.l.b16 %v107
  %v384 = vunpack.c.h.b16 %v107
  %v385 = vunpack.c.l.b16 %v108
  %v386 = vunpack.c.h.b16 %v108
  %v387 = vunpack.c.l.b16 %v109
  %v388 = vunpack.c.h.b16 %v109
  %v389 = vunpack.c.l.b16 %v110
  %v390 = vunpack.c.h.b16 %v110
  %v391 = vunpack.c.l.b16 %v111
  %v392 = vunpack.c.h.b16 %v111
  %v393 = vunpack.c.l.b16 %v112
  %v394 = vunpack.c.h.b16 %v112
  %v395 = vunpack.c.l.b16 %v113
  %v396 = vunpack.c.h.b16 %v113
  %v397 = vunpack.c.l.b16 %v114
  %v398 = vunpack.c.h.b16 %v114
  %v399 = vunpack.c.l.b16 %v115
  %v400 = vunpack.c.h.b16 %v115
  %v401 = vunpack.c.l.b16 %v116
  %v402 = vunpack.c.h.b16 %v116
  %v403 = vunpack.c.l.b16 %v117
  %v404 = vunpack.c.h.b16 %v117
  %v405 = vunpack.c.l.b16 %v118
  %v406 = vunpack.c.h.b16 %v118
  %v407 = vunpack.c.l.b16 %v119
  %v408 = vunpack.c.h.b16 %v119
  %v409 = vunpack.c.l.b16 %v120
  %v410 = vunpack.c.h.b16 %v120
  %v411 = vunpack.c.l.b16 %v121
  %v412 = vunpack.c.h.b16 %v121
  %v413 = vunpack.c.l.b16 %v122
  %v414 = vunpack.c.h.b16 %v122
  %v415 = vunpack.c.l.b16 %v123
  %v416 = vunpack.c.h.b16 %v123
  %v417 = vunpack.c.l.b16 %v124
  %v418 = vunpack.c.h.b16 %v124
  %v419 = vunpack.c.l.b16 %v125
  %v420 = vunpack.c.h.b16 %v125
  %v421 = vunpack.c.l.b16 %v126
  %v422 = vunpack.c.h.b16 %v126
  %v423 = vunpack.c.l.b16 %v127
  %v424 = vunpack.c.h.b16 %v127
  %v425 = vunpack.c.l.b16 %v128
  %v426 = vunpack.c.h.b16 %v128
  %v427 = vunpack.c.l.b16 %v129
  %v428 = vunpack.c.h.b16 %v129
  %v429 = vunpack.c.l.b16 %v130
  %v430 = vunpack.c.h.b16 %v130
  %v431 = vunpack.c.l.b16 %v131
  %v432 = vunpack.c.h.b16 %v131
  %v433 = vunpack.c.l.b16 %v132
  %v434 = vunpack.c.h.b16 %v132
  %v435 = vunpack.c.l.b16 %v133
  %v436 = vunpack.c.h.b16 %v133
  %v437 = vunpack.c.l.b16 %v134
  %v438 = vunpack.c.h.b16 %v134
  %v439 = vpack.c.b16 %v251, %v247
  %v440 = vpack.c.b16 %v252, %v248
  %v441 = vpack.c.b16 %v253, %v249
  %v442 = vpack.c.b16 %v254, %v250
  %v443 = vpack.c.b16 %v259, %v255
  %v444 = vpack.c.b16 %v260, %v256
  %v445 = vpack.c.b16 %v261, %v257
  %v446 = vpack.c.b16 %v262, %v258
  %v447 = vpack.c.b16 %v267, %v263
  %v448 = vpack.c.b16 %v268, %v264
  %v449 = vpack.c.b16 %v269, %v265
  %v450 = vpack.c.b16 %v270, %v266
  %v451 = vpack.c.b16 %v275, %v271
  %v452 = vpack.c.b16 %v276, %v272
  %v453 = vpack.c.b16 %v277, %v273
  %v454 = vpack.c.b16 %v278, %v274
  %v455 = vpack.c.b16 %v283, %v279
  %v456 = vpack.c.b16 %v284, %v280
  %v457 = vpack.c.b16 %v285, %v281
  %v458 = vpack.c.b16 %v286, %v282
  %v459 = vpack.c.b16 %v291, %v287
  %v460 = vpack.c.b16 %v292, %v288
  %v461 = vpack.c.b16 %v293, %v289
  %v462 = vpack.c.b16 %v294, %v290
  %v463 = vpack.c.b16 %v299, %v295
  %v464 = vpack.c.b16 %v300, %v296
  %v465 = vpack.c.b16 %v301, %v297
  %v466 = vpack.c.b16 %v302, %v298
  %v467 = vpack.c.b16 %v307, %v303
  %v468 = vpack.c.b16 %v308, %v304
  %v469 = vpack.c.b16 %v309, %v305
  %v470 = vpack.c.b16 %v310, %v306
  %v471 = vpack.c.b16 %v315, %v311
  %v472 = vpack.c.b16 %v316, %v312
  %v473 = vpack.c.b16 %v317, %v313
  %v474 = vpack.c.b16 %v318, %v314
  %v475 = vpack.c.b16 %v323, %v319
  %v476 = vpack.c.b16 %v324, %v320
  %v477 = vpack.c.b16 %v325, %v321
  %v478 = vpack.c.b16 %v326, %v322
  %v479 = vpack.c.b16 %v331, %v327
  %v480 = vpack.c.b16 %v332, %v328
  %v481 = vpack.c.b16 %v333, %v329
  %v482 = vpack.c.b16 %v334, %v330
  %v483 = vpack.c.b16 %v339, %v335
  %v484 = vpack.c.b16 %v340, %v336
  %v485 = vpack.c.b16 %v341, %v337
  %v486 = vpack.c.b16 %v342, %v338
  %v487 = vpack.c.b16 %v347, %v343
  %v488 = vpack.c.b16 %v348, %v344
  %v489 = vpack.c.b16 %v349, %v345
  %v490 = vpack.c.b16 %v350, %v346
  %v491 = vpack.c.b16 %v355, %v351
  %v492 = vpack.c.b16 %v356, %v352
  %v493 = vpack.c.b16 %v357, %v353
  %v494 = vpack.c.b16 %v358, %v354
  %v495 = vpack.c.b16 %v363, %v359
  %v496 = vpack.c.b16 %v364, %v360
  %v497 = vpack.c.b16 %v365, %v361
  %v498 = vpack.c.b16 %v366, %v362
  %v499 = vpack.c.b16 %v371, %v367
  %v500 = vpack.c.b16 %v372, %v368
  %v501 = vpack.c.b16 %v373, %v369
  %v502 = vpack.c.b16 %v374, %v370
  %v503 = vpack.c.b16 %v379, %v375
  %v504 = vpack.c.b16 %v380, %v376
  %v505 = vpack.c.b16 %v381, %v377
  %v506 = vpack.c.b16 %v382, %v378
  %v507 = vpack.c.b16 %v387, %v383
  %v508 = vpack.c.b16 %v388, %v384
  %v509 = vpack.c.b16 %v389, %v385
  %v510 = vpack.c.b16 %v390, %v386
  %v511 = vpack.c.b16 %v395, %v391
  %v512 = vpack.c.b16 %v396, %v392
  %v513 = vpack.c.b16 %v397, %v393
  %v514 = vpack.c.b16 %v398, %v394
  %v515 = vpack.c.b16 %v403, %v399
  %v516 = vpack.c.b16 %v404, %v400
  %v517 = vpack.c.b16 %v405, %v401
  %v518 = vpack.c.b16 %v406, %v402
  %v519 = vpack.c.b16 %v411, %v407
  %v520 = vpack.c.b16 %v412, %v408
  %v521 = vpack.c.b16 %v413, %v409
  %v522 = vpack.c.b16 %v414, %v410
  %v523 = vpack.c.b16 %v419, %v415
  %v524 = vpack.c.b16 %v420, %v416
  %v525 = vpack.c.b16 %v421, %v417
  %v526 = vpack.c.b16 %v422, %v418
  %v527 = vpack.c.b16 %v427, %v423
  %v528 = vpack.c.b16 %v428, %v424
  %v529 = vpack.c.b16 %v429, %v425
  %v530 = vpack.c.b16 %v430, %v426
  %v531 = vpack.c.b16 %v435, %v431
  %v532 = vpack.c.b16 %v436, %v432
  %v533 = vpack.c.b16 %v437, %v433
  %v534 = vpack.c.b16 %v438, %v434
  %631 = vmatprep.subr.bf16.mxu0 %v468
  %632 = vmatpush1.bf16.msra.mxu0 %v467
  %633 = vmatprep.subr.bf16.mxu0 %v464
  %634 = vmatpush1.bf16.msra.mxu0 %v463
  %635 = vmatprep.subr.bf16.mxu0 %v460
  %636 = vmatpush1.bf16.msra.mxu0 %v459
  %637 = vmatprep.subr.bf16.mxu0 %v456
  %638 = vmatpush1.bf16.msra.mxu0 %v455
  %639 = vmatprep.subr.bf16.mxu0 %v452
  %640 = vmatpush1.bf16.msra.mxu0 %v451
  %641 = vmatprep.subr.bf16.mxu0 %v448
  %642 = vmatpush1.bf16.msra.mxu0 %v447
  %643 = vmatprep.subr.bf16.mxu0 %v444
  %644 = vmatpush1.bf16.msra.mxu0 %v443
  %645 = vmatprep.subr.bf16.mxu0 %v440
  %646 = vmatpush1.bf16.msra.mxu0 %v439
  %647 = vmatprep.subr.bf16.mxu0 %v500
  %648 = vmatpush2.bf16.msra.mxu0 %v499
  %649 = vmatprep.subr.bf16.mxu0 %v496
  %650 = vmatpush2.bf16.msra.mxu0 %v495
  %651 = vmatprep.subr.bf16.mxu0 %v492
  %652 = vmatpush2.bf16.msra.mxu0 %v491
  %653 = vmatprep.subr.bf16.mxu0 %v488
  %654 = vmatpush2.bf16.msra.mxu0 %v487
  %655 = vmatprep.subr.bf16.mxu0 %v484
  %656 = vmatpush2.bf16.msra.mxu0 %v483
  %657 = vmatprep.subr.bf16.mxu0 %v480
  %658 = vmatpush2.bf16.msra.mxu0 %v479
  %659 = vmatprep.subr.bf16.mxu0 %v476
  %660 = vmatpush2.bf16.msra.mxu0 %v475
  %661 = vmatprep.subr.bf16.mxu0 %v472
  %662 = vmatpush2.bf16.msra.mxu0 %v471
  %663 = vmatprep.mubr.bf16.mxu0 %v146
  %664 = vmatmul.mubr.bf16.gmra.mxu0 %v145
  %v665 = vpop.f32.mrf.mxu0
  %v666 = vadd.f32 0.0, %v665
  %v667 = vpop.f32.mrf.mxu0
  %v668 = vadd.f32 0.0, %v667
  %v669 = vpop.f32.mrf.mxu0
  %v670 = vadd.f32 0.0, %v669
  %v671 = vpop.f32.mrf.mxu0
  %v672 = vadd.f32 0.0, %v671
  %673 = vdwg.mxu0
  %674 = vmatprep.subr.bf16.mxu0 %v532
  %675 = vmatpush1.bf16.msra.mxu0 %v531
  %676 = vmatprep.subr.bf16.mxu0 %v528
  %677 = vmatpush1.bf16.msra.mxu0 %v527
  %678 = vmatprep.subr.bf16.mxu0 %v524
  %679 = vmatpush1.bf16.msra.mxu0 %v523
  %680 = vmatprep.subr.bf16.mxu0 %v520
  %681 = vmatpush1.bf16.msra.mxu0 %v519
  %682 = vmatprep.subr.bf16.mxu0 %v516
  %683 = vmatpush1.bf16.msra.mxu0 %v515
  %684 = vmatprep.subr.bf16.mxu0 %v512
  %685 = vmatpush1.bf16.msra.mxu0 %v511
  %686 = vmatprep.subr.bf16.mxu0 %v508
  %687 = vmatpush1.bf16.msra.mxu0 %v507
  %688 = vmatprep.subr.bf16.mxu0 %v504
  %689 = vmatpush1.bf16.msra.mxu0 %v503
  %690 = vmatprep.subr.bf16.mxu0 0
  %691 = vmatpush2.bf16.msra.mxu0 0
  %692 = vmatprep.subr.bf16.mxu0 0
  %693 = vmatpush2.bf16.msra.mxu0 0
  %694 = vmatprep.subr.bf16.mxu0 0
  %695 = vmatpush2.bf16.msra.mxu0 0
  %696 = vmatprep.subr.bf16.mxu0 0
  %697 = vmatpush2.bf16.msra.mxu0 0
  %698 = vmatprep.subr.bf16.mxu0 0
  %699 = vmatpush2.bf16.msra.mxu0 0
  %700 = vmatprep.subr.bf16.mxu0 0
  %701 = vmatpush2.bf16.msra.mxu0 0
  %702 = vmatprep.subr.bf16.mxu0 0
  %703 = vmatpush2.bf16.msra.mxu0 0
  %704 = vmatprep.subr.bf16.mxu0 0
  %705 = vmatpush2.bf16.msra.mxu0 0
  %706 = vmatprep.mubr.bf16.mxu0 0
  %707 = vmatmul.mubr.bf16.gmra.mxu0 %v147
  %v708 = vpop.f32.mrf.mxu0
  %v709 = vadd.f32 %v666, %v708
  %v710 = vpop.f32.mrf.mxu0
  %v711 = vadd.f32 %v668, %v710
  %v712 = vpop.f32.mrf.mxu0
  %v713 = vadd.f32 %v670, %v712
  %v714 = vpop.f32.mrf.mxu0
  %v715 = vadd.f32 %v672, %v714
  %716 = vdwg.mxu0
  %717 = vmatprep.subr.bf16.mxu0 %v470
  %718 = vmatpush1.bf16.msra.mxu0 %v469
  %719 = vmatprep.subr.bf16.mxu0 %v466
  %720 = vmatpush1.bf16.msra.mxu0 %v465
  %721 = vmatprep.subr.bf16.mxu0 %v462
  %722 = vmatpush1.bf16.msra.mxu0 %v461
  %723 = vmatprep.subr.bf16.mxu0 %v458
  %724 = vmatpush1.bf16.msra.mxu0 %v457
  %725 = vmatprep.subr.bf16.mxu0 %v454
  %726 = vmatpush1.bf16.msra.mxu0 %v453
  %727 = vmatprep.subr.bf16.mxu0 %v450
  %728 = vmatpush1.bf16.msra.mxu0 %v449
  %729 = vmatprep.subr.bf16.mxu0 %v446
  %730 = vmatpush1.bf16.msra.mxu0 %v445
  %731 = vmatprep.subr.bf16.mxu0 %v442
  %732 = vmatpush1.bf16.msra.mxu0 %v441
  %733 = vmatprep.subr.bf16.mxu0 %v502
  %734 = vmatpush2.bf16.msra.mxu0 %v501
  %735 = vmatprep.subr.bf16.mxu0 %v498
  %736 = vmatpush2.bf16.msra.mxu0 %v497
  %737 = vmatprep.subr.bf16.mxu0 %v494
  %738 = vmatpush2.bf16.msra.mxu0 %v493
  %739 = vmatprep.subr.bf16.mxu0 %v490
  %740 = vmatpush2.bf16.msra.mxu0 %v489
  %741 = vmatprep.subr.bf16.mxu0 %v486
  %742 = vmatpush2.bf16.msra.mxu0 %v485
  %743 = vmatprep.subr.bf16.mxu0 %v482
  %744 = vmatpush2.bf16.msra.mxu0 %v481
  %745 = vmatprep.subr.bf16.mxu0 %v478
  %746 = vmatpush2.bf16.msra.mxu0 %v477
  %747 = vmatprep.subr.bf16.mxu0 %v474
  %748 = vmatpush2.bf16.msra.mxu0 %v473
  %749 = vmatprep.mubr.bf16.mxu0 %v146
  %750 = vmatmul.mubr.bf16.gmra.mxu0 %v145
  %v751 = vpop.f32.mrf.mxu0
  %v752 = vadd.f32 0.0, %v751
  %v753 = vpop.f32.mrf.mxu0
  %v754 = vadd.f32 0.0, %v753
  %v755 = vpop.f32.mrf.mxu0
  %v756 = vadd.f32 0.0, %v755
  %v757 = vpop.f32.mrf.mxu0
  %v758 = vadd.f32 0.0, %v757
  %759 = vdwg.mxu0
  %760 = vmatprep.subr.bf16.mxu0 %v534
  %761 = vmatpush1.bf16.msra.mxu0 %v533
  %762 = vmatprep.subr.bf16.mxu0 %v530
  %763 = vmatpush1.bf16.msra.mxu0 %v529
  %764 = vmatprep.subr.bf16.mxu0 %v526
  %765 = vmatpush1.bf16.msra.mxu0 %v525
  %766 = vmatprep.subr.bf16.mxu0 %v522
  %767 = vmatpush1.bf16.msra.mxu0 %v521
  %768 = vmatprep.subr.bf16.mxu0 %v518
  %769 = vmatpush1.bf16.msra.mxu0 %v517
  %770 = vmatprep.subr.bf16.mxu0 %v514
  %771 = vmatpush1.bf16.msra.mxu0 %v513
  %772 = vmatprep.subr.bf16.mxu0 %v510
  %773 = vmatpush1.bf16.msra.mxu0 %v509
  %774 = vmatprep.subr.bf16.mxu0 %v506
  %775 = vmatpush1.bf16.msra.mxu0 %v505
  %776 = vmatprep.subr.bf16.mxu0 0
  %777 = vmatpush2.bf16.msra.mxu0 0
  %778 = vmatprep.subr.bf16.mxu0 0
  %779 = vmatpush2.bf16.msra.mxu0 0
  %780 = vmatprep.subr.bf16.mxu0 0
  %781 = vmatpush2.bf16.msra.mxu0 0
  %782 = vmatprep.subr.bf16.mxu0 0
  %783 = vmatpush2.bf16.msra.mxu0 0
  %784 = vmatprep.subr.bf16.mxu0 0
  %785 = vmatpush2.bf16.msra.mxu0 0
  %786 = vmatprep.subr.bf16.mxu0 0
  %787 = vmatpush2.bf16.msra.mxu0 0
  %788 = vmatprep.subr.bf16.mxu0 0
  %789 = vmatpush2.bf16.msra.mxu0 0
  %790 = vmatprep.subr.bf16.mxu0 0
  %791 = vmatpush2.bf16.msra.mxu0 0
  %792 = vmatprep.mubr.bf16.mxu0 0
  %793 = vmatmul.mubr.bf16.gmra.mxu0 %v147
  %v794 = vpop.f32.mrf.mxu0
  %v795 = vadd.f32 %v752, %v794
  %v796 = vpop.f32.mrf.mxu0
  %v797 = vadd.f32 %v754, %v796
  %v798 = vpop.f32.mrf.mxu0
  %v799 = vadd.f32 %v756, %v798
  %v800 = vpop.f32.mrf.mxu0
  %v801 = vadd.f32 %v758, %v800
  %802 = vdwg.mxu0
  %v803 = vadd.f32 %v27, %v709
  %v804 = vadd.f32 %v28, %v711
  %v805 = vadd.f32 %v29, %v795
  %v806 = vadd.f32 %v30, %v797
  %v807 = vadd.f32 %v31, %v713
  %v808 = vadd.f32 %v32, %v715
  %v809 = vadd.f32 %v33, %v799
  %v810 = vadd.f32 %v34, %v801
  %811 = vst [vmem:[#allocation2] sm:$0xff] %v803
  %812 = vst [vmem:[#allocation2 + $0x8] sm:$0xff] %v804
  %813 = vst [vmem:[#allocation2 + $0x10] sm:$0xff] %v805
  %814 = vst [vmem:[#allocation2 + $0x18] sm:$0xff] %v806
  %815 = vst [vmem:[#allocation2 + $0x20] sm:$0xff] %v807
  %816 = vst [vmem:[#allocation2 + $0x28] sm:$0xff] %v808
  %817 = vst [vmem:[#allocation2 + $0x30] sm:$0xff] %v809
  %818 = vst [vmem:[#allocation2 + $0x38] sm:$0xff] %v810
  // Predicated region
  $region18: #{vae_with_classifier_forward.18} parent=0 // pred_check
    %p819 = pneg %p15
  $region19: #{vae_with_classifier_forward.18} parent=0 // pred_check_branch
    %821 = sbr.rel (%p819) target = $region21
  $region20: #{vae_with_classifier_forward.18} parent=0 // pred_region
    %v822 = vld [vmem:[#allocation2] sm:$0xff]
    %v823 = vld [vmem:[#allocation2 + $0x8] sm:$0xff]
    %v824 = vld [vmem:[#allocation2 + $0x10] sm:$0xff]
    %v825 = vld [vmem:[#allocation2 + $0x18] sm:$0xff]
    %v826 = vld [vmem:[#allocation2 + $0x20] sm:$0xff]
    %v827 = vld [vmem:[#allocation2 + $0x28] sm:$0xff]
    %v828 = vld [vmem:[#allocation2 + $0x30] sm:$0xff]
    %v829 = vld [vmem:[#allocation2 + $0x38] sm:$0xff]
    %v830 = vld [vmem:[%s2] sm:$0xf]
    %v832 = vlaneseq
    %v833 = vshrl.u32 %v832, 7
    %v834 = vsub.s32 0, %v833
    %v835 = vrot.slane %v830, %v834
    %v836 = vlaneseq
    %v837 = vshrl.u32 %v836, 7
    %v838 = vsub.s32 1, %v837
    %v839 = vrot.slane %v830, %v838
    %v840 = vlaneseq
    %v841 = vshrl.u32 %v840, 7
    %v842 = vsub.s32 2, %v841
    %v843 = vrot.slane %v830, %v842
    %v844 = vlaneseq
    %v845 = vshrl.u32 %v844, 7
    %v846 = vsub.s32 3, %v845
    %v847 = vrot.slane %v830, %v846
    %v852 = vadd.f32 %v822, %v835
    %v853 = vadd.f32 %v823, %v839
    %v854 = vadd.f32 %v824, %v843
    %v855 = vadd.f32 %v825, %v847
    %v856 = vadd.f32 %v826, %v835
    %v857 = vadd.f32 %v827, %v839
    %v858 = vadd.f32 %v828, %v843
    %v859 = vadd.f32 %v829, %v847
    %v860 = vmax.f32 %v852, 0.0
    %v861 = vmax.f32 %v853, 0.0
    %v862 = vmax.f32 %v854, 0.0
    %v863 = vmax.f32 %v855, 0.0
    %v864 = vmax.f32 %v856, 0.0
    %v865 = vmax.f32 %v857, 0.0
    %v866 = vmax.f32 %v858, 0.0
    %v867 = vmax.f32 %v859, 0.0
    %v868 = vpack.c.bf16 %v864, %v860
    %v869 = vpack.c.bf16 %v865, %v861
    %v870 = vpack.c.bf16 %v866, %v862
    %v871 = vpack.c.bf16 %v867, %v863
    %v876 = vunpack.c.l.b16 %v868
    %v877 = vunpack.c.l.b16 %v869
    %v878 = vunpack.c.l.b16 %v870
    %v879 = vunpack.c.l.b16 %v871
    %v880 = vunpack.c.h.b16 %v868
    %v881 = vunpack.c.h.b16 %v869
    %v882 = vunpack.c.h.b16 %v870
    %v883 = vunpack.c.h.b16 %v871
    %v884 = vpack.c.b16 %v877, %v876
    %v885 = vpack.c.b16 %v879, %v878
    %v886 = vpack.c.b16 %v881, %v880
    %v887 = vpack.c.b16 %v883, %v882
    %892 = vst [vmem:[%s3] sm:$0xff] %v884
    %893 = vst [vmem:[%s3 + $0x8] sm:$0xff] %v885
    %894 = vst [vmem:[%s3 + $0x10] sm:$0xff] %v886
    %895 = vst [vmem:[%s3 + $0x18] sm:$0xff] %v887
  $region21: #{vae_with_classifier_forward.18} parent=0 // pred_fallthru
    _
  // Predicated region
  $region22: #{vae_with_classifier_forward.18} parent=0 // pred_check
    _
  $region23: #{vae_with_classifier_forward.18} parent=0 // pred_check_branch
    %897 = sbr.rel (0) target = $region25
  $region24: #{vae_with_classifier_forward.18} parent=0 // pred_region
    _
  $region25: #{vae_with_classifier_forward.18} parent=0 // pred_fallthru
    _
  // Predicated region
  $region26: #{vae_with_classifier_forward.18} parent=0 // pred_check
    _
  $region27: #{vae_with_classifier_forward.18} parent=0 // pred_check_branch
    %899 = sbr.rel (0) target = $region29
  $region28: #{vae_with_classifier_forward.18} parent=0 // pred_region
    _
  $region29: #{vae_with_classifier_forward.18} parent=0 // pred_fallthru
    _

// kernel: vae_with_classifier_forward.19
$region0: #{vae_with_classifier_forward.19}
  #allocation0 [shape = 'u32[]', space=smem, size = 0x4, offset = 0x4, fixed_abs, tag = 'smem constant byte address 0x4 - core index']
  #allocation1 [shape = 'u32[144,128]{1,0:T(1,128)}', space=vmem, size = 0x12000, scoped, tag = 'internal scratch']
  #allocation2 [shape = 'f32[16,256]{1,0:T(8,128)}', space=vmem, size = 0x4000, scoped, tag = 'scratch operand']
  %s0 = inlined_call_operand.vmem [shape: bf16[16,512], index: 0, kind: input, shape index: {}]
  %s1 = inlined_call_operand.vmem [shape: bf16[512,256], index: 1, kind: input, shape index: {}]
  %s2 = inlined_call_operand.vmem [shape: f32[1,256], index: 2, kind: input, shape index: {}]
  %s3 = inlined_call_operand.vmem [shape: f32[16,256], index: 3, kind: output, shape index: {}]
  %s4 = sld [smem:[#allocation0]]
  $region30: #{vae_with_classifier_forward.19} parent=0
    _
  %s6 = ssub.s32 1, %s4
  %s7 = scalar_select 0, %s6, %s4
  // Predicated region
  $region2: #{vae_with_classifier_forward.19} parent=0 // pred_check
    _
  $region3: #{vae_with_classifier_forward.19} parent=0 // pred_check_branch
    %9 = sbr.rel (0) target = $region5
  $region4: #{vae_with_classifier_forward.19} parent=0 // pred_region
    _
  $region5: #{vae_with_classifier_forward.19} parent=0 // pred_fallthru
    _
  // Predicated region
  $region6: #{vae_with_classifier_forward.19} parent=0 // pred_check
    _
  $region7: #{vae_with_classifier_forward.19} parent=0 // pred_check_branch
    %11 = sbr.rel (0) target = $region9
  $region8: #{vae_with_classifier_forward.19} parent=0 // pred_region
    _
  $region9: #{vae_with_classifier_forward.19} parent=0 // pred_fallthru
    _
  // Predicated region
  $region10: #{vae_with_classifier_forward.19} parent=0 // pred_check
    _
  $region11: #{vae_with_classifier_forward.19} parent=0 // pred_check_branch
    %13 = sbr.rel (0) target = $region13
  $region12: #{vae_with_classifier_forward.19} parent=0 // pred_region
    _
  $region13: #{vae_with_classifier_forward.19} parent=0 // pred_fallthru
    _
  %p14 = scmp.eq.s32.totalorder 0, 0
  // Predicated region
  $region14: #{vae_with_classifier_forward.19} parent=0 // pred_check
    %p15 = pneg %p14
  $region15: #{vae_with_classifier_forward.19} parent=0 // pred_check_branch
    %17 = sbr.rel (%p15) target = $region17
  $region16: #{vae_with_classifier_forward.19} parent=0 // pred_region
    %18 = vst [vmem:[#allocation2] sm:$0xff] 0.0
    %19 = vst [vmem:[#allocation2 + $0x8] sm:$0xff] 0.0
    %20 = vst [vmem:[#allocation2 + $0x10] sm:$0xff] 0.0
    %21 = vst [vmem:[#allocation2 + $0x18] sm:$0xff] 0.0
  $region17: #{vae_with_classifier_forward.19} parent=0 // pred_fallthru
    _
  %v22 = vld [vmem:[#allocation2] sm:$0xff]
  %v23 = vld [vmem:[#allocation2 + $0x8] sm:$0xff]
  %v24 = vld [vmem:[#allocation2 + $0x10] sm:$0xff]
  %v25 = vld [vmem:[#allocation2 + $0x18] sm:$0xff]
  %v26 = vld [vmem:[%s0] sm:$0xff]
  %v27 = vld [vmem:[%s0 + $0x8] sm:$0xff]
  %v28 = vld [vmem:[%s0 + $0x10] sm:$0xff]
  %v29 = vld [vmem:[%s0 + $0x18] sm:$0xff]
  %v30 = vld [vmem:[%s1] sm:$0xff]
  %v31 = vld [vmem:[%s1 + $0x8] sm:$0xff]
  %v32 = vld [vmem:[%s1 + $0x10] sm:$0xff]
  %v33 = vld [vmem:[%s1 + $0x18] sm:$0xff]
  %v34 = vld [vmem:[%s1 + $0x20] sm:$0xff]
  %v35 = vld [vmem:[%s1 + $0x28] sm:$0xff]
  %v36 = vld [vmem:[%s1 + $0x30] sm:$0xff]
  %v37 = vld [vmem:[%s1 + $0x38] sm:$0xff]
  %v38 = vld [vmem:[%s1 + $0x40] sm:$0xff]
  %v39 = vld [vmem:[%s1 + $0x48] sm:$0xff]
  %v40 = vld [vmem:[%s1 + $0x50] sm:$0xff]
  %v41 = vld [vmem:[%s1 + $0x58] sm:$0xff]
  %v42 = vld [vmem:[%s1 + $0x60] sm:$0xff]
  %v43 = vld [vmem:[%s1 + $0x68] sm:$0xff]
  %v44 = vld [vmem:[%s1 + $0x70] sm:$0xff]
  %v45 = vld [vmem:[%s1 + $0x78] sm:$0xff]
  %v46 = vld [vmem:[%s1 + $0x80] sm:$0xff]
  %v47 = vld [vmem:[%s1 + $0x88] sm:$0xff]
  %v48 = vld [vmem:[%s1 + $0x90] sm:$0xff]
  %v49 = vld [vmem:[%s1 + $0x98] sm:$0xff]
  %v50 = vld [vmem:[%s1 + $0xa0] sm:$0xff]
  %v51 = vld [vmem:[%s1 + $0xa8] sm:$0xff]
  %v52 = vld [vmem:[%s1 + $0xb0] sm:$0xff]
  %v53 = vld [vmem:[%s1 + $0xb8] sm:$0xff]
  %v54 = vld [vmem:[%s1 + $0xc0] sm:$0xff]
  %v55 = vld [vmem:[%s1 + $0xc8] sm:$0xff]
  %v56 = vld [vmem:[%s1 + $0xd0] sm:$0xff]
  %v57 = vld [vmem:[%s1 + $0xd8] sm:$0xff]
  %v58 = vld [vmem:[%s1 + $0xe0] sm:$0xff]
  %v59 = vld [vmem:[%s1 + $0xe8] sm:$0xff]
  %v60 = vld [vmem:[%s1 + $0xf0] sm:$0xff]
  %v61 = vld [vmem:[%s1 + $0xf8] sm:$0xff]
  %v62 = vld [vmem:[%s1 + $0x100] sm:$0xff]
  %v63 = vld [vmem:[%s1 + $0x108] sm:$0xff]
  %v64 = vld [vmem:[%s1 + $0x110] sm:$0xff]
  %v65 = vld [vmem:[%s1 + $0x118] sm:$0xff]
  %v66 = vld [vmem:[%s1 + $0x120] sm:$0xff]
  %v67 = vld [vmem:[%s1 + $0x128] sm:$0xff]
  %v68 = vld [vmem:[%s1 + $0x130] sm:$0xff]
  %v69 = vld [vmem:[%s1 + $0x138] sm:$0xff]
  %v70 = vld [vmem:[%s1 + $0x140] sm:$0xff]
  %v71 = vld [vmem:[%s1 + $0x148] sm:$0xff]
  %v72 = vld [vmem:[%s1 + $0x150] sm:$0xff]
  %v73 = vld [vmem:[%s1 + $0x158] sm:$0xff]
  %v74 = vld [vmem:[%s1 + $0x160] sm:$0xff]
  %v75 = vld [vmem:[%s1 + $0x168] sm:$0xff]
  %v76 = vld [vmem:[%s1 + $0x170] sm:$0xff]
  %v77 = vld [vmem:[%s1 + $0x178] sm:$0xff]
  %v78 = vld [vmem:[%s1 + $0x180] sm:$0xff]
  %v79 = vld [vmem:[%s1 + $0x188] sm:$0xff]
  %v80 = vld [vmem:[%s1 + $0x190] sm:$0xff]
  %v81 = vld [vmem:[%s1 + $0x198] sm:$0xff]
  %v82 = vld [vmem:[%s1 + $0x1a0] sm:$0xff]
  %v83 = vld [vmem:[%s1 + $0x1a8] sm:$0xff]
  %v84 = vld [vmem:[%s1 + $0x1b0] sm:$0xff]
  %v85 = vld [vmem:[%s1 + $0x1b8] sm:$0xff]
  %v86 = vld [vmem:[%s1 + $0x1c0] sm:$0xff]
  %v87 = vld [vmem:[%s1 + $0x1c8] sm:$0xff]
  %v88 = vld [vmem:[%s1 + $0x1d0] sm:$0xff]
  %v89 = vld [vmem:[%s1 + $0x1d8] sm:$0xff]
  %v90 = vld [vmem:[%s1 + $0x1e0] sm:$0xff]
  %v91 = vld [vmem:[%s1 + $0x1e8] sm:$0xff]
  %v92 = vld [vmem:[%s1 + $0x1f0] sm:$0xff]
  %v93 = vld [vmem:[%s1 + $0x1f8] sm:$0xff]
  %v98 = vunpack.c.l.b16 %v26
  %v99 = vunpack.c.h.b16 %v26
  %v100 = vunpack.c.l.b16 %v27
  %v101 = vunpack.c.h.b16 %v27
  %v102 = vunpack.c.l.b16 %v28
  %v103 = vunpack.c.h.b16 %v28
  %v104 = vunpack.c.l.b16 %v29
  %v105 = vunpack.c.h.b16 %v29
  %v106 = vpack.c.b16 %v102, %v98
  %v107 = vpack.c.b16 %v103, %v99
  %v108 = vpack.c.b16 %v104, %v100
  %v109 = vpack.c.b16 %v105, %v101
  %v178 = vunpack.c.l.b16 %v30
  %v179 = vunpack.c.h.b16 %v30
  %v180 = vunpack.c.l.b16 %v31
  %v181 = vunpack.c.h.b16 %v31
  %v182 = vunpack.c.l.b16 %v32
  %v183 = vunpack.c.h.b16 %v32
  %v184 = vunpack.c.l.b16 %v33
  %v185 = vunpack.c.h.b16 %v33
  %v186 = vunpack.c.l.b16 %v34
  %v187 = vunpack.c.h.b16 %v34
  %v188 = vunpack.c.l.b16 %v35
  %v189 = vunpack.c.h.b16 %v35
  %v190 = vunpack.c.l.b16 %v36
  %v191 = vunpack.c.h.b16 %v36
  %v192 = vunpack.c.l.b16 %v37
  %v193 = vunpack.c.h.b16 %v37
  %v194 = vunpack.c.l.b16 %v38
  %v195 = vunpack.c.h.b16 %v38
  %v196 = vunpack.c.l.b16 %v39
  %v197 = vunpack.c.h.b16 %v39
  %v198 = vunpack.c.l.b16 %v40
  %v199 = vunpack.c.h.b16 %v40
  %v200 = vunpack.c.l.b16 %v41
  %v201 = vunpack.c.h.b16 %v41
  %v202 = vunpack.c.l.b16 %v42
  %v203 = vunpack.c.h.b16 %v42
  %v204 = vunpack.c.l.b16 %v43
  %v205 = vunpack.c.h.b16 %v43
  %v206 = vunpack.c.l.b16 %v44
  %v207 = vunpack.c.h.b16 %v44
  %v208 = vunpack.c.l.b16 %v45
  %v209 = vunpack.c.h.b16 %v45
  %v210 = vunpack.c.l.b16 %v46
  %v211 = vunpack.c.h.b16 %v46
  %v212 = vunpack.c.l.b16 %v47
  %v213 = vunpack.c.h.b16 %v47
  %v214 = vunpack.c.l.b16 %v48
  %v215 = vunpack.c.h.b16 %v48
  %v216 = vunpack.c.l.b16 %v49
  %v217 = vunpack.c.h.b16 %v49
  %v218 = vunpack.c.l.b16 %v50
  %v219 = vunpack.c.h.b16 %v50
  %v220 = vunpack.c.l.b16 %v51
  %v221 = vunpack.c.h.b16 %v51
  %v222 = vunpack.c.l.b16 %v52
  %v223 = vunpack.c.h.b16 %v52
  %v224 = vunpack.c.l.b16 %v53
  %v225 = vunpack.c.h.b16 %v53
  %v226 = vunpack.c.l.b16 %v54
  %v227 = vunpack.c.h.b16 %v54
  %v228 = vunpack.c.l.b16 %v55
  %v229 = vunpack.c.h.b16 %v55
  %v230 = vunpack.c.l.b16 %v56
  %v231 = vunpack.c.h.b16 %v56
  %v232 = vunpack.c.l.b16 %v57
  %v233 = vunpack.c.h.b16 %v57
  %v234 = vunpack.c.l.b16 %v58
  %v235 = vunpack.c.h.b16 %v58
  %v236 = vunpack.c.l.b16 %v59
  %v237 = vunpack.c.h.b16 %v59
  %v238 = vunpack.c.l.b16 %v60
  %v239 = vunpack.c.h.b16 %v60
  %v240 = vunpack.c.l.b16 %v61
  %v241 = vunpack.c.h.b16 %v61
  %v242 = vunpack.c.l.b16 %v62
  %v243 = vunpack.c.h.b16 %v62
  %v244 = vunpack.c.l.b16 %v63
  %v245 = vunpack.c.h.b16 %v63
  %v246 = vunpack.c.l.b16 %v64
  %v247 = vunpack.c.h.b16 %v64
  %v248 = vunpack.c.l.b16 %v65
  %v249 = vunpack.c.h.b16 %v65
  %v250 = vunpack.c.l.b16 %v66
  %v251 = vunpack.c.h.b16 %v66
  %v252 = vunpack.c.l.b16 %v67
  %v253 = vunpack.c.h.b16 %v67
  %v254 = vunpack.c.l.b16 %v68
  %v255 = vunpack.c.h.b16 %v68
  %v256 = vunpack.c.l.b16 %v69
  %v257 = vunpack.c.h.b16 %v69
  %v258 = vunpack.c.l.b16 %v70
  %v259 = vunpack.c.h.b16 %v70
  %v260 = vunpack.c.l.b16 %v71
  %v261 = vunpack.c.h.b16 %v71
  %v262 = vunpack.c.l.b16 %v72
  %v263 = vunpack.c.h.b16 %v72
  %v264 = vunpack.c.l.b16 %v73
  %v265 = vunpack.c.h.b16 %v73
  %v266 = vunpack.c.l.b16 %v74
  %v267 = vunpack.c.h.b16 %v74
  %v268 = vunpack.c.l.b16 %v75
  %v269 = vunpack.c.h.b16 %v75
  %v270 = vunpack.c.l.b16 %v76
  %v271 = vunpack.c.h.b16 %v76
  %v272 = vunpack.c.l.b16 %v77
  %v273 = vunpack.c.h.b16 %v77
  %v274 = vunpack.c.l.b16 %v78
  %v275 = vunpack.c.h.b16 %v78
  %v276 = vunpack.c.l.b16 %v79
  %v277 = vunpack.c.h.b16 %v79
  %v278 = vunpack.c.l.b16 %v80
  %v279 = vunpack.c.h.b16 %v80
  %v280 = vunpack.c.l.b16 %v81
  %v281 = vunpack.c.h.b16 %v81
  %v282 = vunpack.c.l.b16 %v82
  %v283 = vunpack.c.h.b16 %v82
  %v284 = vunpack.c.l.b16 %v83
  %v285 = vunpack.c.h.b16 %v83
  %v286 = vunpack.c.l.b16 %v84
  %v287 = vunpack.c.h.b16 %v84
  %v288 = vunpack.c.l.b16 %v85
  %v289 = vunpack.c.h.b16 %v85
  %v290 = vunpack.c.l.b16 %v86
  %v291 = vunpack.c.h.b16 %v86
  %v292 = vunpack.c.l.b16 %v87
  %v293 = vunpack.c.h.b16 %v87
  %v294 = vunpack.c.l.b16 %v88
  %v295 = vunpack.c.h.b16 %v88
  %v296 = vunpack.c.l.b16 %v89
  %v297 = vunpack.c.h.b16 %v89
  %v298 = vunpack.c.l.b16 %v90
  %v299 = vunpack.c.h.b16 %v90
  %v300 = vunpack.c.l.b16 %v91
  %v301 = vunpack.c.h.b16 %v91
  %v302 = vunpack.c.l.b16 %v92
  %v303 = vunpack.c.h.b16 %v92
  %v304 = vunpack.c.l.b16 %v93
  %v305 = vunpack.c.h.b16 %v93
  %v306 = vpack.c.b16 %v180, %v178
  %v307 = vpack.c.b16 %v181, %v179
  %v308 = vpack.c.b16 %v184, %v182
  %v309 = vpack.c.b16 %v185, %v183
  %v310 = vpack.c.b16 %v188, %v186
  %v311 = vpack.c.b16 %v189, %v187
  %v312 = vpack.c.b16 %v192, %v190
  %v313 = vpack.c.b16 %v193, %v191
  %v314 = vpack.c.b16 %v196, %v194
  %v315 = vpack.c.b16 %v197, %v195
  %v316 = vpack.c.b16 %v200, %v198
  %v317 = vpack.c.b16 %v201, %v199
  %v318 = vpack.c.b16 %v204, %v202
  %v319 = vpack.c.b16 %v205, %v203
  %v320 = vpack.c.b16 %v208, %v206
  %v321 = vpack.c.b16 %v209, %v207
  %v322 = vpack.c.b16 %v212, %v210
  %v323 = vpack.c.b16 %v213, %v211
  %v324 = vpack.c.b16 %v216, %v214
  %v325 = vpack.c.b16 %v217, %v215
  %v326 = vpack.c.b16 %v220, %v218
  %v327 = vpack.c.b16 %v221, %v219
  %v328 = vpack.c.b16 %v224, %v222
  %v329 = vpack.c.b16 %v225, %v223
  %v330 = vpack.c.b16 %v228, %v226
  %v331 = vpack.c.b16 %v229, %v227
  %v332 = vpack.c.b16 %v232, %v230
  %v333 = vpack.c.b16 %v233, %v231
  %v334 = vpack.c.b16 %v236, %v234
  %v335 = vpack.c.b16 %v237, %v235
  %v336 = vpack.c.b16 %v240, %v238
  %v337 = vpack.c.b16 %v241, %v239
  %v338 = vpack.c.b16 %v244, %v242
  %v339 = vpack.c.b16 %v245, %v243
  %v340 = vpack.c.b16 %v248, %v246
  %v341 = vpack.c.b16 %v249, %v247
  %v342 = vpack.c.b16 %v252, %v250
  %v343 = vpack.c.b16 %v253, %v251
  %v344 = vpack.c.b16 %v256, %v254
  %v345 = vpack.c.b16 %v257, %v255
  %v346 = vpack.c.b16 %v260, %v258
  %v347 = vpack.c.b16 %v261, %v259
  %v348 = vpack.c.b16 %v264, %v262
  %v349 = vpack.c.b16 %v265, %v263
  %v350 = vpack.c.b16 %v268, %v266
  %v351 = vpack.c.b16 %v269, %v267
  %v352 = vpack.c.b16 %v272, %v270
  %v353 = vpack.c.b16 %v273, %v271
  %v354 = vpack.c.b16 %v276, %v274
  %v355 = vpack.c.b16 %v277, %v275
  %v356 = vpack.c.b16 %v280, %v278
  %v357 = vpack.c.b16 %v281, %v279
  %v358 = vpack.c.b16 %v284, %v282
  %v359 = vpack.c.b16 %v285, %v283
  %v360 = vpack.c.b16 %v288, %v286
  %v361 = vpack.c.b16 %v289, %v287
  %v362 = vpack.c.b16 %v292, %v290
  %v363 = vpack.c.b16 %v293, %v291
  %v364 = vpack.c.b16 %v296, %v294
  %v365 = vpack.c.b16 %v297, %v295
  %v366 = vpack.c.b16 %v300, %v298
  %v367 = vpack.c.b16 %v301, %v299
  %v368 = vpack.c.b16 %v304, %v302
  %v369 = vpack.c.b16 %v305, %v303
  %434 = vmatprep.subr.bf16.mxu0 %v321
  %435 = vmatpush1.bf16.msra.mxu0 %v320
  %436 = vmatprep.subr.bf16.mxu0 %v319
  %437 = vmatpush1.bf16.msra.mxu0 %v318
  %438 = vmatprep.subr.bf16.mxu0 %v317
  %439 = vmatpush1.bf16.msra.mxu0 %v316
  %440 = vmatprep.subr.bf16.mxu0 %v315
  %441 = vmatpush1.bf16.msra.mxu0 %v314
  %442 = vmatprep.subr.bf16.mxu0 %v313
  %443 = vmatpush1.bf16.msra.mxu0 %v312
  %444 = vmatprep.subr.bf16.mxu0 %v311
  %445 = vmatpush1.bf16.msra.mxu0 %v310
  %446 = vmatprep.subr.bf16.mxu0 %v309
  %447 = vmatpush1.bf16.msra.mxu0 %v308
  %448 = vmatprep.subr.bf16.mxu0 %v307
  %449 = vmatpush1.bf16.msra.mxu0 %v306
  %450 = vmatprep.subr.bf16.mxu0 %v337
  %451 = vmatpush2.bf16.msra.mxu0 %v336
  %452 = vmatprep.subr.bf16.mxu0 %v335
  %453 = vmatpush2.bf16.msra.mxu0 %v334
  %454 = vmatprep.subr.bf16.mxu0 %v333
  %455 = vmatpush2.bf16.msra.mxu0 %v332
  %456 = vmatprep.subr.bf16.mxu0 %v331
  %457 = vmatpush2.bf16.msra.mxu0 %v330
  %458 = vmatprep.subr.bf16.mxu0 %v329
  %459 = vmatpush2.bf16.msra.mxu0 %v328
  %460 = vmatprep.subr.bf16.mxu0 %v327
  %461 = vmatpush2.bf16.msra.mxu0 %v326
  %462 = vmatprep.subr.bf16.mxu0 %v325
  %463 = vmatpush2.bf16.msra.mxu0 %v324
  %464 = vmatprep.subr.bf16.mxu0 %v323
  %465 = vmatpush2.bf16.msra.mxu0 %v322
  %466 = vmatprep.mubr.bf16.mxu0 %v107
  %467 = vmatmul.mubr.bf16.gmra.mxu0 %v106
  %v468 = vpop.f32.mrf.mxu0
  %v469 = vadd.f32 0.0, %v468
  %v470 = vpop.f32.mrf.mxu0
  %v471 = vadd.f32 0.0, %v470
  %v472 = vpop.f32.mrf.mxu0
  %v473 = vadd.f32 0.0, %v472
  %v474 = vpop.f32.mrf.mxu0
  %v475 = vadd.f32 0.0, %v474
  %476 = vdwg.mxu0
  %477 = vmatprep.subr.bf16.mxu0 %v353
  %478 = vmatpush1.bf16.msra.mxu0 %v352
  %479 = vmatprep.subr.bf16.mxu0 %v351
  %480 = vmatpush1.bf16.msra.mxu0 %v350
  %481 = vmatprep.subr.bf16.mxu0 %v349
  %482 = vmatpush1.bf16.msra.mxu0 %v348
  %483 = vmatprep.subr.bf16.mxu0 %v347
  %484 = vmatpush1.bf16.msra.mxu0 %v346
  %485 = vmatprep.subr.bf16.mxu0 %v345
  %486 = vmatpush1.bf16.msra.mxu0 %v344
  %487 = vmatprep.subr.bf16.mxu0 %v343
  %488 = vmatpush1.bf16.msra.mxu0 %v342
  %489 = vmatprep.subr.bf16.mxu0 %v341
  %490 = vmatpush1.bf16.msra.mxu0 %v340
  %491 = vmatprep.subr.bf16.mxu0 %v339
  %492 = vmatpush1.bf16.msra.mxu0 %v338
  %493 = vmatprep.subr.bf16.mxu0 %v369
  %494 = vmatpush2.bf16.msra.mxu0 %v368
  %495 = vmatprep.subr.bf16.mxu0 %v367
  %496 = vmatpush2.bf16.msra.mxu0 %v366
  %497 = vmatprep.subr.bf16.mxu0 %v365
  %498 = vmatpush2.bf16.msra.mxu0 %v364
  %499 = vmatprep.subr.bf16.mxu0 %v363
  %500 = vmatpush2.bf16.msra.mxu0 %v362
  %501 = vmatprep.subr.bf16.mxu0 %v361
  %502 = vmatpush2.bf16.msra.mxu0 %v360
  %503 = vmatprep.subr.bf16.mxu0 %v359
  %504 = vmatpush2.bf16.msra.mxu0 %v358
  %505 = vmatprep.subr.bf16.mxu0 %v357
  %506 = vmatpush2.bf16.msra.mxu0 %v356
  %507 = vmatprep.subr.bf16.mxu0 %v355
  %508 = vmatpush2.bf16.msra.mxu0 %v354
  %509 = vmatprep.mubr.bf16.mxu0 %v109
  %510 = vmatmul.mubr.bf16.gmra.mxu0 %v108
  %v511 = vpop.f32.mrf.mxu0
  %v512 = vadd.f32 %v469, %v511
  %v513 = vpop.f32.mrf.mxu0
  %v514 = vadd.f32 %v471, %v513
  %v515 = vpop.f32.mrf.mxu0
  %v516 = vadd.f32 %v473, %v515
  %v517 = vpop.f32.mrf.mxu0
  %v518 = vadd.f32 %v475, %v517
  %519 = vdwg.mxu0
  %v520 = vadd.f32 %v22, %v512
  %v521 = vadd.f32 %v23, %v514
  %v522 = vadd.f32 %v24, %v516
  %v523 = vadd.f32 %v25, %v518
  %524 = vst [vmem:[#allocation2] sm:$0xff] %v520
  %525 = vst [vmem:[#allocation2 + $0x8] sm:$0xff] %v521
  %526 = vst [vmem:[#allocation2 + $0x10] sm:$0xff] %v522
  %527 = vst [vmem:[#allocation2 + $0x18] sm:$0xff] %v523
  // Predicated region
  $region18: #{vae_with_classifier_forward.19} parent=0 // pred_check
    %p528 = pneg %p14
  $region19: #{vae_with_classifier_forward.19} parent=0 // pred_check_branch
    %530 = sbr.rel (%p528) target = $region21
  $region20: #{vae_with_classifier_forward.19} parent=0 // pred_region
    %v531 = vld [vmem:[#allocation2] sm:$0xff]
    %v532 = vld [vmem:[#allocation2 + $0x8] sm:$0xff]
    %v533 = vld [vmem:[#allocation2 + $0x10] sm:$0xff]
    %v534 = vld [vmem:[#allocation2 + $0x18] sm:$0xff]
    %v535 = vld [vmem:[%s2] sm:$0x3]
    %v537 = vlaneseq
    %v538 = vshrl.u32 %v537, 7
    %v539 = vsub.s32 0, %v538
    %v540 = vrot.slane %v535, %v539
    %v541 = vlaneseq
    %v542 = vshrl.u32 %v541, 7
    %v543 = vsub.s32 1, %v542
    %v544 = vrot.slane %v535, %v543
    %v547 = vadd.f32 %v531, %v540
    %v548 = vadd.f32 %v532, %v544
    %v549 = vadd.f32 %v533, %v540
    %v550 = vadd.f32 %v534, %v544
    %551 = vst [vmem:[%s3] sm:$0xff] %v547
    %552 = vst [vmem:[%s3 + $0x8] sm:$0xff] %v548
    %553 = vst [vmem:[%s3 + $0x10] sm:$0xff] %v549
    %554 = vst [vmem:[%s3 + $0x18] sm:$0xff] %v550
  $region21: #{vae_with_classifier_forward.19} parent=0 // pred_fallthru
    _
  // Predicated region
  $region22: #{vae_with_classifier_forward.19} parent=0 // pred_check
    _
  $region23: #{vae_with_classifier_forward.19} parent=0 // pred_check_branch
    %556 = sbr.rel (0) target = $region25
  $region24: #{vae_with_classifier_forward.19} parent=0 // pred_region
    _
  $region25: #{vae_with_classifier_forward.19} parent=0 // pred_fallthru
    _
  // Predicated region
  $region26: #{vae_with_classifier_forward.19} parent=0 // pred_check
    _
  $region27: #{vae_with_classifier_forward.19} parent=0 // pred_check_branch
    %558 = sbr.rel (0) target = $region29
  $region28: #{vae_with_classifier_forward.19} parent=0 // pred_region
    _
  $region29: #{vae_with_classifier_forward.19} parent=0 // pred_fallthru
    _

</llo_original>
